<compile_context>
chip_gen: v5e
topology: v5e:2x2
jax: 0.10.0
libtpu: 0.0.40
codegen_flags: <defaults>
</compile_context>

<pallas_src>
import jax
import jax.numpy as jnp
from jax.experimental import pallas as pl
from jax.experimental.pallas import tpu as pltpu

# ---------------- config (small synthetic BERT) ----------------
VOCAB = 50
MAX_POS = 16
TYPE_VOCAB = 2
D = 32          # hidden size
H = 4           # attention heads
DH = D // H     # head dim
FF = 64         # intermediate (FFN) size
L = 2           # encoder layers
B = 2           # batch (per sentence set)
S = 8           # sequence length
MASK_ID = 3
LN_EPS = 1e-12

B2 = 2 * B      # prompt + template batched together
M2 = B2 * S     # rows of the fused hidden-state slab


# ---------------- the fused Pallas kernel ----------------

def _promptbert_kernel(ids_ref, tids_ref, amask_ref,
                       we_ref, pe_ref, te_ref, eg_ref, eb_ref,
                       wqkv_ref, bqkv_ref, wo_ref, bo_ref,
                       g1_ref, be1_ref, w1_ref, bf1_ref, w2_ref, bf2_ref,
                       g2_ref, be2_ref,
                       out_ref):
    scale = 1.0 / (DH ** 0.5)

    def ln(x, g, b):
        mu = jnp.mean(x, axis=-1, keepdims=True)
        var = jnp.mean(jnp.square(x - mu), axis=-1, keepdims=True)
        return (x - mu) * jax.lax.rsqrt(var + LN_EPS) * g + b

    # ---- embeddings: one-hot @ table (MXU) instead of an XLA gather ----
    ids = ids_ref[...]                                       # [M2, 1] int32
    word_oh = (ids == jax.lax.broadcasted_iota(
        jnp.int32, (M2, VOCAB), 1)).astype(jnp.float32)      # [M2, VOCAB]
    h = jnp.dot(word_oh, we_ref[...],
                preferred_element_type=jnp.float32)          # [M2, D]
    # position embedding: same [S, D] slab for every sentence in the batch
    h = h + jnp.tile(pe_ref[0:S, :], (B2, 1))
    # token-type embedding (one-hot over TYPE_VOCAB=2)
    tids = tids_ref[...]                                     # [M2, 1] int32
    type_oh = (tids == jax.lax.broadcasted_iota(
        jnp.int32, (M2, TYPE_VOCAB), 1)).astype(jnp.float32)
    h = h + jnp.dot(type_oh, te_ref[...],
                    preferred_element_type=jnp.float32)
    h = ln(h, eg_ref[...], eb_ref[...])                      # [M2, D]

    # ---- additive attention mask bias (broadcast over heads/queries) ----
    bias = (1.0 - amask_ref[...]) * -1e9                     # [B2, S]
    bias_b = bias[:, None, :]                                # [B2, 1, S]

    # ---- transformer layers (L is small; unrolled) ----
    for l in range(L):
        # fused Q/K/V projection: one [D, 3D] matmul
        qkv = jnp.dot(h, wqkv_ref[l],
                      preferred_element_type=jnp.float32) + bqkv_ref[l]  # [M2, 3D]

        ctx_heads = []
        for hd in range(H):
            q = qkv[:, hd * DH:(hd + 1) * DH].reshape(B2, S, DH)
            k = qkv[:, D + hd * DH:D + (hd + 1) * DH].reshape(B2, S, DH)
            v = qkv[:, 2 * D + hd * DH:2 * D + (hd + 1) * DH].reshape(B2, S, DH)
            s = jnp.einsum('bqd,bkd->bqk', q, k,
                           preferred_element_type=jnp.float32) * scale + bias_b
            m = jnp.max(s, axis=-1, keepdims=True)
            e = jnp.exp(s - m)
            p = e / jnp.sum(e, axis=-1, keepdims=True)
            c = jnp.einsum('bqk,bkd->bqd', p, v,
                           preferred_element_type=jnp.float32)
            ctx_heads.append(c.reshape(M2, DH))
        ctx = jnp.concatenate(ctx_heads, axis=-1)            # [M2, D]

        attn_out = jnp.dot(ctx, wo_ref[l],
                           preferred_element_type=jnp.float32) + bo_ref[l]
        h = ln(h + attn_out, g1_ref[l], be1_ref[l])

        # TODO(synk): HF BERT uses exact erf GELU; tanh approximation used here.
        ff = jax.nn.gelu(
            jnp.dot(h, w1_ref[l], preferred_element_type=jnp.float32) + bf1_ref[l],
            approximate=True)
        ff = jnp.dot(ff, w2_ref[l],
                     preferred_element_type=jnp.float32) + bf2_ref[l]
        h = ln(h + ff, g2_ref[l], be2_ref[l])

    # ---- get_mask_embedding for both sentence sets + final subtraction ----
    mflag = (ids == MASK_ID).astype(jnp.float32)             # [M2, 1]
    memb = jnp.sum((h * mflag).reshape(B2, S, D), axis=1)    # [B2, D]
    out_ref[...] = memb[:B, :] - memb[B:, :]                 # [B, D]


def _full_spec(shape):
    nd = len(shape)
    return pl.BlockSpec(shape, lambda i: (0,) * nd)


def promptbert_forward(params, prompt_input_ids, prompt_attention_mask,
                       prompt_token_type_ids, template_input_ids,
                       template_attention_mask, template_token_type_ids):
    # batch prompt + template encoders together (one fused kernel launch)
    ids = jnp.concatenate([prompt_input_ids, template_input_ids],
                          axis=0).astype(jnp.int32)                 # [B2, S]
    tids = jnp.concatenate([prompt_token_type_ids, template_token_type_ids],
                           axis=0).astype(jnp.int32)                # [B2, S]
    amask = jnp.concatenate([prompt_attention_mask, template_attention_mask],
                            axis=0).astype(jnp.float32)             # [B2, S]
    ids_col = ids.reshape(M2, 1)
    tids_col = tids.reshape(M2, 1)

    inputs = (ids_col, tids_col, amask,
              params["word_emb"], params["pos_emb"], params["type_emb"],
              params["emb_ln_g"], params["emb_ln_b"],
              params["wqkv"], params["bqkv"], params["wo"], params["bo"],
              params["ln1_g"], params["ln1_b"],
              params["w1"], params["b1"], params["w2"], params["b2"],
              params["ln2_g"], params["ln2_b"])

    return pl.pallas_call(
        _promptbert_kernel,
        out_shape=jax.ShapeDtypeStruct((B, D), jnp.float32),
        grid=(1,),
        in_specs=[_full_spec(x.shape) for x in inputs],
        out_specs=_full_spec((B, D)),
        compiler_params=pltpu.CompilerParams(
            dimension_semantics=("arbitrary",)),
    )(*inputs)


# ---------------- deterministic synthetic parameters ----------------

def init_params(key):
    keys = jax.random.split(key, 4 + L)

    def w(k, shape, scale=0.02):
        return (scale * jax.random.normal(k, shape)).astype(jnp.float32)

    wqkv, wo, w1, w2 = [], [], [], []
    for l in range(L):
        lk = jax.random.split(keys[4 + l], 6)
        wq = w(lk[0], (D, D))
        wk = w(lk[1], (D, D))
        wv = w(lk[2], (D, D))
        wqkv.append(jnp.concatenate([wq, wk, wv], axis=1))   # [D, 3D]
        wo.append(w(lk[3], (D, D)))
        w1.append(w(lk[4], (D, FF)))
        w2.append(w(lk[5], (FF, D)))

    return {
        "word_emb": w(keys[0], (VOCAB, D)),
        "pos_emb": w(keys[1], (MAX_POS, D)),
        "type_emb": w(keys[2], (TYPE_VOCAB, D)),
        "emb_ln_g": jnp.ones((1, D), jnp.float32),
        "emb_ln_b": jnp.zeros((1, D), jnp.float32),
        "wqkv": jnp.stack(wqkv),                              # [L, D, 3D]
        "bqkv": jnp.zeros((L, 1, 3 * D), jnp.float32),
        "wo": jnp.stack(wo),                                  # [L, D, D]
        "bo": jnp.zeros((L, 1, D), jnp.float32),
        "ln1_g": jnp.ones((L, 1, D), jnp.float32),
        "ln1_b": jnp.zeros((L, 1, D), jnp.float32),
        "w1": jnp.stack(w1),                                  # [L, D, FF]
        "b1": jnp.zeros((L, 1, FF), jnp.float32),
        "w2": jnp.stack(w2),                                  # [L, FF, D]
        "b2": jnp.zeros((L, 1, D), jnp.float32),
        "ln2_g": jnp.ones((L, 1, D), jnp.float32),
        "ln2_b": jnp.zeros((L, 1, D), jnp.float32),
    }


if __name__ == "__main__":
    key = jax.random.PRNGKey(0)
    kp, kt, kparams = jax.random.split(key, 3)
    params = init_params(kparams)

    prompt_ids = jax.random.randint(kp, (B, S), 4, VOCAB, dtype=jnp.int32)
    template_ids = jax.random.randint(kt, (B, S), 4, VOCAB, dtype=jnp.int32)
    # place one [MASK] token per sentence
    prompt_ids = prompt_ids.at[:, 5].set(MASK_ID)
    template_ids = template_ids.at[:, 3].set(MASK_ID)

    attn_mask = jnp.ones((B, S), jnp.int32)
    token_type = jnp.zeros((B, S), jnp.int32)

    fwd = jax.jit(promptbert_forward)
    out = fwd(params, prompt_ids, attn_mask, token_type,
              template_ids, attn_mask, token_type)
    jax.block_until_ready(out)
    assert out.shape == (B, D) and out.dtype == jnp.float32
    print("KERNEL_OK")
</pallas_src>

<mosaic_0001>
module attributes {stable_mosaic.version = 11 : i64} {
  func.func @_promptbert_kernel(%arg0: i32, %arg1: memref<32x1xi32, #tpu.memory_space<vmem>>, %arg2: memref<32x1xi32, #tpu.memory_space<vmem>>, %arg3: memref<4x8xf32, #tpu.memory_space<vmem>>, %arg4: memref<50x32xf32, #tpu.memory_space<vmem>>, %arg5: memref<16x32xf32, #tpu.memory_space<vmem>>, %arg6: memref<2x32xf32, #tpu.memory_space<vmem>>, %arg7: memref<1x32xf32, #tpu.memory_space<vmem>>, %arg8: memref<1x32xf32, #tpu.memory_space<vmem>>, %arg9: memref<2x32x96xf32, #tpu.memory_space<vmem>>, %arg10: memref<2x1x96xf32, #tpu.memory_space<vmem>>, %arg11: memref<2x32x32xf32, #tpu.memory_space<vmem>>, %arg12: memref<2x1x32xf32, #tpu.memory_space<vmem>>, %arg13: memref<2x1x32xf32, #tpu.memory_space<vmem>>, %arg14: memref<2x1x32xf32, #tpu.memory_space<vmem>>, %arg15: memref<2x32x64xf32, #tpu.memory_space<vmem>>, %arg16: memref<2x1x64xf32, #tpu.memory_space<vmem>>, %arg17: memref<2x64x32xf32, #tpu.memory_space<vmem>>, %arg18: memref<2x1x32xf32, #tpu.memory_space<vmem>>, %arg19: memref<2x1x32xf32, #tpu.memory_space<vmem>>, %arg20: memref<2x1x32xf32, #tpu.memory_space<vmem>>, %arg21: memref<2x32xf32, #tpu.memory_space<vmem>>) attributes {dimension_semantics = [#tpu.dimension_semantics<arbitrary>], iteration_bounds = array<i64: 1>, scalar_prefetch = 0 : i64, scratch_operands = 0 : i64, tpu.core_type = #tpu.core_type<tc>, window_params = [{pipeline_mode = #tpu.pipeline_mode<synchronous>, transform_indices = @transform_0, window_bounds = array<i64: 32, 1>}, {pipeline_mode = #tpu.pipeline_mode<synchronous>, transform_indices = @transform_1, window_bounds = array<i64: 32, 1>}, {pipeline_mode = #tpu.pipeline_mode<synchronous>, transform_indices = @transform_2, window_bounds = array<i64: 4, 8>}, {pipeline_mode = #tpu.pipeline_mode<synchronous>, transform_indices = @transform_3, window_bounds = array<i64: 50, 32>}, {pipeline_mode = #tpu.pipeline_mode<synchronous>, transform_indices = @transform_4, window_bounds = array<i64: 16, 32>}, {pipeline_mode = #tpu.pipeline_mode<synchronous>, transform_indices = @transform_5, window_bounds = array<i64: 2, 32>}, {pipeline_mode = #tpu.pipeline_mode<synchronous>, transform_indices = @transform_6, window_bounds = array<i64: 1, 32>}, {pipeline_mode = #tpu.pipeline_mode<synchronous>, transform_indices = @transform_7, window_bounds = array<i64: 1, 32>}, {pipeline_mode = #tpu.pipeline_mode<synchronous>, transform_indices = @transform_8, window_bounds = array<i64: 2, 32, 96>}, {pipeline_mode = #tpu.pipeline_mode<synchronous>, transform_indices = @transform_9, window_bounds = array<i64: 2, 1, 96>}, {pipeline_mode = #tpu.pipeline_mode<synchronous>, transform_indices = @transform_10, window_bounds = array<i64: 2, 32, 32>}, {pipeline_mode = #tpu.pipeline_mode<synchronous>, transform_indices = @transform_11, window_bounds = array<i64: 2, 1, 32>}, {pipeline_mode = #tpu.pipeline_mode<synchronous>, transform_indices = @transform_12, window_bounds = array<i64: 2, 1, 32>}, {pipeline_mode = #tpu.pipeline_mode<synchronous>, transform_indices = @transform_13, window_bounds = array<i64: 2, 1, 32>}, {pipeline_mode = #tpu.pipeline_mode<synchronous>, transform_indices = @transform_14, window_bounds = array<i64: 2, 32, 64>}, {pipeline_mode = #tpu.pipeline_mode<synchronous>, transform_indices = @transform_15, window_bounds = array<i64: 2, 1, 64>}, {pipeline_mode = #tpu.pipeline_mode<synchronous>, transform_indices = @transform_16, window_bounds = array<i64: 2, 64, 32>}, {pipeline_mode = #tpu.pipeline_mode<synchronous>, transform_indices = @transform_17, window_bounds = array<i64: 2, 1, 32>}, {pipeline_mode = #tpu.pipeline_mode<synchronous>, transform_indices = @transform_18, window_bounds = array<i64: 2, 1, 32>}, {pipeline_mode = #tpu.pipeline_mode<synchronous>, transform_indices = @transform_19, window_bounds = array<i64: 2, 1, 32>}, {pipeline_mode = #tpu.pipeline_mode<synchronous>, transform_indices = @transform_20, window_bounds = array<i64: 2, 32>}]} {
    %c0 = arith.constant 0 : index
    %c0_0 = arith.constant 0 : index
    %0 = vector.load %arg1[%c0, %c0_0] : memref<32x1xi32, #tpu.memory_space<vmem>>, vector<32x1xi32>
    %1 = tpu.iota {dimensions = array<i32: 1>} : vector<32x50xi32>
    %2 = vector.broadcast %0 : vector<32x1xi32> to vector<32x50xi32>
    %3 = arith.cmpi eq, %2, %1 : vector<32x50xi32>
    %4 = arith.extui %3 : vector<32x50xi1> to vector<32x50xi32>
    %5 = arith.sitofp %4 : vector<32x50xi32> to vector<32x50xf32>
    %c0_1 = arith.constant 0 : index
    %c0_2 = arith.constant 0 : index
    %6 = vector.load %arg4[%c0_1, %c0_2] : memref<50x32xf32, #tpu.memory_space<vmem>>, vector<50x32xf32>
    %cst = arith.constant dense<0.000000e+00> : vector<32x32xf32>
    %7 = tpu.matmul %5, %6, %cst {dimension_numbers = #tpu.dot_dimension_numbers<[1], [0], [0], [1], [0, 0, 1, 1], [], []>} : vector<32x50xf32>, vector<50x32xf32>, vector<32x32xf32> -> vector<32x32xf32>
    %c0_3 = arith.constant 0 : index
    %c0_4 = arith.constant 0 : index
    %8 = vector.load %arg5[%c0_3, %c0_4] : memref<16x32xf32, #tpu.memory_space<vmem>>, vector<8x32xf32>
    %9 = tpu.concatenate %8, %8, %8, %8 in 0 : vector<8x32xf32>, vector<8x32xf32>, vector<8x32xf32>, vector<8x32xf32> -> vector<32x32xf32>
    %10 = arith.addf %7, %9 : vector<32x32xf32>
    %c0_5 = arith.constant 0 : index
    %c0_6 = arith.constant 0 : index
    %11 = vector.load %arg2[%c0_5, %c0_6] : memref<32x1xi32, #tpu.memory_space<vmem>>, vector<32x1xi32>
    %12 = tpu.iota {dimensions = array<i32: 1>} : vector<32x2xi32>
    %13 = vector.broadcast %11 : vector<32x1xi32> to vector<32x2xi32>
    %14 = arith.cmpi eq, %13, %12 : vector<32x2xi32>
    %15 = arith.extui %14 : vector<32x2xi1> to vector<32x2xi32>
    %16 = arith.sitofp %15 : vector<32x2xi32> to vector<32x2xf32>
    %c0_7 = arith.constant 0 : index
    %c0_8 = arith.constant 0 : index
    %17 = vector.load %arg6[%c0_7, %c0_8] : memref<2x32xf32, #tpu.memory_space<vmem>>, vector<2x32xf32>
    %cst_9 = arith.constant dense<0.000000e+00> : vector<32x32xf32>
    %18 = tpu.matmul %16, %17, %cst_9 {dimension_numbers = #tpu.dot_dimension_numbers<[1], [0], [0], [1], [0, 0, 1, 1], [], []>} : vector<32x2xf32>, vector<2x32xf32>, vector<32x32xf32> -> vector<32x32xf32>
    %19 = arith.addf %10, %18 : vector<32x32xf32>
    %c0_10 = arith.constant 0 : index
    %c0_11 = arith.constant 0 : index
    %20 = vector.load %arg7[%c0_10, %c0_11] : memref<1x32xf32, #tpu.memory_space<vmem>>, vector<1x32xf32>
    %c0_12 = arith.constant 0 : index
    %c0_13 = arith.constant 0 : index
    %21 = vector.load %arg8[%c0_12, %c0_13] : memref<1x32xf32, #tpu.memory_space<vmem>>, vector<1x32xf32>
    %cst_14 = arith.constant dense<0.000000e+00> : vector<32xf32>
    %22 = vector.multi_reduction <add>, %19, %cst_14 [1] : vector<32x32xf32> to vector<32xf32>
    %23 = vector.shape_cast %22 : vector<32xf32> to vector<32x1xf32>
    %cst_15 = arith.constant 3.200000e+01 : f32
    %24 = vector.broadcast %cst_15 : f32 to vector<32x1xf32>
    %25 = arith.divf %23, %24 : vector<32x1xf32>
    %26 = vector.broadcast %25 : vector<32x1xf32> to vector<32x32xf32>
    %27 = arith.subf %19, %26 : vector<32x32xf32>
    %28 = arith.mulf %27, %27 : vector<32x32xf32>
    %cst_16 = arith.constant dense<0.000000e+00> : vector<32xf32>
    %29 = vector.multi_reduction <add>, %28, %cst_16 [1] : vector<32x32xf32> to vector<32xf32>
    %30 = vector.shape_cast %29 : vector<32xf32> to vector<32x1xf32>
    %cst_17 = arith.constant 3.200000e+01 : f32
    %31 = vector.broadcast %cst_17 : f32 to vector<32x1xf32>
    %32 = arith.divf %30, %31 : vector<32x1xf32>
    %33 = vector.broadcast %25 : vector<32x1xf32> to vector<32x32xf32>
    %34 = arith.subf %19, %33 : vector<32x32xf32>
    %cst_18 = arith.constant 9.99999996E-13 : f32
    %35 = vector.broadcast %cst_18 : f32 to vector<32x1xf32>
    %36 = arith.addf %32, %35 : vector<32x1xf32>
    %37 = math.rsqrt %36 : vector<32x1xf32>
    %38 = vector.broadcast %37 : vector<32x1xf32> to vector<32x32xf32>
    %39 = arith.mulf %34, %38 : vector<32x32xf32>
    %40 = vector.broadcast %20 : vector<1x32xf32> to vector<32x32xf32>
    %41 = arith.mulf %39, %40 : vector<32x32xf32>
    %42 = vector.broadcast %21 : vector<1x32xf32> to vector<32x32xf32>
    %43 = arith.addf %41, %42 : vector<32x32xf32>
    %c0_19 = arith.constant 0 : index
    %c0_20 = arith.constant 0 : index
    %44 = vector.load %arg3[%c0_19, %c0_20] : memref<4x8xf32, #tpu.memory_space<vmem>>, vector<4x8xf32>
    %cst_21 = arith.constant 1.000000e+00 : f32
    %45 = vector.broadcast %cst_21 : f32 to vector<4x8xf32>
    %46 = arith.subf %45, %44 : vector<4x8xf32>
    %cst_22 = arith.constant -1.000000e+09 : f32
    %47 = vector.broadcast %cst_22 : f32 to vector<4x8xf32>
    %48 = arith.mulf %46, %47 : vector<4x8xf32>
    %49 = vector.shape_cast %48 : vector<4x8xf32> to vector<4x1x8xf32>
    %c0_23 = arith.constant 0 : index
    %c0_24 = arith.constant 0 : index
    %c0_25 = arith.constant 0 : index
    %50 = vector.load %arg9[%c0_23, %c0_24, %c0_25] : memref<2x32x96xf32, #tpu.memory_space<vmem>>, vector<1x32x96xf32>
    %51 = vector.shape_cast %50 : vector<1x32x96xf32> to vector<32x96xf32>
    %cst_26 = arith.constant dense<0.000000e+00> : vector<32x96xf32>
    %52 = tpu.matmul %43, %51, %cst_26 {dimension_numbers = #tpu.dot_dimension_numbers<[1], [0], [0], [1], [0, 0, 1, 1], [], []>} : vector<32x32xf32>, vector<32x96xf32>, vector<32x96xf32> -> vector<32x96xf32>
    %c0_27 = arith.constant 0 : index
    %c0_28 = arith.constant 0 : index
    %c0_29 = arith.constant 0 : index
    %53 = vector.load %arg10[%c0_27, %c0_28, %c0_29] : memref<2x1x96xf32, #tpu.memory_space<vmem>>, vector<1x1x96xf32>
    %54 = vector.shape_cast %53 : vector<1x1x96xf32> to vector<1x96xf32>
    %55 = vector.broadcast %54 : vector<1x96xf32> to vector<32x96xf32>
    %56 = arith.addf %52, %55 : vector<32x96xf32>
    %57 = vector.extract_strided_slice %56 {offsets = [0, 0], sizes = [32, 8], strides = [1, 1]} : vector<32x96xf32> to vector<32x8xf32>
    %58 = vector.shape_cast %57 : vector<32x8xf32> to vector<4x8x8xf32>
    %59 = vector.extract_strided_slice %56 {offsets = [0, 32], sizes = [32, 8], strides = [1, 1]} : vector<32x96xf32> to vector<32x8xf32>
    %60 = vector.shape_cast %59 : vector<32x8xf32> to vector<4x8x8xf32>
    %61 = vector.extract_strided_slice %56 {offsets = [0, 64], sizes = [32, 8], strides = [1, 1]} : vector<32x96xf32> to vector<32x8xf32>
    %62 = vector.shape_cast %61 : vector<32x8xf32> to vector<4x8x8xf32>
    "tpu.trace_start"() <{level = 10 : i32, message = "bqd,bkd->bqk"}> : () -> ()
    %cst_30 = arith.constant dense<0.000000e+00> : vector<4x8x8xf32>
    %63 = tpu.matmul %58, %60, %cst_30 {dimension_numbers = #tpu.dot_dimension_numbers<[2], [2], [1], [1], [0, 0, 0, 1, 1, 1], [0], [0]>} : vector<4x8x8xf32>, vector<4x8x8xf32>, vector<4x8x8xf32> -> vector<4x8x8xf32>
    "tpu.trace_stop"() : () -> ()
    %cst_31 = arith.constant 0.353553385 : f32
    %64 = vector.broadcast %cst_31 : f32 to vector<4x8x8xf32>
    %65 = arith.mulf %63, %64 : vector<4x8x8xf32>
    %66 = vector.broadcast %49 : vector<4x1x8xf32> to vector<4x8x8xf32>
    %67 = arith.addf %65, %66 : vector<4x8x8xf32>
    %cst_32 = arith.constant dense<0xFF800000> : vector<4x8xf32>
    %68 = vector.multi_reduction <maximumf>, %67, %cst_32 [2] : vector<4x8x8xf32> to vector<4x8xf32>
    %69 = vector.shape_cast %68 : vector<4x8xf32> to vector<4x8x1xf32>
    %70 = vector.broadcast %69 : vector<4x8x1xf32> to vector<4x8x8xf32>
    %71 = arith.subf %67, %70 : vector<4x8x8xf32>
    %72 = math.exp %71 : vector<4x8x8xf32>
    %cst_33 = arith.constant dense<0.000000e+00> : vector<4x8xf32>
    %73 = vector.multi_reduction <add>, %72, %cst_33 [2] : vector<4x8x8xf32> to vector<4x8xf32>
    %74 = vector.shape_cast %73 : vector<4x8xf32> to vector<4x8x1xf32>
    %75 = vector.broadcast %74 : vector<4x8x1xf32> to vector<4x8x8xf32>
    %76 = arith.divf %72, %75 : vector<4x8x8xf32>
    "tpu.trace_start"() <{level = 10 : i32, message = "bqk,bkd->bqd"}> : () -> ()
    %cst_34 = arith.constant dense<0.000000e+00> : vector<4x8x8xf32>
    %77 = tpu.matmul %76, %62, %cst_34 {dimension_numbers = #tpu.dot_dimension_numbers<[2], [1], [1], [2], [0, 0, 0, 1, 1, 2], [0], [0]>} : vector<4x8x8xf32>, vector<4x8x8xf32>, vector<4x8x8xf32> -> vector<4x8x8xf32>
    "tpu.trace_stop"() : () -> ()
    %78 = vector.shape_cast %77 : vector<4x8x8xf32> to vector<32x8xf32>
    %79 = vector.extract_strided_slice %56 {offsets = [0, 8], sizes = [32, 8], strides = [1, 1]} : vector<32x96xf32> to vector<32x8xf32>
    %80 = vector.shape_cast %79 : vector<32x8xf32> to vector<4x8x8xf32>
    %81 = vector.extract_strided_slice %56 {offsets = [0, 40], sizes = [32, 8], strides = [1, 1]} : vector<32x96xf32> to vector<32x8xf32>
    %82 = vector.shape_cast %81 : vector<32x8xf32> to vector<4x8x8xf32>
    %83 = vector.extract_strided_slice %56 {offsets = [0, 72], sizes = [32, 8], strides = [1, 1]} : vector<32x96xf32> to vector<32x8xf32>
    %84 = vector.shape_cast %83 : vector<32x8xf32> to vector<4x8x8xf32>
    "tpu.trace_start"() <{level = 10 : i32, message = "bqd,bkd->bqk"}> : () -> ()
    %cst_35 = arith.constant dense<0.000000e+00> : vector<4x8x8xf32>
    %85 = tpu.matmul %80, %82, %cst_35 {dimension_numbers = #tpu.dot_dimension_numbers<[2], [2], [1], [1], [0, 0, 0, 1, 1, 1], [0], [0]>} : vector<4x8x8xf32>, vector<4x8x8xf32>, vector<4x8x8xf32> -> vector<4x8x8xf32>
    "tpu.trace_stop"() : () -> ()
    %cst_36 = arith.constant 0.353553385 : f32
    %86 = vector.broadcast %cst_36 : f32 to vector<4x8x8xf32>
    %87 = arith.mulf %85, %86 : vector<4x8x8xf32>
    %88 = vector.broadcast %49 : vector<4x1x8xf32> to vector<4x8x8xf32>
    %89 = arith.addf %87, %88 : vector<4x8x8xf32>
    %cst_37 = arith.constant dense<0xFF800000> : vector<4x8xf32>
    %90 = vector.multi_reduction <maximumf>, %89, %cst_37 [2] : vector<4x8x8xf32> to vector<4x8xf32>
    %91 = vector.shape_cast %90 : vector<4x8xf32> to vector<4x8x1xf32>
    %92 = vector.broadcast %91 : vector<4x8x1xf32> to vector<4x8x8xf32>
    %93 = arith.subf %89, %92 : vector<4x8x8xf32>
    %94 = math.exp %93 : vector<4x8x8xf32>
    %cst_38 = arith.constant dense<0.000000e+00> : vector<4x8xf32>
    %95 = vector.multi_reduction <add>, %94, %cst_38 [2] : vector<4x8x8xf32> to vector<4x8xf32>
    %96 = vector.shape_cast %95 : vector<4x8xf32> to vector<4x8x1xf32>
    %97 = vector.broadcast %96 : vector<4x8x1xf32> to vector<4x8x8xf32>
    %98 = arith.divf %94, %97 : vector<4x8x8xf32>
    "tpu.trace_start"() <{level = 10 : i32, message = "bqk,bkd->bqd"}> : () -> ()
    %cst_39 = arith.constant dense<0.000000e+00> : vector<4x8x8xf32>
    %99 = tpu.matmul %98, %84, %cst_39 {dimension_numbers = #tpu.dot_dimension_numbers<[2], [1], [1], [2], [0, 0, 0, 1, 1, 2], [0], [0]>} : vector<4x8x8xf32>, vector<4x8x8xf32>, vector<4x8x8xf32> -> vector<4x8x8xf32>
    "tpu.trace_stop"() : () -> ()
    %100 = vector.shape_cast %99 : vector<4x8x8xf32> to vector<32x8xf32>
    %101 = vector.extract_strided_slice %56 {offsets = [0, 16], sizes = [32, 8], strides = [1, 1]} : vector<32x96xf32> to vector<32x8xf32>
    %102 = vector.shape_cast %101 : vector<32x8xf32> to vector<4x8x8xf32>
    %103 = vector.extract_strided_slice %56 {offsets = [0, 48], sizes = [32, 8], strides = [1, 1]} : vector<32x96xf32> to vector<32x8xf32>
    %104 = vector.shape_cast %103 : vector<32x8xf32> to vector<4x8x8xf32>
    %105 = vector.extract_strided_slice %56 {offsets = [0, 80], sizes = [32, 8], strides = [1, 1]} : vector<32x96xf32> to vector<32x8xf32>
    %106 = vector.shape_cast %105 : vector<32x8xf32> to vector<4x8x8xf32>
    "tpu.trace_start"() <{level = 10 : i32, message = "bqd,bkd->bqk"}> : () -> ()
    %cst_40 = arith.constant dense<0.000000e+00> : vector<4x8x8xf32>
    %107 = tpu.matmul %102, %104, %cst_40 {dimension_numbers = #tpu.dot_dimension_numbers<[2], [2], [1], [1], [0, 0, 0, 1, 1, 1], [0], [0]>} : vector<4x8x8xf32>, vector<4x8x8xf32>, vector<4x8x8xf32> -> vector<4x8x8xf32>
    "tpu.trace_stop"() : () -> ()
    %cst_41 = arith.constant 0.353553385 : f32
    %108 = vector.broadcast %cst_41 : f32 to vector<4x8x8xf32>
    %109 = arith.mulf %107, %108 : vector<4x8x8xf32>
    %110 = vector.broadcast %49 : vector<4x1x8xf32> to vector<4x8x8xf32>
    %111 = arith.addf %109, %110 : vector<4x8x8xf32>
    %cst_42 = arith.constant dense<0xFF800000> : vector<4x8xf32>
    %112 = vector.multi_reduction <maximumf>, %111, %cst_42 [2] : vector<4x8x8xf32> to vector<4x8xf32>
    %113 = vector.shape_cast %112 : vector<4x8xf32> to vector<4x8x1xf32>
    %114 = vector.broadcast %113 : vector<4x8x1xf32> to vector<4x8x8xf32>
    %115 = arith.subf %111, %114 : vector<4x8x8xf32>
    %116 = math.exp %115 : vector<4x8x8xf32>
    %cst_43 = arith.constant dense<0.000000e+00> : vector<4x8xf32>
    %117 = vector.multi_reduction <add>, %116, %cst_43 [2] : vector<4x8x8xf32> to vector<4x8xf32>
    %118 = vector.shape_cast %117 : vector<4x8xf32> to vector<4x8x1xf32>
    %119 = vector.broadcast %118 : vector<4x8x1xf32> to vector<4x8x8xf32>
    %120 = arith.divf %116, %119 : vector<4x8x8xf32>
    "tpu.trace_start"() <{level = 10 : i32, message = "bqk,bkd->bqd"}> : () -> ()
    %cst_44 = arith.constant dense<0.000000e+00> : vector<4x8x8xf32>
    %121 = tpu.matmul %120, %106, %cst_44 {dimension_numbers = #tpu.dot_dimension_numbers<[2], [1], [1], [2], [0, 0, 0, 1, 1, 2], [0], [0]>} : vector<4x8x8xf32>, vector<4x8x8xf32>, vector<4x8x8xf32> -> vector<4x8x8xf32>
    "tpu.trace_stop"() : () -> ()
    %122 = vector.shape_cast %121 : vector<4x8x8xf32> to vector<32x8xf32>
    %123 = vector.extract_strided_slice %56 {offsets = [0, 24], sizes = [32, 8], strides = [1, 1]} : vector<32x96xf32> to vector<32x8xf32>
    %124 = vector.shape_cast %123 : vector<32x8xf32> to vector<4x8x8xf32>
    %125 = vector.extract_strided_slice %56 {offsets = [0, 56], sizes = [32, 8], strides = [1, 1]} : vector<32x96xf32> to vector<32x8xf32>
    %126 = vector.shape_cast %125 : vector<32x8xf32> to vector<4x8x8xf32>
    %127 = vector.extract_strided_slice %56 {offsets = [0, 88], sizes = [32, 8], strides = [1, 1]} : vector<32x96xf32> to vector<32x8xf32>
    %128 = vector.shape_cast %127 : vector<32x8xf32> to vector<4x8x8xf32>
    "tpu.trace_start"() <{level = 10 : i32, message = "bqd,bkd->bqk"}> : () -> ()
    %cst_45 = arith.constant dense<0.000000e+00> : vector<4x8x8xf32>
    %129 = tpu.matmul %124, %126, %cst_45 {dimension_numbers = #tpu.dot_dimension_numbers<[2], [2], [1], [1], [0, 0, 0, 1, 1, 1], [0], [0]>} : vector<4x8x8xf32>, vector<4x8x8xf32>, vector<4x8x8xf32> -> vector<4x8x8xf32>
    "tpu.trace_stop"() : () -> ()
    %cst_46 = arith.constant 0.353553385 : f32
    %130 = vector.broadcast %cst_46 : f32 to vector<4x8x8xf32>
    %131 = arith.mulf %129, %130 : vector<4x8x8xf32>
    %132 = vector.broadcast %49 : vector<4x1x8xf32> to vector<4x8x8xf32>
    %133 = arith.addf %131, %132 : vector<4x8x8xf32>
    %cst_47 = arith.constant dense<0xFF800000> : vector<4x8xf32>
    %134 = vector.multi_reduction <maximumf>, %133, %cst_47 [2] : vector<4x8x8xf32> to vector<4x8xf32>
    %135 = vector.shape_cast %134 : vector<4x8xf32> to vector<4x8x1xf32>
    %136 = vector.broadcast %135 : vector<4x8x1xf32> to vector<4x8x8xf32>
    %137 = arith.subf %133, %136 : vector<4x8x8xf32>
    %138 = math.exp %137 : vector<4x8x8xf32>
    %cst_48 = arith.constant dense<0.000000e+00> : vector<4x8xf32>
    %139 = vector.multi_reduction <add>, %138, %cst_48 [2] : vector<4x8x8xf32> to vector<4x8xf32>
    %140 = vector.shape_cast %139 : vector<4x8xf32> to vector<4x8x1xf32>
    %141 = vector.broadcast %140 : vector<4x8x1xf32> to vector<4x8x8xf32>
    %142 = arith.divf %138, %141 : vector<4x8x8xf32>
    "tpu.trace_start"() <{level = 10 : i32, message = "bqk,bkd->bqd"}> : () -> ()
    %cst_49 = arith.constant dense<0.000000e+00> : vector<4x8x8xf32>
    %143 = tpu.matmul %142, %128, %cst_49 {dimension_numbers = #tpu.dot_dimension_numbers<[2], [1], [1], [2], [0, 0, 0, 1, 1, 2], [0], [0]>} : vector<4x8x8xf32>, vector<4x8x8xf32>, vector<4x8x8xf32> -> vector<4x8x8xf32>
    "tpu.trace_stop"() : () -> ()
    %144 = vector.shape_cast %143 : vector<4x8x8xf32> to vector<32x8xf32>
    %145 = tpu.concatenate %78, %100, %122, %144 in 1 : vector<32x8xf32>, vector<32x8xf32>, vector<32x8xf32>, vector<32x8xf32> -> vector<32x32xf32>
    %c0_50 = arith.constant 0 : index
    %c0_51 = arith.constant 0 : index
    %c0_52 = arith.constant 0 : index
    %146 = vector.load %arg11[%c0_50, %c0_51, %c0_52] : memref<2x32x32xf32, #tpu.memory_space<vmem>>, vector<1x32x32xf32>
    %147 = vector.shape_cast %146 : vector<1x32x32xf32> to vector<32x32xf32>
    %cst_53 = arith.constant dense<0.000000e+00> : vector<32x32xf32>
    %148 = tpu.matmul %145, %147, %cst_53 {dimension_numbers = #tpu.dot_dimension_numbers<[1], [0], [0], [1], [0, 0, 1, 1], [], []>} : vector<32x32xf32>, vector<32x32xf32>, vector<32x32xf32> -> vector<32x32xf32>
    %c0_54 = arith.constant 0 : index
    %c0_55 = arith.constant 0 : index
    %c0_56 = arith.constant 0 : index
    %149 = vector.load %arg12[%c0_54, %c0_55, %c0_56] : memref<2x1x32xf32, #tpu.memory_space<vmem>>, vector<1x1x32xf32>
    %150 = vector.shape_cast %149 : vector<1x1x32xf32> to vector<1x32xf32>
    %151 = vector.broadcast %150 : vector<1x32xf32> to vector<32x32xf32>
    %152 = arith.addf %148, %151 : vector<32x32xf32>
    %153 = arith.addf %43, %152 : vector<32x32xf32>
    %c0_57 = arith.constant 0 : index
    %c0_58 = arith.constant 0 : index
    %c0_59 = arith.constant 0 : index
    %154 = vector.load %arg13[%c0_57, %c0_58, %c0_59] : memref<2x1x32xf32, #tpu.memory_space<vmem>>, vector<1x1x32xf32>
    %155 = vector.shape_cast %154 : vector<1x1x32xf32> to vector<1x32xf32>
    %c0_60 = arith.constant 0 : index
    %c0_61 = arith.constant 0 : index
    %c0_62 = arith.constant 0 : index
    %156 = vector.load %arg14[%c0_60, %c0_61, %c0_62] : memref<2x1x32xf32, #tpu.memory_space<vmem>>, vector<1x1x32xf32>
    %157 = vector.shape_cast %156 : vector<1x1x32xf32> to vector<1x32xf32>
    %cst_63 = arith.constant dense<0.000000e+00> : vector<32xf32>
    %158 = vector.multi_reduction <add>, %153, %cst_63 [1] : vector<32x32xf32> to vector<32xf32>
    %159 = vector.shape_cast %158 : vector<32xf32> to vector<32x1xf32>
    %cst_64 = arith.constant 3.200000e+01 : f32
    %160 = vector.broadcast %cst_64 : f32 to vector<32x1xf32>
    %161 = arith.divf %159, %160 : vector<32x1xf32>
    %162 = vector.broadcast %161 : vector<32x1xf32> to vector<32x32xf32>
    %163 = arith.subf %153, %162 : vector<32x32xf32>
    %164 = arith.mulf %163, %163 : vector<32x32xf32>
    %cst_65 = arith.constant dense<0.000000e+00> : vector<32xf32>
    %165 = vector.multi_reduction <add>, %164, %cst_65 [1] : vector<32x32xf32> to vector<32xf32>
    %166 = vector.shape_cast %165 : vector<32xf32> to vector<32x1xf32>
    %cst_66 = arith.constant 3.200000e+01 : f32
    %167 = vector.broadcast %cst_66 : f32 to vector<32x1xf32>
    %168 = arith.divf %166, %167 : vector<32x1xf32>
    %169 = vector.broadcast %161 : vector<32x1xf32> to vector<32x32xf32>
    %170 = arith.subf %153, %169 : vector<32x32xf32>
    %cst_67 = arith.constant 9.99999996E-13 : f32
    %171 = vector.broadcast %cst_67 : f32 to vector<32x1xf32>
    %172 = arith.addf %168, %171 : vector<32x1xf32>
    %173 = math.rsqrt %172 : vector<32x1xf32>
    %174 = vector.broadcast %173 : vector<32x1xf32> to vector<32x32xf32>
    %175 = arith.mulf %170, %174 : vector<32x32xf32>
    %176 = vector.broadcast %155 : vector<1x32xf32> to vector<32x32xf32>
    %177 = arith.mulf %175, %176 : vector<32x32xf32>
    %178 = vector.broadcast %157 : vector<1x32xf32> to vector<32x32xf32>
    %179 = arith.addf %177, %178 : vector<32x32xf32>
    %c0_68 = arith.constant 0 : index
    %c0_69 = arith.constant 0 : index
    %c0_70 = arith.constant 0 : index
    %180 = vector.load %arg15[%c0_68, %c0_69, %c0_70] : memref<2x32x64xf32, #tpu.memory_space<vmem>>, vector<1x32x64xf32>
    %181 = vector.shape_cast %180 : vector<1x32x64xf32> to vector<32x64xf32>
    %cst_71 = arith.constant dense<0.000000e+00> : vector<32x64xf32>
    %182 = tpu.matmul %179, %181, %cst_71 {dimension_numbers = #tpu.dot_dimension_numbers<[1], [0], [0], [1], [0, 0, 1, 1], [], []>} : vector<32x32xf32>, vector<32x64xf32>, vector<32x64xf32> -> vector<32x64xf32>
    %c0_72 = arith.constant 0 : index
    %c0_73 = arith.constant 0 : index
    %c0_74 = arith.constant 0 : index
    %183 = vector.load %arg16[%c0_72, %c0_73, %c0_74] : memref<2x1x64xf32, #tpu.memory_space<vmem>>, vector<1x1x64xf32>
    %184 = vector.shape_cast %183 : vector<1x1x64xf32> to vector<1x64xf32>
    %185 = vector.broadcast %184 : vector<1x64xf32> to vector<32x64xf32>
    %186 = arith.addf %182, %185 : vector<32x64xf32>
    %187 = arith.mulf %186, %186 : vector<32x64xf32>
    %188 = arith.mulf %186, %187 : vector<32x64xf32>
    %cst_75 = arith.constant 4.471500e-02 : f32
    %189 = vector.broadcast %cst_75 : f32 to vector<32x64xf32>
    %190 = arith.mulf %189, %188 : vector<32x64xf32>
    %191 = arith.addf %186, %190 : vector<32x64xf32>
    %cst_76 = arith.constant 0.797884583 : f32
    %192 = vector.broadcast %cst_76 : f32 to vector<32x64xf32>
    %193 = arith.mulf %192, %191 : vector<32x64xf32>
    %194 = math.tanh %193 : vector<32x64xf32>
    %cst_77 = arith.constant 1.000000e+00 : f32
    %195 = vector.broadcast %cst_77 : f32 to vector<32x64xf32>
    %196 = arith.addf %195, %194 : vector<32x64xf32>
    %cst_78 = arith.constant 5.000000e-01 : f32
    %197 = vector.broadcast %cst_78 : f32 to vector<32x64xf32>
    %198 = arith.mulf %197, %196 : vector<32x64xf32>
    %199 = arith.mulf %186, %198 : vector<32x64xf32>
    %c0_79 = arith.constant 0 : index
    %c0_80 = arith.constant 0 : index
    %c0_81 = arith.constant 0 : index
    %200 = vector.load %arg17[%c0_79, %c0_80, %c0_81] : memref<2x64x32xf32, #tpu.memory_space<vmem>>, vector<1x64x32xf32>
    %201 = vector.shape_cast %200 : vector<1x64x32xf32> to vector<64x32xf32>
    %cst_82 = arith.constant dense<0.000000e+00> : vector<32x32xf32>
    %202 = tpu.matmul %199, %201, %cst_82 {dimension_numbers = #tpu.dot_dimension_numbers<[1], [0], [0], [1], [0, 0, 1, 1], [], []>} : vector<32x64xf32>, vector<64x32xf32>, vector<32x32xf32> -> vector<32x32xf32>
    %c0_83 = arith.constant 0 : index
    %c0_84 = arith.constant 0 : index
    %c0_85 = arith.constant 0 : index
    %203 = vector.load %arg18[%c0_83, %c0_84, %c0_85] : memref<2x1x32xf32, #tpu.memory_space<vmem>>, vector<1x1x32xf32>
    %204 = vector.shape_cast %203 : vector<1x1x32xf32> to vector<1x32xf32>
    %205 = vector.broadcast %204 : vector<1x32xf32> to vector<32x32xf32>
    %206 = arith.addf %202, %205 : vector<32x32xf32>
    %207 = arith.addf %179, %206 : vector<32x32xf32>
    %c0_86 = arith.constant 0 : index
    %c0_87 = arith.constant 0 : index
    %c0_88 = arith.constant 0 : index
    %208 = vector.load %arg19[%c0_86, %c0_87, %c0_88] : memref<2x1x32xf32, #tpu.memory_space<vmem>>, vector<1x1x32xf32>
    %209 = vector.shape_cast %208 : vector<1x1x32xf32> to vector<1x32xf32>
    %c0_89 = arith.constant 0 : index
    %c0_90 = arith.constant 0 : index
    %c0_91 = arith.constant 0 : index
    %210 = vector.load %arg20[%c0_89, %c0_90, %c0_91] : memref<2x1x32xf32, #tpu.memory_space<vmem>>, vector<1x1x32xf32>
    %211 = vector.shape_cast %210 : vector<1x1x32xf32> to vector<1x32xf32>
    %cst_92 = arith.constant dense<0.000000e+00> : vector<32xf32>
    %212 = vector.multi_reduction <add>, %207, %cst_92 [1] : vector<32x32xf32> to vector<32xf32>
    %213 = vector.shape_cast %212 : vector<32xf32> to vector<32x1xf32>
    %cst_93 = arith.constant 3.200000e+01 : f32
    %214 = vector.broadcast %cst_93 : f32 to vector<32x1xf32>
    %215 = arith.divf %213, %214 : vector<32x1xf32>
    %216 = vector.broadcast %215 : vector<32x1xf32> to vector<32x32xf32>
    %217 = arith.subf %207, %216 : vector<32x32xf32>
    %218 = arith.mulf %217, %217 : vector<32x32xf32>
    %cst_94 = arith.constant dense<0.000000e+00> : vector<32xf32>
    %219 = vector.multi_reduction <add>, %218, %cst_94 [1] : vector<32x32xf32> to vector<32xf32>
    %220 = vector.shape_cast %219 : vector<32xf32> to vector<32x1xf32>
    %cst_95 = arith.constant 3.200000e+01 : f32
    %221 = vector.broadcast %cst_95 : f32 to vector<32x1xf32>
    %222 = arith.divf %220, %221 : vector<32x1xf32>
    %223 = vector.broadcast %215 : vector<32x1xf32> to vector<32x32xf32>
    %224 = arith.subf %207, %223 : vector<32x32xf32>
    %cst_96 = arith.constant 9.99999996E-13 : f32
    %225 = vector.broadcast %cst_96 : f32 to vector<32x1xf32>
    %226 = arith.addf %222, %225 : vector<32x1xf32>
    %227 = math.rsqrt %226 : vector<32x1xf32>
    %228 = vector.broadcast %227 : vector<32x1xf32> to vector<32x32xf32>
    %229 = arith.mulf %224, %228 : vector<32x32xf32>
    %230 = vector.broadcast %209 : vector<1x32xf32> to vector<32x32xf32>
    %231 = arith.mulf %229, %230 : vector<32x32xf32>
    %232 = vector.broadcast %211 : vector<1x32xf32> to vector<32x32xf32>
    %233 = arith.addf %231, %232 : vector<32x32xf32>
    %c1 = arith.constant 1 : index
    %c0_97 = arith.constant 0 : index
    %c0_98 = arith.constant 0 : index
    %234 = vector.load %arg9[%c1, %c0_97, %c0_98] : memref<2x32x96xf32, #tpu.memory_space<vmem>>, vector<1x32x96xf32>
    %235 = vector.shape_cast %234 : vector<1x32x96xf32> to vector<32x96xf32>
    %cst_99 = arith.constant dense<0.000000e+00> : vector<32x96xf32>
    %236 = tpu.matmul %233, %235, %cst_99 {dimension_numbers = #tpu.dot_dimension_numbers<[1], [0], [0], [1], [0, 0, 1, 1], [], []>} : vector<32x32xf32>, vector<32x96xf32>, vector<32x96xf32> -> vector<32x96xf32>
    %c1_100 = arith.constant 1 : index
    %c0_101 = arith.constant 0 : index
    %c0_102 = arith.constant 0 : index
    %237 = vector.load %arg10[%c1_100, %c0_101, %c0_102] : memref<2x1x96xf32, #tpu.memory_space<vmem>>, vector<1x1x96xf32>
    %238 = vector.shape_cast %237 : vector<1x1x96xf32> to vector<1x96xf32>
    %239 = vector.broadcast %238 : vector<1x96xf32> to vector<32x96xf32>
    %240 = arith.addf %236, %239 : vector<32x96xf32>
    %241 = vector.extract_strided_slice %240 {offsets = [0, 0], sizes = [32, 8], strides = [1, 1]} : vector<32x96xf32> to vector<32x8xf32>
    %242 = vector.shape_cast %241 : vector<32x8xf32> to vector<4x8x8xf32>
    %243 = vector.extract_strided_slice %240 {offsets = [0, 32], sizes = [32, 8], strides = [1, 1]} : vector<32x96xf32> to vector<32x8xf32>
    %244 = vector.shape_cast %243 : vector<32x8xf32> to vector<4x8x8xf32>
    %245 = vector.extract_strided_slice %240 {offsets = [0, 64], sizes = [32, 8], strides = [1, 1]} : vector<32x96xf32> to vector<32x8xf32>
    %246 = vector.shape_cast %245 : vector<32x8xf32> to vector<4x8x8xf32>
    "tpu.trace_start"() <{level = 10 : i32, message = "bqd,bkd->bqk"}> : () -> ()
    %cst_103 = arith.constant dense<0.000000e+00> : vector<4x8x8xf32>
    %247 = tpu.matmul %242, %244, %cst_103 {dimension_numbers = #tpu.dot_dimension_numbers<[2], [2], [1], [1], [0, 0, 0, 1, 1, 1], [0], [0]>} : vector<4x8x8xf32>, vector<4x8x8xf32>, vector<4x8x8xf32> -> vector<4x8x8xf32>
    "tpu.trace_stop"() : () -> ()
    %cst_104 = arith.constant 0.353553385 : f32
    %248 = vector.broadcast %cst_104 : f32 to vector<4x8x8xf32>
    %249 = arith.mulf %247, %248 : vector<4x8x8xf32>
    %250 = vector.broadcast %49 : vector<4x1x8xf32> to vector<4x8x8xf32>
    %251 = arith.addf %249, %250 : vector<4x8x8xf32>
    %cst_105 = arith.constant dense<0xFF800000> : vector<4x8xf32>
    %252 = vector.multi_reduction <maximumf>, %251, %cst_105 [2] : vector<4x8x8xf32> to vector<4x8xf32>
    %253 = vector.shape_cast %252 : vector<4x8xf32> to vector<4x8x1xf32>
    %254 = vector.broadcast %253 : vector<4x8x1xf32> to vector<4x8x8xf32>
    %255 = arith.subf %251, %254 : vector<4x8x8xf32>
    %256 = math.exp %255 : vector<4x8x8xf32>
    %cst_106 = arith.constant dense<0.000000e+00> : vector<4x8xf32>
    %257 = vector.multi_reduction <add>, %256, %cst_106 [2] : vector<4x8x8xf32> to vector<4x8xf32>
    %258 = vector.shape_cast %257 : vector<4x8xf32> to vector<4x8x1xf32>
    %259 = vector.broadcast %258 : vector<4x8x1xf32> to vector<4x8x8xf32>
    %260 = arith.divf %256, %259 : vector<4x8x8xf32>
    "tpu.trace_start"() <{level = 10 : i32, message = "bqk,bkd->bqd"}> : () -> ()
    %cst_107 = arith.constant dense<0.000000e+00> : vector<4x8x8xf32>
    %261 = tpu.matmul %260, %246, %cst_107 {dimension_numbers = #tpu.dot_dimension_numbers<[2], [1], [1], [2], [0, 0, 0, 1, 1, 2], [0], [0]>} : vector<4x8x8xf32>, vector<4x8x8xf32>, vector<4x8x8xf32> -> vector<4x8x8xf32>
    "tpu.trace_stop"() : () -> ()
    %262 = vector.shape_cast %261 : vector<4x8x8xf32> to vector<32x8xf32>
    %263 = vector.extract_strided_slice %240 {offsets = [0, 8], sizes = [32, 8], strides = [1, 1]} : vector<32x96xf32> to vector<32x8xf32>
    %264 = vector.shape_cast %263 : vector<32x8xf32> to vector<4x8x8xf32>
    %265 = vector.extract_strided_slice %240 {offsets = [0, 40], sizes = [32, 8], strides = [1, 1]} : vector<32x96xf32> to vector<32x8xf32>
    %266 = vector.shape_cast %265 : vector<32x8xf32> to vector<4x8x8xf32>
    %267 = vector.extract_strided_slice %240 {offsets = [0, 72], sizes = [32, 8], strides = [1, 1]} : vector<32x96xf32> to vector<32x8xf32>
    %268 = vector.shape_cast %267 : vector<32x8xf32> to vector<4x8x8xf32>
    "tpu.trace_start"() <{level = 10 : i32, message = "bqd,bkd->bqk"}> : () -> ()
    %cst_108 = arith.constant dense<0.000000e+00> : vector<4x8x8xf32>
    %269 = tpu.matmul %264, %266, %cst_108 {dimension_numbers = #tpu.dot_dimension_numbers<[2], [2], [1], [1], [0, 0, 0, 1, 1, 1], [0], [0]>} : vector<4x8x8xf32>, vector<4x8x8xf32>, vector<4x8x8xf32> -> vector<4x8x8xf32>
    "tpu.trace_stop"() : () -> ()
    %cst_109 = arith.constant 0.353553385 : f32
    %270 = vector.broadcast %cst_109 : f32 to vector<4x8x8xf32>
    %271 = arith.mulf %269, %270 : vector<4x8x8xf32>
    %272 = vector.broadcast %49 : vector<4x1x8xf32> to vector<4x8x8xf32>
    %273 = arith.addf %271, %272 : vector<4x8x8xf32>
    %cst_110 = arith.constant dense<0xFF800000> : vector<4x8xf32>
    %274 = vector.multi_reduction <maximumf>, %273, %cst_110 [2] : vector<4x8x8xf32> to vector<4x8xf32>
    %275 = vector.shape_cast %274 : vector<4x8xf32> to vector<4x8x1xf32>
    %276 = vector.broadcast %275 : vector<4x8x1xf32> to vector<4x8x8xf32>
    %277 = arith.subf %273, %276 : vector<4x8x8xf32>
    %278 = math.exp %277 : vector<4x8x8xf32>
    %cst_111 = arith.constant dense<0.000000e+00> : vector<4x8xf32>
    %279 = vector.multi_reduction <add>, %278, %cst_111 [2] : vector<4x8x8xf32> to vector<4x8xf32>
    %280 = vector.shape_cast %279 : vector<4x8xf32> to vector<4x8x1xf32>
    %281 = vector.broadcast %280 : vector<4x8x1xf32> to vector<4x8x8xf32>
    %282 = arith.divf %278, %281 : vector<4x8x8xf32>
    "tpu.trace_start"() <{level = 10 : i32, message = "bqk,bkd->bqd"}> : () -> ()
    %cst_112 = arith.constant dense<0.000000e+00> : vector<4x8x8xf32>
    %283 = tpu.matmul %282, %268, %cst_112 {dimension_numbers = #tpu.dot_dimension_numbers<[2], [1], [1], [2], [0, 0, 0, 1, 1, 2], [0], [0]>} : vector<4x8x8xf32>, vector<4x8x8xf32>, vector<4x8x8xf32> -> vector<4x8x8xf32>
    "tpu.trace_stop"() : () -> ()
    %284 = vector.shape_cast %283 : vector<4x8x8xf32> to vector<32x8xf32>
    %285 = vector.extract_strided_slice %240 {offsets = [0, 16], sizes = [32, 8], strides = [1, 1]} : vector<32x96xf32> to vector<32x8xf32>
    %286 = vector.shape_cast %285 : vector<32x8xf32> to vector<4x8x8xf32>
    %287 = vector.extract_strided_slice %240 {offsets = [0, 48], sizes = [32, 8], strides = [1, 1]} : vector<32x96xf32> to vector<32x8xf32>
    %288 = vector.shape_cast %287 : vector<32x8xf32> to vector<4x8x8xf32>
    %289 = vector.extract_strided_slice %240 {offsets = [0, 80], sizes = [32, 8], strides = [1, 1]} : vector<32x96xf32> to vector<32x8xf32>
    %290 = vector.shape_cast %289 : vector<32x8xf32> to vector<4x8x8xf32>
    "tpu.trace_start"() <{level = 10 : i32, message = "bqd,bkd->bqk"}> : () -> ()
    %cst_113 = arith.constant dense<0.000000e+00> : vector<4x8x8xf32>
    %291 = tpu.matmul %286, %288, %cst_113 {dimension_numbers = #tpu.dot_dimension_numbers<[2], [2], [1], [1], [0, 0, 0, 1, 1, 1], [0], [0]>} : vector<4x8x8xf32>, vector<4x8x8xf32>, vector<4x8x8xf32> -> vector<4x8x8xf32>
    "tpu.trace_stop"() : () -> ()
    %cst_114 = arith.constant 0.353553385 : f32
    %292 = vector.broadcast %cst_114 : f32 to vector<4x8x8xf32>
    %293 = arith.mulf %291, %292 : vector<4x8x8xf32>
    %294 = vector.broadcast %49 : vector<4x1x8xf32> to vector<4x8x8xf32>
    %295 = arith.addf %293, %294 : vector<4x8x8xf32>
    %cst_115 = arith.constant dense<0xFF800000> : vector<4x8xf32>
    %296 = vector.multi_reduction <maximumf>, %295, %cst_115 [2] : vector<4x8x8xf32> to vector<4x8xf32>
    %297 = vector.shape_cast %296 : vector<4x8xf32> to vector<4x8x1xf32>
    %298 = vector.broadcast %297 : vector<4x8x1xf32> to vector<4x8x8xf32>
    %299 = arith.subf %295, %298 : vector<4x8x8xf32>
    %300 = math.exp %299 : vector<4x8x8xf32>
    %cst_116 = arith.constant dense<0.000000e+00> : vector<4x8xf32>
    %301 = vector.multi_reduction <add>, %300, %cst_116 [2] : vector<4x8x8xf32> to vector<4x8xf32>
    %302 = vector.shape_cast %301 : vector<4x8xf32> to vector<4x8x1xf32>
    %303 = vector.broadcast %302 : vector<4x8x1xf32> to vector<4x8x8xf32>
    %304 = arith.divf %300, %303 : vector<4x8x8xf32>
    "tpu.trace_start"() <{level = 10 : i32, message = "bqk,bkd->bqd"}> : () -> ()
    %cst_117 = arith.constant dense<0.000000e+00> : vector<4x8x8xf32>
    %305 = tpu.matmul %304, %290, %cst_117 {dimension_numbers = #tpu.dot_dimension_numbers<[2], [1], [1], [2], [0, 0, 0, 1, 1, 2], [0], [0]>} : vector<4x8x8xf32>, vector<4x8x8xf32>, vector<4x8x8xf32> -> vector<4x8x8xf32>
    "tpu.trace_stop"() : () -> ()
    %306 = vector.shape_cast %305 : vector<4x8x8xf32> to vector<32x8xf32>
    %307 = vector.extract_strided_slice %240 {offsets = [0, 24], sizes = [32, 8], strides = [1, 1]} : vector<32x96xf32> to vector<32x8xf32>
    %308 = vector.shape_cast %307 : vector<32x8xf32> to vector<4x8x8xf32>
    %309 = vector.extract_strided_slice %240 {offsets = [0, 56], sizes = [32, 8], strides = [1, 1]} : vector<32x96xf32> to vector<32x8xf32>
    %310 = vector.shape_cast %309 : vector<32x8xf32> to vector<4x8x8xf32>
    %311 = vector.extract_strided_slice %240 {offsets = [0, 88], sizes = [32, 8], strides = [1, 1]} : vector<32x96xf32> to vector<32x8xf32>
    %312 = vector.shape_cast %311 : vector<32x8xf32> to vector<4x8x8xf32>
    "tpu.trace_start"() <{level = 10 : i32, message = "bqd,bkd->bqk"}> : () -> ()
    %cst_118 = arith.constant dense<0.000000e+00> : vector<4x8x8xf32>
    %313 = tpu.matmul %308, %310, %cst_118 {dimension_numbers = #tpu.dot_dimension_numbers<[2], [2], [1], [1], [0, 0, 0, 1, 1, 1], [0], [0]>} : vector<4x8x8xf32>, vector<4x8x8xf32>, vector<4x8x8xf32> -> vector<4x8x8xf32>
    "tpu.trace_stop"() : () -> ()
    %cst_119 = arith.constant 0.353553385 : f32
    %314 = vector.broadcast %cst_119 : f32 to vector<4x8x8xf32>
    %315 = arith.mulf %313, %314 : vector<4x8x8xf32>
    %316 = vector.broadcast %49 : vector<4x1x8xf32> to vector<4x8x8xf32>
    %317 = arith.addf %315, %316 : vector<4x8x8xf32>
    %cst_120 = arith.constant dense<0xFF800000> : vector<4x8xf32>
    %318 = vector.multi_reduction <maximumf>, %317, %cst_120 [2] : vector<4x8x8xf32> to vector<4x8xf32>
    %319 = vector.shape_cast %318 : vector<4x8xf32> to vector<4x8x1xf32>
    %320 = vector.broadcast %319 : vector<4x8x1xf32> to vector<4x8x8xf32>
    %321 = arith.subf %317, %320 : vector<4x8x8xf32>
    %322 = math.exp %321 : vector<4x8x8xf32>
    %cst_121 = arith.constant dense<0.000000e+00> : vector<4x8xf32>
    %323 = vector.multi_reduction <add>, %322, %cst_121 [2] : vector<4x8x8xf32> to vector<4x8xf32>
    %324 = vector.shape_cast %323 : vector<4x8xf32> to vector<4x8x1xf32>
    %325 = vector.broadcast %324 : vector<4x8x1xf32> to vector<4x8x8xf32>
    %326 = arith.divf %322, %325 : vector<4x8x8xf32>
    "tpu.trace_start"() <{level = 10 : i32, message = "bqk,bkd->bqd"}> : () -> ()
    %cst_122 = arith.constant dense<0.000000e+00> : vector<4x8x8xf32>
    %327 = tpu.matmul %326, %312, %cst_122 {dimension_numbers = #tpu.dot_dimension_numbers<[2], [1], [1], [2], [0, 0, 0, 1, 1, 2], [0], [0]>} : vector<4x8x8xf32>, vector<4x8x8xf32>, vector<4x8x8xf32> -> vector<4x8x8xf32>
    "tpu.trace_stop"() : () -> ()
    %328 = vector.shape_cast %327 : vector<4x8x8xf32> to vector<32x8xf32>
    %329 = tpu.concatenate %262, %284, %306, %328 in 1 : vector<32x8xf32>, vector<32x8xf32>, vector<32x8xf32>, vector<32x8xf32> -> vector<32x32xf32>
    %c1_123 = arith.constant 1 : index
    %c0_124 = arith.constant 0 : index
    %c0_125 = arith.constant 0 : index
    %330 = vector.load %arg11[%c1_123, %c0_124, %c0_125] : memref<2x32x32xf32, #tpu.memory_space<vmem>>, vector<1x32x32xf32>
    %331 = vector.shape_cast %330 : vector<1x32x32xf32> to vector<32x32xf32>
    %cst_126 = arith.constant dense<0.000000e+00> : vector<32x32xf32>
    %332 = tpu.matmul %329, %331, %cst_126 {dimension_numbers = #tpu.dot_dimension_numbers<[1], [0], [0], [1], [0, 0, 1, 1], [], []>} : vector<32x32xf32>, vector<32x32xf32>, vector<32x32xf32> -> vector<32x32xf32>
    %c1_127 = arith.constant 1 : index
    %c0_128 = arith.constant 0 : index
    %c0_129 = arith.constant 0 : index
    %333 = vector.load %arg12[%c1_127, %c0_128, %c0_129] : memref<2x1x32xf32, #tpu.memory_space<vmem>>, vector<1x1x32xf32>
    %334 = vector.shape_cast %333 : vector<1x1x32xf32> to vector<1x32xf32>
    %335 = vector.broadcast %334 : vector<1x32xf32> to vector<32x32xf32>
    %336 = arith.addf %332, %335 : vector<32x32xf32>
    %337 = arith.addf %233, %336 : vector<32x32xf32>
    %c1_130 = arith.constant 1 : index
    %c0_131 = arith.constant 0 : index
    %c0_132 = arith.constant 0 : index
    %338 = vector.load %arg13[%c1_130, %c0_131, %c0_132] : memref<2x1x32xf32, #tpu.memory_space<vmem>>, vector<1x1x32xf32>
    %339 = vector.shape_cast %338 : vector<1x1x32xf32> to vector<1x32xf32>
    %c1_133 = arith.constant 1 : index
    %c0_134 = arith.constant 0 : index
    %c0_135 = arith.constant 0 : index
    %340 = vector.load %arg14[%c1_133, %c0_134, %c0_135] : memref<2x1x32xf32, #tpu.memory_space<vmem>>, vector<1x1x32xf32>
    %341 = vector.shape_cast %340 : vector<1x1x32xf32> to vector<1x32xf32>
    %cst_136 = arith.constant dense<0.000000e+00> : vector<32xf32>
    %342 = vector.multi_reduction <add>, %337, %cst_136 [1] : vector<32x32xf32> to vector<32xf32>
    %343 = vector.shape_cast %342 : vector<32xf32> to vector<32x1xf32>
    %cst_137 = arith.constant 3.200000e+01 : f32
    %344 = vector.broadcast %cst_137 : f32 to vector<32x1xf32>
    %345 = arith.divf %343, %344 : vector<32x1xf32>
    %346 = vector.broadcast %345 : vector<32x1xf32> to vector<32x32xf32>
    %347 = arith.subf %337, %346 : vector<32x32xf32>
    %348 = arith.mulf %347, %347 : vector<32x32xf32>
    %cst_138 = arith.constant dense<0.000000e+00> : vector<32xf32>
    %349 = vector.multi_reduction <add>, %348, %cst_138 [1] : vector<32x32xf32> to vector<32xf32>
    %350 = vector.shape_cast %349 : vector<32xf32> to vector<32x1xf32>
    %cst_139 = arith.constant 3.200000e+01 : f32
    %351 = vector.broadcast %cst_139 : f32 to vector<32x1xf32>
    %352 = arith.divf %350, %351 : vector<32x1xf32>
    %353 = vector.broadcast %345 : vector<32x1xf32> to vector<32x32xf32>
    %354 = arith.subf %337, %353 : vector<32x32xf32>
    %cst_140 = arith.constant 9.99999996E-13 : f32
    %355 = vector.broadcast %cst_140 : f32 to vector<32x1xf32>
    %356 = arith.addf %352, %355 : vector<32x1xf32>
    %357 = math.rsqrt %356 : vector<32x1xf32>
    %358 = vector.broadcast %357 : vector<32x1xf32> to vector<32x32xf32>
    %359 = arith.mulf %354, %358 : vector<32x32xf32>
    %360 = vector.broadcast %339 : vector<1x32xf32> to vector<32x32xf32>
    %361 = arith.mulf %359, %360 : vector<32x32xf32>
    %362 = vector.broadcast %341 : vector<1x32xf32> to vector<32x32xf32>
    %363 = arith.addf %361, %362 : vector<32x32xf32>
    %c1_141 = arith.constant 1 : index
    %c0_142 = arith.constant 0 : index
    %c0_143 = arith.constant 0 : index
    %364 = vector.load %arg15[%c1_141, %c0_142, %c0_143] : memref<2x32x64xf32, #tpu.memory_space<vmem>>, vector<1x32x64xf32>
    %365 = vector.shape_cast %364 : vector<1x32x64xf32> to vector<32x64xf32>
    %cst_144 = arith.constant dense<0.000000e+00> : vector<32x64xf32>
    %366 = tpu.matmul %363, %365, %cst_144 {dimension_numbers = #tpu.dot_dimension_numbers<[1], [0], [0], [1], [0, 0, 1, 1], [], []>} : vector<32x32xf32>, vector<32x64xf32>, vector<32x64xf32> -> vector<32x64xf32>
    %c1_145 = arith.constant 1 : index
    %c0_146 = arith.constant 0 : index
    %c0_147 = arith.constant 0 : index
    %367 = vector.load %arg16[%c1_145, %c0_146, %c0_147] : memref<2x1x64xf32, #tpu.memory_space<vmem>>, vector<1x1x64xf32>
    %368 = vector.shape_cast %367 : vector<1x1x64xf32> to vector<1x64xf32>
    %369 = vector.broadcast %368 : vector<1x64xf32> to vector<32x64xf32>
    %370 = arith.addf %366, %369 : vector<32x64xf32>
    %371 = arith.mulf %370, %370 : vector<32x64xf32>
    %372 = arith.mulf %370, %371 : vector<32x64xf32>
    %cst_148 = arith.constant 4.471500e-02 : f32
    %373 = vector.broadcast %cst_148 : f32 to vector<32x64xf32>
    %374 = arith.mulf %373, %372 : vector<32x64xf32>
    %375 = arith.addf %370, %374 : vector<32x64xf32>
    %cst_149 = arith.constant 0.797884583 : f32
    %376 = vector.broadcast %cst_149 : f32 to vector<32x64xf32>
    %377 = arith.mulf %376, %375 : vector<32x64xf32>
    %378 = math.tanh %377 : vector<32x64xf32>
    %cst_150 = arith.constant 1.000000e+00 : f32
    %379 = vector.broadcast %cst_150 : f32 to vector<32x64xf32>
    %380 = arith.addf %379, %378 : vector<32x64xf32>
    %cst_151 = arith.constant 5.000000e-01 : f32
    %381 = vector.broadcast %cst_151 : f32 to vector<32x64xf32>
    %382 = arith.mulf %381, %380 : vector<32x64xf32>
    %383 = arith.mulf %370, %382 : vector<32x64xf32>
    %c1_152 = arith.constant 1 : index
    %c0_153 = arith.constant 0 : index
    %c0_154 = arith.constant 0 : index
    %384 = vector.load %arg17[%c1_152, %c0_153, %c0_154] : memref<2x64x32xf32, #tpu.memory_space<vmem>>, vector<1x64x32xf32>
    %385 = vector.shape_cast %384 : vector<1x64x32xf32> to vector<64x32xf32>
    %cst_155 = arith.constant dense<0.000000e+00> : vector<32x32xf32>
    %386 = tpu.matmul %383, %385, %cst_155 {dimension_numbers = #tpu.dot_dimension_numbers<[1], [0], [0], [1], [0, 0, 1, 1], [], []>} : vector<32x64xf32>, vector<64x32xf32>, vector<32x32xf32> -> vector<32x32xf32>
    %c1_156 = arith.constant 1 : index
    %c0_157 = arith.constant 0 : index
    %c0_158 = arith.constant 0 : index
    %387 = vector.load %arg18[%c1_156, %c0_157, %c0_158] : memref<2x1x32xf32, #tpu.memory_space<vmem>>, vector<1x1x32xf32>
    %388 = vector.shape_cast %387 : vector<1x1x32xf32> to vector<1x32xf32>
    %389 = vector.broadcast %388 : vector<1x32xf32> to vector<32x32xf32>
    %390 = arith.addf %386, %389 : vector<32x32xf32>
    %391 = arith.addf %363, %390 : vector<32x32xf32>
    %c1_159 = arith.constant 1 : index
    %c0_160 = arith.constant 0 : index
    %c0_161 = arith.constant 0 : index
    %392 = vector.load %arg19[%c1_159, %c0_160, %c0_161] : memref<2x1x32xf32, #tpu.memory_space<vmem>>, vector<1x1x32xf32>
    %393 = vector.shape_cast %392 : vector<1x1x32xf32> to vector<1x32xf32>
    %c1_162 = arith.constant 1 : index
    %c0_163 = arith.constant 0 : index
    %c0_164 = arith.constant 0 : index
    %394 = vector.load %arg20[%c1_162, %c0_163, %c0_164] : memref<2x1x32xf32, #tpu.memory_space<vmem>>, vector<1x1x32xf32>
    %395 = vector.shape_cast %394 : vector<1x1x32xf32> to vector<1x32xf32>
    %cst_165 = arith.constant dense<0.000000e+00> : vector<32xf32>
    %396 = vector.multi_reduction <add>, %391, %cst_165 [1] : vector<32x32xf32> to vector<32xf32>
    %397 = vector.shape_cast %396 : vector<32xf32> to vector<32x1xf32>
    %cst_166 = arith.constant 3.200000e+01 : f32
    %398 = vector.broadcast %cst_166 : f32 to vector<32x1xf32>
    %399 = arith.divf %397, %398 : vector<32x1xf32>
    %400 = vector.broadcast %399 : vector<32x1xf32> to vector<32x32xf32>
    %401 = arith.subf %391, %400 : vector<32x32xf32>
    %402 = arith.mulf %401, %401 : vector<32x32xf32>
    %cst_167 = arith.constant dense<0.000000e+00> : vector<32xf32>
    %403 = vector.multi_reduction <add>, %402, %cst_167 [1] : vector<32x32xf32> to vector<32xf32>
    %404 = vector.shape_cast %403 : vector<32xf32> to vector<32x1xf32>
    %cst_168 = arith.constant 3.200000e+01 : f32
    %405 = vector.broadcast %cst_168 : f32 to vector<32x1xf32>
    %406 = arith.divf %404, %405 : vector<32x1xf32>
    %407 = vector.broadcast %399 : vector<32x1xf32> to vector<32x32xf32>
    %408 = arith.subf %391, %407 : vector<32x32xf32>
    %cst_169 = arith.constant 9.99999996E-13 : f32
    %409 = vector.broadcast %cst_169 : f32 to vector<32x1xf32>
    %410 = arith.addf %406, %409 : vector<32x1xf32>
    %411 = math.rsqrt %410 : vector<32x1xf32>
    %412 = vector.broadcast %411 : vector<32x1xf32> to vector<32x32xf32>
    %413 = arith.mulf %408, %412 : vector<32x32xf32>
    %414 = vector.broadcast %393 : vector<1x32xf32> to vector<32x32xf32>
    %415 = arith.mulf %413, %414 : vector<32x32xf32>
    %416 = vector.broadcast %395 : vector<1x32xf32> to vector<32x32xf32>
    %417 = arith.addf %415, %416 : vector<32x32xf32>
    %c3_i32 = arith.constant 3 : i32
    %418 = vector.broadcast %c3_i32 : i32 to vector<32x1xi32>
    %419 = arith.cmpi eq, %0, %418 : vector<32x1xi32>
    %420 = arith.extui %419 : vector<32x1xi1> to vector<32x1xi32>
    %421 = arith.sitofp %420 : vector<32x1xi32> to vector<32x1xf32>
    %422 = vector.broadcast %421 : vector<32x1xf32> to vector<32x32xf32>
    %423 = arith.mulf %417, %422 : vector<32x32xf32>
    %424 = vector.shape_cast %423 : vector<32x32xf32> to vector<4x8x32xf32>
    %cst_170 = arith.constant dense<0.000000e+00> : vector<4x32xf32>
    %425 = vector.multi_reduction <add>, %424, %cst_170 [1] : vector<4x8x32xf32> to vector<4x32xf32>
    %426 = vector.extract_strided_slice %425 {offsets = [0, 0], sizes = [2, 32], strides = [1, 1]} : vector<4x32xf32> to vector<2x32xf32>
    %427 = vector.extract_strided_slice %425 {offsets = [2, 0], sizes = [2, 32], strides = [1, 1]} : vector<4x32xf32> to vector<2x32xf32>
    %428 = arith.subf %426, %427 : vector<2x32xf32>
    %c0_171 = arith.constant 0 : index
    %c0_172 = arith.constant 0 : index
    %429 = vector.load %arg21[%c0_171, %c0_172] : memref<2x32xf32, #tpu.memory_space<vmem>>, vector<2x32xf32>
    tpu.vector_store %arg21[%c0_171, %c0_172], %428 {strides = array<i32>} : memref<2x32xf32, #tpu.memory_space<vmem>>, vector<2x32xf32>,
    return
  }
  func.func @transform_0(%arg0: i32) -> (i32, i32) {
    %c0_i32 = arith.constant 0 : i32
    %c0_i32_0 = arith.constant 0 : i32
    %c0_i32_1 = arith.constant 0 : i32
    return %c0_i32, %c0_i32_0 : i32, i32
  }
  func.func @transform_1(%arg0: i32) -> (i32, i32) {
    %c0_i32 = arith.constant 0 : i32
    %c0_i32_0 = arith.constant 0 : i32
    %c0_i32_1 = arith.constant 0 : i32
    return %c0_i32, %c0_i32_0 : i32, i32
  }
  func.func @transform_2(%arg0: i32) -> (i32, i32) {
    %c0_i32 = arith.constant 0 : i32
    %c0_i32_0 = arith.constant 0 : i32
    %c0_i32_1 = arith.constant 0 : i32
    return %c0_i32, %c0_i32_0 : i32, i32
  }
  func.func @transform_3(%arg0: i32) -> (i32, i32) {
    %c0_i32 = arith.constant 0 : i32
    %c0_i32_0 = arith.constant 0 : i32
    %c0_i32_1 = arith.constant 0 : i32
    return %c0_i32, %c0_i32_0 : i32, i32
  }
  func.func @transform_4(%arg0: i32) -> (i32, i32) {
    %c0_i32 = arith.constant 0 : i32
    %c0_i32_0 = arith.constant 0 : i32
    %c0_i32_1 = arith.constant 0 : i32
    return %c0_i32, %c0_i32_0 : i32, i32
  }
  func.func @transform_5(%arg0: i32) -> (i32, i32) {
    %c0_i32 = arith.constant 0 : i32
    %c0_i32_0 = arith.constant 0 : i32
    %c0_i32_1 = arith.constant 0 : i32
    return %c0_i32, %c0_i32_0 : i32, i32
  }
  func.func @transform_6(%arg0: i32) -> (i32, i32) {
    %c0_i32 = arith.constant 0 : i32
    %c0_i32_0 = arith.constant 0 : i32
    %c0_i32_1 = arith.constant 0 : i32
    return %c0_i32, %c0_i32_0 : i32, i32
  }
  func.func @transform_7(%arg0: i32) -> (i32, i32) {
    %c0_i32 = arith.constant 0 : i32
    %c0_i32_0 = arith.constant 0 : i32
    %c0_i32_1 = arith.constant 0 : i32
    return %c0_i32, %c0_i32_0 : i32, i32
  }
  func.func @transform_8(%arg0: i32) -> (i32, i32, i32) {
    %c0_i32 = arith.constant 0 : i32
    %c0_i32_0 = arith.constant 0 : i32
    %c0_i32_1 = arith.constant 0 : i32
    %c0_i32_2 = arith.constant 0 : i32
    return %c0_i32, %c0_i32_0, %c0_i32_1 : i32, i32, i32
  }
  func.func @transform_9(%arg0: i32) -> (i32, i32, i32) {
    %c0_i32 = arith.constant 0 : i32
    %c0_i32_0 = arith.constant 0 : i32
    %c0_i32_1 = arith.constant 0 : i32
    %c0_i32_2 = arith.constant 0 : i32
    return %c0_i32, %c0_i32_0, %c0_i32_1 : i32, i32, i32
  }
  func.func @transform_10(%arg0: i32) -> (i32, i32, i32) {
    %c0_i32 = arith.constant 0 : i32
    %c0_i32_0 = arith.constant 0 : i32
    %c0_i32_1 = arith.constant 0 : i32
    %c0_i32_2 = arith.constant 0 : i32
    return %c0_i32, %c0_i32_0, %c0_i32_1 : i32, i32, i32
  }
  func.func @transform_11(%arg0: i32) -> (i32, i32, i32) {
    %c0_i32 = arith.constant 0 : i32
    %c0_i32_0 = arith.constant 0 : i32
    %c0_i32_1 = arith.constant 0 : i32
    %c0_i32_2 = arith.constant 0 : i32
    return %c0_i32, %c0_i32_0, %c0_i32_1 : i32, i32, i32
  }
  func.func @transform_12(%arg0: i32) -> (i32, i32, i32) {
    %c0_i32 = arith.constant 0 : i32
    %c0_i32_0 = arith.constant 0 : i32
    %c0_i32_1 = arith.constant 0 : i32
    %c0_i32_2 = arith.constant 0 : i32
    return %c0_i32, %c0_i32_0, %c0_i32_1 : i32, i32, i32
  }
  func.func @transform_13(%arg0: i32) -> (i32, i32, i32) {
    %c0_i32 = arith.constant 0 : i32
    %c0_i32_0 = arith.constant 0 : i32
    %c0_i32_1 = arith.constant 0 : i32
    %c0_i32_2 = arith.constant 0 : i32
    return %c0_i32, %c0_i32_0, %c0_i32_1 : i32, i32, i32
  }
  func.func @transform_14(%arg0: i32) -> (i32, i32, i32) {
    %c0_i32 = arith.constant 0 : i32
    %c0_i32_0 = arith.constant 0 : i32
    %c0_i32_1 = arith.constant 0 : i32
    %c0_i32_2 = arith.constant 0 : i32
    return %c0_i32, %c0_i32_0, %c0_i32_1 : i32, i32, i32
  }
  func.func @transform_15(%arg0: i32) -> (i32, i32, i32) {
    %c0_i32 = arith.constant 0 : i32
    %c0_i32_0 = arith.constant 0 : i32
    %c0_i32_1 = arith.constant 0 : i32
    %c0_i32_2 = arith.constant 0 : i32
    return %c0_i32, %c0_i32_0, %c0_i32_1 : i32, i32, i32
  }
  func.func @transform_16(%arg0: i32) -> (i32, i32, i32) {
    %c0_i32 = arith.constant 0 : i32
    %c0_i32_0 = arith.constant 0 : i32
    %c0_i32_1 = arith.constant 0 : i32
    %c0_i32_2 = arith.constant 0 : i32
    return %c0_i32, %c0_i32_0, %c0_i32_1 : i32, i32, i32
  }
  func.func @transform_17(%arg0: i32) -> (i32, i32, i32) {
    %c0_i32 = arith.constant 0 : i32
    %c0_i32_0 = arith.constant 0 : i32
    %c0_i32_1 = arith.constant 0 : i32
    %c0_i32_2 = arith.constant 0 : i32
    return %c0_i32, %c0_i32_0, %c0_i32_1 : i32, i32, i32
  }
  func.func @transform_18(%arg0: i32) -> (i32, i32, i32) {
    %c0_i32 = arith.constant 0 : i32
    %c0_i32_0 = arith.constant 0 : i32
    %c0_i32_1 = arith.constant 0 : i32
    %c0_i32_2 = arith.constant 0 : i32
    return %c0_i32, %c0_i32_0, %c0_i32_1 : i32, i32, i32
  }
  func.func @transform_19(%arg0: i32) -> (i32, i32, i32) {
    %c0_i32 = arith.constant 0 : i32
    %c0_i32_0 = arith.constant 0 : i32
    %c0_i32_1 = arith.constant 0 : i32
    %c0_i32_2 = arith.constant 0 : i32
    return %c0_i32, %c0_i32_0, %c0_i32_1 : i32, i32, i32
  }
  func.func @transform_20(%arg0: i32) -> (i32, i32) {
    %c0_i32 = arith.constant 0 : i32
    %c0_i32_0 = arith.constant 0 : i32
    %c0_i32_1 = arith.constant 0 : i32
    return %c0_i32, %c0_i32_0 : i32, i32
  }
}

</mosaic_0001>

<llo_original>
// kernel: promptbert_forward.1
$region0: #{promptbert_forward.1}
  #allocation0 [shape = 'u32[]', space=smem, size = 0x4, offset = 0x4, fixed_abs, tag = 'smem constant byte address 0x4 - core index']
  #allocation1 [shape = 'u32[72,128]{1,0:T(1,128)}', space=vmem, size = 0x9000, scoped, tag = 'internal scratch']
  %s0 = inlined_call_operand.vmem [shape: s32[32,1], index: 0, kind: input, shape index: {}]
  %s1 = inlined_call_operand.vmem [shape: s32[32,1], index: 1, kind: input, shape index: {}]
  %s2 = inlined_call_operand.vmem [shape: f32[4,8], index: 2, kind: input, shape index: {}]
  %s3 = inlined_call_operand.vmem [shape: f32[50,32], index: 3, kind: input, shape index: {}]
  %s4 = inlined_call_operand.vmem [shape: f32[16,32], index: 4, kind: input, shape index: {}]
  %s5 = inlined_call_operand.vmem [shape: f32[2,32], index: 5, kind: input, shape index: {}]
  %s6 = inlined_call_operand.vmem [shape: f32[1,32], index: 6, kind: input, shape index: {}]
  %s7 = inlined_call_operand.vmem [shape: f32[1,32], index: 7, kind: input, shape index: {}]
  %s8 = inlined_call_operand.vmem [shape: f32[2,32,96], index: 8, kind: input, shape index: {}]
  %s9 = inlined_call_operand.vmem [shape: f32[2,1,96], index: 9, kind: input, shape index: {}]
  %s10 = inlined_call_operand.vmem [shape: f32[2,32,32], index: 10, kind: input, shape index: {}]
  %s11 = inlined_call_operand.vmem [shape: f32[2,1,32], index: 11, kind: input, shape index: {}]
  %s12 = inlined_call_operand.vmem [shape: f32[2,1,32], index: 12, kind: input, shape index: {}]
  %s13 = inlined_call_operand.vmem [shape: f32[2,1,32], index: 13, kind: input, shape index: {}]
  %s14 = inlined_call_operand.vmem [shape: f32[2,32,64], index: 14, kind: input, shape index: {}]
  %s15 = inlined_call_operand.vmem [shape: f32[2,1,64], index: 15, kind: input, shape index: {}]
  %s16 = inlined_call_operand.vmem [shape: f32[2,64,32], index: 16, kind: input, shape index: {}]
  %s17 = inlined_call_operand.vmem [shape: f32[2,1,32], index: 17, kind: input, shape index: {}]
  %s18 = inlined_call_operand.vmem [shape: f32[2,1,32], index: 18, kind: input, shape index: {}]
  %s19 = inlined_call_operand.vmem [shape: f32[2,1,32], index: 19, kind: input, shape index: {}]
  %s20 = inlined_call_operand.hbm [shape: f32[2,32], index: 20, kind: output, shape index: {}]
  %s21 = sld [smem:[#allocation0]]
  $region90: #{promptbert_forward.1} parent=0
    _
  %s23 = ssub.s32 1, %s21
  %s24 = scalar_select 0, %s23, %s21
  $region1: #{promptbert_forward.1} parent=0
    #allocation2 [shape = 'u8[1024]{0}', space=vmem, size = 0x400, scoped, tag = 'output window, operand 0, single buffered']
    #allocation3 [shape = 's32[1]{0}', space=sflag, size = 0x4, scoped, tag = 'scoped memory for promptbert_forward.1']
    %25 = vsyncpa [#allocation3], 0
    // Predicated region
    $region2: #{promptbert_forward.1} parent=1 // pred_check
      _
    $region3: #{promptbert_forward.1} parent=1 // pred_check_branch
      %27 = sbr.rel (0) target = $region5
    $region4: #{promptbert_forward.1} parent=1 // pred_region
      _
    $region5: #{promptbert_forward.1} parent=1 // pred_fallthru
      _
    // Predicated region
    $region6: #{promptbert_forward.1} parent=1 // pred_check
      _
    $region7: #{promptbert_forward.1} parent=1 // pred_check_branch
      %29 = sbr.rel (0) target = $region9
    $region8: #{promptbert_forward.1} parent=1 // pred_region
      _
    $region9: #{promptbert_forward.1} parent=1 // pred_fallthru
      _
    // Predicated region
    $region10: #{promptbert_forward.1} parent=1 // pred_check
      _
    $region11: #{promptbert_forward.1} parent=1 // pred_check_branch
      %31 = sbr.rel (0) target = $region13
    $region12: #{promptbert_forward.1} parent=1 // pred_region
      _
    $region13: #{promptbert_forward.1} parent=1 // pred_fallthru
      _
    // Predicated region
    $region14: #{promptbert_forward.1} parent=1 // pred_check
      _
    $region15: #{promptbert_forward.1} parent=1 // pred_check_branch
      %33 = sbr.rel (0) target = $region17
    $region16: #{promptbert_forward.1} parent=1 // pred_region
      _
    $region17: #{promptbert_forward.1} parent=1 // pred_fallthru
      _
    // Predicated region
    $region18: #{promptbert_forward.1} parent=1 // pred_check
      _
    $region19: #{promptbert_forward.1} parent=1 // pred_check_branch
      %35 = sbr.rel (0) target = $region21
    $region20: #{promptbert_forward.1} parent=1 // pred_region
      _
    $region21: #{promptbert_forward.1} parent=1 // pred_fallthru
      _
    // Predicated region
    $region22: #{promptbert_forward.1} parent=1 // pred_check
      _
    $region23: #{promptbert_forward.1} parent=1 // pred_check_branch
      %37 = sbr.rel (0) target = $region25
    $region24: #{promptbert_forward.1} parent=1 // pred_region
      _
    $region25: #{promptbert_forward.1} parent=1 // pred_fallthru
      _
    // Predicated region
    $region26: #{promptbert_forward.1} parent=1 // pred_check
      _
    $region27: #{promptbert_forward.1} parent=1 // pred_check_branch
      %39 = sbr.rel (0) target = $region29
    $region28: #{promptbert_forward.1} parent=1 // pred_region
      _
    $region29: #{promptbert_forward.1} parent=1 // pred_fallthru
      _
    // Predicated region
    $region30: #{promptbert_forward.1} parent=1 // pred_check
      _
    $region31: #{promptbert_forward.1} parent=1 // pred_check_branch
      %41 = sbr.rel (0) target = $region33
    $region32: #{promptbert_forward.1} parent=1 // pred_region
      _
    $region33: #{promptbert_forward.1} parent=1 // pred_fallthru
      _
    // Predicated region
    $region34: #{promptbert_forward.1} parent=1 // pred_check
      _
    $region35: #{promptbert_forward.1} parent=1 // pred_check_branch
      %43 = sbr.rel (0) target = $region37
    $region36: #{promptbert_forward.1} parent=1 // pred_region
      _
    $region37: #{promptbert_forward.1} parent=1 // pred_fallthru
      _
    // Predicated region
    $region38: #{promptbert_forward.1} parent=1 // pred_check
      _
    $region39: #{promptbert_forward.1} parent=1 // pred_check_branch
      %45 = sbr.rel (0) target = $region41
    $region40: #{promptbert_forward.1} parent=1 // pred_region
      _
    $region41: #{promptbert_forward.1} parent=1 // pred_fallthru
      _
    // Predicated region
    $region42: #{promptbert_forward.1} parent=1 // pred_check
      _
    $region43: #{promptbert_forward.1} parent=1 // pred_check_branch
      %47 = sbr.rel (0) target = $region45
    $region44: #{promptbert_forward.1} parent=1 // pred_region
      _
    $region45: #{promptbert_forward.1} parent=1 // pred_fallthru
      _
    // Predicated region
    $region46: #{promptbert_forward.1} parent=1 // pred_check
      _
    $region47: #{promptbert_forward.1} parent=1 // pred_check_branch
      %49 = sbr.rel (0) target = $region49
    $region48: #{promptbert_forward.1} parent=1 // pred_region
      _
    $region49: #{promptbert_forward.1} parent=1 // pred_fallthru
      _
    // Predicated region
    $region50: #{promptbert_forward.1} parent=1 // pred_check
      _
    $region51: #{promptbert_forward.1} parent=1 // pred_check_branch
      %51 = sbr.rel (0) target = $region53
    $region52: #{promptbert_forward.1} parent=1 // pred_region
      _
    $region53: #{promptbert_forward.1} parent=1 // pred_fallthru
      _
    // Predicated region
    $region54: #{promptbert_forward.1} parent=1 // pred_check
      _
    $region55: #{promptbert_forward.1} parent=1 // pred_check_branch
      %53 = sbr.rel (0) target = $region57
    $region56: #{promptbert_forward.1} parent=1 // pred_region
      _
    $region57: #{promptbert_forward.1} parent=1 // pred_fallthru
      _
    // Predicated region
    $region58: #{promptbert_forward.1} parent=1 // pred_check
      _
    $region59: #{promptbert_forward.1} parent=1 // pred_check_branch
      %55 = sbr.rel (0) target = $region61
    $region60: #{promptbert_forward.1} parent=1 // pred_region
      _
    $region61: #{promptbert_forward.1} parent=1 // pred_fallthru
      _
    // Predicated region
    $region62: #{promptbert_forward.1} parent=1 // pred_check
      _
    $region63: #{promptbert_forward.1} parent=1 // pred_check_branch
      %57 = sbr.rel (0) target = $region65
    $region64: #{promptbert_forward.1} parent=1 // pred_region
      _
    $region65: #{promptbert_forward.1} parent=1 // pred_fallthru
      _
    // Predicated region
    $region66: #{promptbert_forward.1} parent=1 // pred_check
      _
    $region67: #{promptbert_forward.1} parent=1 // pred_check_branch
      %59 = sbr.rel (0) target = $region69
    $region68: #{promptbert_forward.1} parent=1 // pred_region
      _
    $region69: #{promptbert_forward.1} parent=1 // pred_fallthru
      _
    // Predicated region
    $region70: #{promptbert_forward.1} parent=1 // pred_check
      _
    $region71: #{promptbert_forward.1} parent=1 // pred_check_branch
      %61 = sbr.rel (0) target = $region73
    $region72: #{promptbert_forward.1} parent=1 // pred_region
      _
    $region73: #{promptbert_forward.1} parent=1 // pred_fallthru
      _
    // Predicated region
    $region74: #{promptbert_forward.1} parent=1 // pred_check
      _
    $region75: #{promptbert_forward.1} parent=1 // pred_check_branch
      %63 = sbr.rel (0) target = $region77
    $region76: #{promptbert_forward.1} parent=1 // pred_region
      _
    $region77: #{promptbert_forward.1} parent=1 // pred_fallthru
      _
    // Predicated region
    $region78: #{promptbert_forward.1} parent=1 // pred_check
      _
    $region79: #{promptbert_forward.1} parent=1 // pred_check_branch
      %65 = sbr.rel (0) target = $region81
    $region80: #{promptbert_forward.1} parent=1 // pred_region
      _
    $region81: #{promptbert_forward.1} parent=1 // pred_fallthru
      _
    %v66 = vld [vmem:[%s0] sm:$0xff]
    %v67 = vld [vmem:[%s0 + $0x8] sm:$0xff]
    %v68 = vld [vmem:[%s0 + $0x10] sm:$0xff]
    %v69 = vld [vmem:[%s0 + $0x18] sm:$0xff]
    %v70 = vlaneseq
    %v71 = vand.u32 %v70, 127
    %72 = vset.pattern.permute.xlu0 0
    %73 = vperm.xlu0 %72, %v66
    %v74 = vpop.permute.xlu0 %73
    %75 = vset.pattern.permute.xlu0 0
    %76 = vperm.xlu0 %75, %v67
    %v77 = vpop.permute.xlu0 %76
    %78 = vset.pattern.permute.xlu0 0
    %79 = vperm.xlu0 %78, %v68
    %v80 = vpop.permute.xlu0 %79
    %81 = vset.pattern.permute.xlu0 0
    %82 = vperm.xlu0 %81, %v69
    %v83 = vpop.permute.xlu0 %82
    %vm84 = vcmp.eq.s32.totalorder %v74, %v71
    %vm85 = vcmp.eq.s32.totalorder %v77, %v71
    %vm86 = vcmp.eq.s32.totalorder %v80, %v71
    %vm87 = vcmp.eq.s32.totalorder %v83, %v71
    %v88 = vsel %vm84, 1, 0
    %v89 = vsel %vm85, 1, 0
    %v90 = vsel %vm86, 1, 0
    %v91 = vsel %vm87, 1, 0
    %v92 = vcvt.s32.f32 %v88
    %v93 = vcvt.s32.f32 %v89
    %v94 = vcvt.s32.f32 %v90
    %v95 = vcvt.s32.f32 %v91
    %v96 = vld [vmem:[%s3] sm:$0xff]
    %v97 = vld [vmem:[%s3 + $0x8] sm:$0xff]
    %v98 = vld [vmem:[%s3 + $0x10] sm:$0xff]
    %v99 = vld [vmem:[%s3 + $0x18] sm:$0xff]
    %v100 = vld [vmem:[%s3 + $0x20] sm:$0xff]
    %v101 = vld [vmem:[%s3 + $0x28] sm:$0xff]
    %v102 = vld [vmem:[%s3 + $0x30] sm:$0x3]
    %v103 = vld [vmem:[%s4] sm:$0xff]
    %vm104 = vcmask 408576
    %v106 = vsel %vm104, %v92, 0
    %v109 = vsel %vm104, %v93, 0
    %v112 = vsel %vm104, %v94, 0
    %v115 = vsel %vm104, %v95, 0
    %vm117 = vcmask 1041408
    %v119 = vsel %vm117, %v102, 0
    %121 = vmatpush.msra.mxu0 0.0
    %122 = vmatpush.msra.mxu0 0.0
    %123 = vmatpush.msra.mxu0 0.0
    %124 = vmatpush.msra.mxu0 0.0
    %125 = vmatpush.msra.mxu0 0.0
    %126 = vmatpush.msra.mxu0 0.0
    %127 = vmatpush.msra.mxu0 0.0
    %128 = vmatpush.msra.mxu0 0.0
    %129 = vmatpush.msra.mxu0 0.0
    %130 = vmatpush.msra.mxu0 %v119
    %131 = vmatpush.msra.mxu0 %v101
    %132 = vmatpush.msra.mxu0 %v100
    %133 = vmatpush.msra.mxu0 %v99
    %134 = vmatpush.msra.mxu0 %v98
    %135 = vmatpush.msra.mxu0 %v97
    %136 = vmatpush.msra.mxu0 %v96
    %137 = vmatmul.f32.gmra.mxu0 %v106
    %v138 = vpop.f32.mrf.mxu0
    %v139 = vadd.f32 %v103, %v138
    %140 = vmatmul.f32.gmra.mxu0 %v109
    %v141 = vpop.f32.mrf.mxu0
    %v142 = vadd.f32 %v103, %v141
    %143 = vmatmul.f32.gmra.mxu0 %v112
    %v144 = vpop.f32.mrf.mxu0
    %v145 = vadd.f32 %v103, %v144
    %146 = vmatmul.f32.gmra.mxu0 %v115
    %v147 = vpop.f32.mrf.mxu0
    %v148 = vadd.f32 %v103, %v147
    %149 = vdwg.mxu0
    %v150 = vld [vmem:[%s1] sm:$0xff]
    %v151 = vld [vmem:[%s1 + $0x8] sm:$0xff]
    %v152 = vld [vmem:[%s1 + $0x10] sm:$0xff]
    %v153 = vld [vmem:[%s1 + $0x18] sm:$0xff]
    %154 = vset.pattern.permute.xlu0 0
    %155 = vperm.xlu0 %154, %v150
    %v156 = vpop.permute.xlu0 %155
    %157 = vset.pattern.permute.xlu0 0
    %158 = vperm.xlu0 %157, %v151
    %v159 = vpop.permute.xlu0 %158
    %160 = vset.pattern.permute.xlu0 0
    %161 = vperm.xlu0 %160, %v152
    %v162 = vpop.permute.xlu0 %161
    %163 = vset.pattern.permute.xlu0 0
    %164 = vperm.xlu0 %163, %v153
    %v165 = vpop.permute.xlu0 %164
    %vm166 = vcmp.eq.s32.totalorder %v156, %v71
    %vm167 = vcmp.eq.s32.totalorder %v159, %v71
    %vm168 = vcmp.eq.s32.totalorder %v162, %v71
    %vm169 = vcmp.eq.s32.totalorder %v165, %v71
    %v170 = vsel %vm166, 1, 0
    %v171 = vsel %vm167, 1, 0
    %v172 = vsel %vm168, 1, 0
    %v173 = vsel %vm169, 1, 0
    %v174 = vcvt.s32.f32 %v170
    %v175 = vcvt.s32.f32 %v171
    %v176 = vcvt.s32.f32 %v172
    %v177 = vcvt.s32.f32 %v173
    %v178 = vld [vmem:[%s5] sm:$0x3]
    %vm179 = vcmask 15360
    %v181 = vsel %vm179, %v174, 0
    %v184 = vsel %vm179, %v175, 0
    %v187 = vsel %vm179, %v176, 0
    %v190 = vsel %vm179, %v177, 0
    %v193 = vsel %vm117, %v178, 0
    %195 = vmatpush.msra.mxu0 0.0
    %196 = vmatpush.msra.mxu0 0.0
    %197 = vmatpush.msra.mxu0 0.0
    %198 = vmatpush.msra.mxu0 0.0
    %199 = vmatpush.msra.mxu0 0.0
    %200 = vmatpush.msra.mxu0 0.0
    %201 = vmatpush.msra.mxu0 0.0
    %202 = vmatpush.msra.mxu0 0.0
    %203 = vmatpush.msra.mxu0 0.0
    %204 = vmatpush.msra.mxu0 0.0
    %205 = vmatpush.msra.mxu0 0.0
    %206 = vmatpush.msra.mxu0 0.0
    %207 = vmatpush.msra.mxu0 0.0
    %208 = vmatpush.msra.mxu0 0.0
    %209 = vmatpush.msra.mxu0 0.0
    %210 = vmatpush.msra.mxu0 %v193
    %211 = vmatmul.f32.gmra.mxu0 %v181
    %v212 = vpop.f32.mrf.mxu0
    %v213 = vadd.f32 0.0, %v212
    %214 = vmatmul.f32.gmra.mxu0 %v184
    %v215 = vpop.f32.mrf.mxu0
    %v216 = vadd.f32 0.0, %v215
    %217 = vmatmul.f32.gmra.mxu0 %v187
    %v218 = vpop.f32.mrf.mxu0
    %v219 = vadd.f32 0.0, %v218
    %220 = vmatmul.f32.gmra.mxu0 %v190
    %v221 = vpop.f32.mrf.mxu0
    %v222 = vadd.f32 0.0, %v221
    %223 = vdwg.mxu0
    %v224 = vadd.f32 %v139, %v213
    %v225 = vadd.f32 %v142, %v216
    %v226 = vadd.f32 %v145, %v219
    %v227 = vadd.f32 %v148, %v222
    %v228 = vld [vmem:[%s6] sm:$0x1]
    %v229 = vld [vmem:[%s7] sm:$0x1]
    %vm230 = vcmask 261120
    %v231 = vsel %vm230, %v224, 0.0
    %232 = vadd.xlane.f32.xlu0 %v231
    %v233 = vpop.xlane.xlu0 %232
    %v234 = vsel %vm230, %v225, 0.0
    %235 = vadd.xlane.f32.xlu0 %v234
    %v236 = vpop.xlane.xlu0 %235
    %v237 = vsel %vm230, %v226, 0.0
    %238 = vadd.xlane.f32.xlu0 %v237
    %v239 = vpop.xlane.xlu0 %238
    %v240 = vsel %vm230, %v227, 0.0
    %241 = vadd.xlane.f32.xlu0 %v240
    %v242 = vpop.xlane.xlu0 %241
    %v243 = vrcp.pop 32.0
    %v244 = vmul.f32 32.0, %v243
    %v245 = vsub.f32 1.0, %v244
    %v246 = vmul.f32 %v243, %v245
    %v247 = vadd.f32 %v243, %v246
    %vm248 = vweird.f32 %v243
    %v249 = vsel %vm248, %v243, %v247
    %v250 = vmul.f32 %v233, %v249
    %v251 = vmul.f32 %v236, %v249
    %v252 = vmul.f32 %v239, %v249
    %v253 = vmul.f32 %v242, %v249
    %v254 = vsub.f32 %v224, %v250
    %v255 = vsub.f32 %v225, %v251
    %v256 = vsub.f32 %v226, %v252
    %v257 = vsub.f32 %v227, %v253
    %v258 = vmul.f32 %v254, %v254
    %v259 = vmul.f32 %v255, %v255
    %v260 = vmul.f32 %v256, %v256
    %v261 = vmul.f32 %v257, %v257
    %v262 = vsel %vm230, %v258, 0.0
    %263 = vadd.xlane.f32.xlu0 %v262
    %v264 = vpop.xlane.xlu0 %263
    %v265 = vsel %vm230, %v259, 0.0
    %266 = vadd.xlane.f32.xlu0 %v265
    %v267 = vpop.xlane.xlu0 %266
    %v268 = vsel %vm230, %v260, 0.0
    %269 = vadd.xlane.f32.xlu0 %v268
    %v270 = vpop.xlane.xlu0 %269
    %v271 = vsel %vm230, %v261, 0.0
    %272 = vadd.xlane.f32.xlu0 %v271
    %v273 = vpop.xlane.xlu0 %272
    %v274 = vmul.f32 %v264, %v249
    %v275 = vmul.f32 %v267, %v249
    %v276 = vmul.f32 %v270, %v249
    %v277 = vmul.f32 %v273, %v249
    %v278 = vadd.f32 %v274, 1e-12
    %v279 = vadd.f32 %v275, 1e-12
    %v280 = vadd.f32 %v276, 1e-12
    %v281 = vadd.f32 %v277, 1e-12
    %v282 = vrsqrt.pop %v278
    %v283 = vmul.f32 %v282, %v278
    %v284 = vmul.f32 %v283, %v282
    %v285 = vmul.f32 0.5, %v284
    %v286 = vsub.f32 1.5, %v285
    %v287 = vmul.f32 %v282, %v286
    %vm288 = vweird.f32 %v278
    %vm289 = vweird.f32 %v282
    %vm290 = vmor %vm288, %vm289
    %v291 = vsel %vm290, %v282, %v287
    %v292 = vrsqrt.pop %v279
    %v293 = vmul.f32 %v292, %v279
    %v294 = vmul.f32 %v293, %v292
    %v295 = vmul.f32 0.5, %v294
    %v296 = vsub.f32 1.5, %v295
    %v297 = vmul.f32 %v292, %v296
    %vm298 = vweird.f32 %v279
    %vm299 = vweird.f32 %v292
    %vm300 = vmor %vm298, %vm299
    %v301 = vsel %vm300, %v292, %v297
    %v302 = vrsqrt.pop %v280
    %v303 = vmul.f32 %v302, %v280
    %v304 = vmul.f32 %v303, %v302
    %v305 = vmul.f32 0.5, %v304
    %v306 = vsub.f32 1.5, %v305
    %v307 = vmul.f32 %v302, %v306
    %vm308 = vweird.f32 %v280
    %vm309 = vweird.f32 %v302
    %vm310 = vmor %vm308, %vm309
    %v311 = vsel %vm310, %v302, %v307
    %v312 = vrsqrt.pop %v281
    %v313 = vmul.f32 %v312, %v281
    %v314 = vmul.f32 %v313, %v312
    %v315 = vmul.f32 0.5, %v314
    %v316 = vsub.f32 1.5, %v315
    %v317 = vmul.f32 %v312, %v316
    %vm318 = vweird.f32 %v281
    %vm319 = vweird.f32 %v312
    %vm320 = vmor %vm318, %vm319
    %v321 = vsel %vm320, %v312, %v317
    %v322 = vmul.f32 %v254, %v291
    %v323 = vmul.f32 %v255, %v301
    %v324 = vmul.f32 %v256, %v311
    %v325 = vmul.f32 %v257, %v321
    %v327 = vperm.slane %v228, 0
    %v329 = vmul.f32 %v322, %v327
    %v330 = vmul.f32 %v323, %v327
    %v331 = vmul.f32 %v324, %v327
    %v332 = vmul.f32 %v325, %v327
    %v334 = vperm.slane %v229, 0
    %v336 = vadd.f32 %v329, %v334
    %v337 = vadd.f32 %v330, %v334
    %v338 = vadd.f32 %v331, %v334
    %v339 = vadd.f32 %v332, %v334
    %v340 = vld [vmem:[%s2] sm:$0xf]
    %v341 = vsub.f32 1.0, %v340
    %v342 = vmul.f32 %v341, -1e+09
    %v344 = vrot.slane %v342, 1
    %v345 = vrot.slane %v342, 2
    %v346 = vrot.slane %v342, 3
    %v347 = vld [vmem:[%s8] sm:$0xff]
    %v348 = vld [vmem:[%s8 + $0x8] sm:$0xff]
    %v349 = vld [vmem:[%s8 + $0x10] sm:$0xff]
    %v350 = vld [vmem:[%s8 + $0x18] sm:$0xff]
    %v351 = vld [vmem:[%s9] sm:$0x1]
    %v353 = vperm.slane %v351, 0
    %v356 = vsel %vm230, %v336, 0
    %v359 = vsel %vm230, %v337, 0
    %v362 = vsel %vm230, %v338, 0
    %v365 = vsel %vm230, %v339, 0
    %367 = vmatpush.msra.mxu0 0.0
    %368 = vmatpush.msra.mxu0 0.0
    %369 = vmatpush.msra.mxu0 0.0
    %370 = vmatpush.msra.mxu0 0.0
    %371 = vmatpush.msra.mxu0 0.0
    %372 = vmatpush.msra.mxu0 0.0
    %373 = vmatpush.msra.mxu0 0.0
    %374 = vmatpush.msra.mxu0 0.0
    %375 = vmatpush.msra.mxu0 0.0
    %376 = vmatpush.msra.mxu0 0.0
    %377 = vmatpush.msra.mxu0 0.0
    %378 = vmatpush.msra.mxu0 0.0
    %379 = vmatpush.msra.mxu0 %v350
    %380 = vmatpush.msra.mxu0 %v349
    %381 = vmatpush.msra.mxu0 %v348
    %382 = vmatpush.msra.mxu0 %v347
    %383 = vmatmul.f32.gmra.mxu0 %v356
    %v384 = vpop.f32.mrf.mxu0
    %v385 = vadd.f32 %v353, %v384
    %386 = vmatmul.f32.gmra.mxu0 %v359
    %v387 = vpop.f32.mrf.mxu0
    %v388 = vadd.f32 %v353, %v387
    %389 = vmatmul.f32.gmra.mxu0 %v362
    %v390 = vpop.f32.mrf.mxu0
    %v391 = vadd.f32 %v353, %v390
    %392 = vmatmul.f32.gmra.mxu0 %v365
    %v393 = vpop.f32.mrf.mxu0
    %v394 = vadd.f32 %v353, %v393
    %395 = vdwg.mxu0
    %397 = vrot.lane.b32.xlu0 %v385, 96
    %v398 = vpop.permute.xlu0 %397
    %vm399 = vcmask 64512
    %v400 = vsel %vm399, %v385, 0
    %v402 = vsel %vm399, %v398, 0
    %404 = vmatpush.xpose.msra.mxu0 0.0
    %405 = vmatpush.xpose.msra.mxu0 0.0
    %406 = vmatpush.xpose.msra.mxu0 0.0
    %407 = vmatpush.xpose.msra.mxu0 0.0
    %408 = vmatpush.xpose.msra.mxu0 0.0
    %409 = vmatpush.xpose.msra.mxu0 0.0
    %410 = vmatpush.xpose.msra.mxu0 0.0
    %411 = vmatpush.xpose.msra.mxu0 0.0
    %412 = vmatpush.xpose.msra.mxu0 0.0
    %413 = vmatpush.xpose.msra.mxu0 0.0
    %414 = vmatpush.xpose.msra.mxu0 0.0
    %415 = vmatpush.xpose.msra.mxu0 0.0
    %416 = vmatpush.xpose.msra.mxu0 0.0
    %417 = vmatpush.xpose.msra.mxu0 0.0
    %418 = vmatpush.xpose.msra.mxu0 0.0
    %419 = vmatpush.xpose.msra.mxu0 %v402
    %420 = vmatmul.f32.gmra.mxu0 %v400
    %v421 = vpop.f32.mrf.mxu0
    %v422 = vadd.f32 0.0, %v421
    %423 = vdwg.mxu0
    %425 = vrot.lane.b32.xlu0 %v388, 96
    %v426 = vpop.permute.xlu0 %425
    %v427 = vsel %vm399, %v388, 0
    %v429 = vsel %vm399, %v426, 0
    %431 = vmatpush.xpose.msra.mxu0 0.0
    %432 = vmatpush.xpose.msra.mxu0 0.0
    %433 = vmatpush.xpose.msra.mxu0 0.0
    %434 = vmatpush.xpose.msra.mxu0 0.0
    %435 = vmatpush.xpose.msra.mxu0 0.0
    %436 = vmatpush.xpose.msra.mxu0 0.0
    %437 = vmatpush.xpose.msra.mxu0 0.0
    %438 = vmatpush.xpose.msra.mxu0 0.0
    %439 = vmatpush.xpose.msra.mxu0 0.0
    %440 = vmatpush.xpose.msra.mxu0 0.0
    %441 = vmatpush.xpose.msra.mxu0 0.0
    %442 = vmatpush.xpose.msra.mxu0 0.0
    %443 = vmatpush.xpose.msra.mxu0 0.0
    %444 = vmatpush.xpose.msra.mxu0 0.0
    %445 = vmatpush.xpose.msra.mxu0 0.0
    %446 = vmatpush.xpose.msra.mxu0 %v429
    %447 = vmatmul.f32.gmra.mxu0 %v427
    %v448 = vpop.f32.mrf.mxu0
    %v449 = vadd.f32 0.0, %v448
    %450 = vdwg.mxu0
    %452 = vrot.lane.b32.xlu0 %v391, 96
    %v453 = vpop.permute.xlu0 %452
    %v454 = vsel %vm399, %v391, 0
    %v456 = vsel %vm399, %v453, 0
    %458 = vmatpush.xpose.msra.mxu0 0.0
    %459 = vmatpush.xpose.msra.mxu0 0.0
    %460 = vmatpush.xpose.msra.mxu0 0.0
    %461 = vmatpush.xpose.msra.mxu0 0.0
    %462 = vmatpush.xpose.msra.mxu0 0.0
    %463 = vmatpush.xpose.msra.mxu0 0.0
    %464 = vmatpush.xpose.msra.mxu0 0.0
    %465 = vmatpush.xpose.msra.mxu0 0.0
    %466 = vmatpush.xpose.msra.mxu0 0.0
    %467 = vmatpush.xpose.msra.mxu0 0.0
    %468 = vmatpush.xpose.msra.mxu0 0.0
    %469 = vmatpush.xpose.msra.mxu0 0.0
    %470 = vmatpush.xpose.msra.mxu0 0.0
    %471 = vmatpush.xpose.msra.mxu0 0.0
    %472 = vmatpush.xpose.msra.mxu0 0.0
    %473 = vmatpush.xpose.msra.mxu0 %v456
    %474 = vmatmul.f32.gmra.mxu0 %v454
    %v475 = vpop.f32.mrf.mxu0
    %v476 = vadd.f32 0.0, %v475
    %477 = vdwg.mxu0
    %479 = vrot.lane.b32.xlu0 %v394, 96
    %v480 = vpop.permute.xlu0 %479
    %v481 = vsel %vm399, %v394, 0
    %v483 = vsel %vm399, %v480, 0
    %485 = vmatpush.xpose.msra.mxu0 0.0
    %486 = vmatpush.xpose.msra.mxu0 0.0
    %487 = vmatpush.xpose.msra.mxu0 0.0
    %488 = vmatpush.xpose.msra.mxu0 0.0
    %489 = vmatpush.xpose.msra.mxu0 0.0
    %490 = vmatpush.xpose.msra.mxu0 0.0
    %491 = vmatpush.xpose.msra.mxu0 0.0
    %492 = vmatpush.xpose.msra.mxu0 0.0
    %493 = vmatpush.xpose.msra.mxu0 0.0
    %494 = vmatpush.xpose.msra.mxu0 0.0
    %495 = vmatpush.xpose.msra.mxu0 0.0
    %496 = vmatpush.xpose.msra.mxu0 0.0
    %497 = vmatpush.xpose.msra.mxu0 0.0
    %498 = vmatpush.xpose.msra.mxu0 0.0
    %499 = vmatpush.xpose.msra.mxu0 0.0
    %500 = vmatpush.xpose.msra.mxu0 %v483
    %501 = vmatmul.f32.gmra.mxu0 %v481
    %v502 = vpop.f32.mrf.mxu0
    %v503 = vadd.f32 0.0, %v502
    %504 = vdwg.mxu0
    %v505 = vmul.f32 %v422, 0.35355338
    %v506 = vmul.f32 %v449, 0.35355338
    %v507 = vmul.f32 %v476, 0.35355338
    %v508 = vmul.f32 %v503, 0.35355338
    %v509 = vperm.slane %v342, 0
    %v510 = vperm.slane %v344, 0
    %v511 = vperm.slane %v345, 0
    %v512 = vperm.slane %v346, 0
    %v517 = vadd.f32 %v505, %v509
    %v518 = vadd.f32 %v506, %v510
    %v519 = vadd.f32 %v507, %v511
    %v520 = vadd.f32 %v508, %v512
    %v521 = vsel %vm399, %v517, -inf
    %522 = vmax.xlane.f32.xlu0 %v521
    %v523 = vpop.xlane.xlu0 %522
    %v524 = vsel %vm399, %v518, -inf
    %525 = vmax.xlane.f32.xlu0 %v524
    %v526 = vpop.xlane.xlu0 %525
    %v527 = vsel %vm399, %v519, -inf
    %528 = vmax.xlane.f32.xlu0 %v527
    %v529 = vpop.xlane.xlu0 %528
    %v530 = vsel %vm399, %v520, -inf
    %531 = vmax.xlane.f32.xlu0 %v530
    %v532 = vpop.xlane.xlu0 %531
    %v533 = vsub.f32 %v517, %v523
    %v534 = vsub.f32 %v518, %v526
    %v535 = vsub.f32 %v519, %v529
    %v536 = vsub.f32 %v520, %v532
    %v537 = vmul.f32 %v533, 1.442695
    %v538 = vpow.pop %v537
    %v539 = vmul.f32 %v534, 1.442695
    %v540 = vpow.pop %v539
    %v541 = vmul.f32 %v535, 1.442695
    %v542 = vpow.pop %v541
    %v543 = vmul.f32 %v536, 1.442695
    %v544 = vpow.pop %v543
    %v545 = vsel %vm399, %v538, 0.0
    %546 = vadd.xlane.f32.xlu0 %v545
    %v547 = vpop.xlane.xlu0 %546
    %v548 = vsel %vm399, %v540, 0.0
    %549 = vadd.xlane.f32.xlu0 %v548
    %v550 = vpop.xlane.xlu0 %549
    %v551 = vsel %vm399, %v542, 0.0
    %552 = vadd.xlane.f32.xlu0 %v551
    %v553 = vpop.xlane.xlu0 %552
    %v554 = vsel %vm399, %v544, 0.0
    %555 = vadd.xlane.f32.xlu0 %v554
    %v556 = vpop.xlane.xlu0 %555
    %v557 = vrcp.pop %v547
    %v558 = vmul.f32 %v547, %v557
    %v559 = vsub.f32 1.0, %v558
    %v560 = vmul.f32 %v557, %v559
    %v561 = vadd.f32 %v557, %v560
    %vm562 = vweird.f32 %v547
    %vm563 = vweird.f32 %v557
    %vm564 = vmor %vm562, %vm563
    %v565 = vsel %vm564, %v557, %v561
    %v566 = vand.u32 2147483647, %v547
    %vm567 = vcmp.eq.f32.partialorder %v566, 8.507059e+37
    %v568 = vand.u32 %v547, 2147483648
    %v569 = vor.u32 1.1754944e-38, %v568
    %v570 = vsel %vm567, %v569, %v565
    %v571 = vmul.f32 %v538, %v570
    %v572 = vrcp.pop %v550
    %v573 = vmul.f32 %v550, %v572
    %v574 = vsub.f32 1.0, %v573
    %v575 = vmul.f32 %v572, %v574
    %v576 = vadd.f32 %v572, %v575
    %vm577 = vweird.f32 %v550
    %vm578 = vweird.f32 %v572
    %vm579 = vmor %vm577, %vm578
    %v580 = vsel %vm579, %v572, %v576
    %v581 = vand.u32 2147483647, %v550
    %vm582 = vcmp.eq.f32.partialorder %v581, 8.507059e+37
    %v583 = vand.u32 %v550, 2147483648
    %v584 = vor.u32 1.1754944e-38, %v583
    %v585 = vsel %vm582, %v584, %v580
    %v586 = vmul.f32 %v540, %v585
    %v587 = vrcp.pop %v553
    %v588 = vmul.f32 %v553, %v587
    %v589 = vsub.f32 1.0, %v588
    %v590 = vmul.f32 %v587, %v589
    %v591 = vadd.f32 %v587, %v590
    %vm592 = vweird.f32 %v553
    %vm593 = vweird.f32 %v587
    %vm594 = vmor %vm592, %vm593
    %v595 = vsel %vm594, %v587, %v591
    %v596 = vand.u32 2147483647, %v553
    %vm597 = vcmp.eq.f32.partialorder %v596, 8.507059e+37
    %v598 = vand.u32 %v553, 2147483648
    %v599 = vor.u32 1.1754944e-38, %v598
    %v600 = vsel %vm597, %v599, %v595
    %v601 = vmul.f32 %v542, %v600
    %v602 = vrcp.pop %v556
    %v603 = vmul.f32 %v556, %v602
    %v604 = vsub.f32 1.0, %v603
    %v605 = vmul.f32 %v602, %v604
    %v606 = vadd.f32 %v602, %v605
    %vm607 = vweird.f32 %v556
    %vm608 = vweird.f32 %v602
    %vm609 = vmor %vm607, %vm608
    %v610 = vsel %vm609, %v602, %v606
    %v611 = vand.u32 2147483647, %v556
    %vm612 = vcmp.eq.f32.partialorder %v611, 8.507059e+37
    %v613 = vand.u32 %v556, 2147483648
    %v614 = vor.u32 1.1754944e-38, %v613
    %v615 = vsel %vm612, %v614, %v610
    %v616 = vmul.f32 %v544, %v615
    %617 = vrot.lane.b32.xlu0 %v385, 64
    %v618 = vpop.permute.xlu0 %617
    %v621 = vsel %vm399, %v571, 0
    %623 = vmatpush.msra.mxu0 0.0
    %624 = vmatpush.msra.mxu0 0.0
    %625 = vmatpush.msra.mxu0 0.0
    %626 = vmatpush.msra.mxu0 0.0
    %627 = vmatpush.msra.mxu0 0.0
    %628 = vmatpush.msra.mxu0 0.0
    %629 = vmatpush.msra.mxu0 0.0
    %630 = vmatpush.msra.mxu0 0.0
    %631 = vmatpush.msra.mxu0 0.0
    %632 = vmatpush.msra.mxu0 0.0
    %633 = vmatpush.msra.mxu0 0.0
    %634 = vmatpush.msra.mxu0 0.0
    %635 = vmatpush.msra.mxu0 0.0
    %636 = vmatpush.msra.mxu0 0.0
    %637 = vmatpush.msra.mxu0 0.0
    %638 = vmatpush.msra.mxu0 %v618
    %639 = vmatmul.f32.gmra.mxu0 %v621
    %v640 = vpop.f32.mrf.mxu0
    %v641 = vadd.f32 0.0, %v640
    %642 = vdwg.mxu0
    %643 = vrot.lane.b32.xlu0 %v388, 64
    %v644 = vpop.permute.xlu0 %643
    %v647 = vsel %vm399, %v586, 0
    %649 = vmatpush.msra.mxu0 0.0
    %650 = vmatpush.msra.mxu0 0.0
    %651 = vmatpush.msra.mxu0 0.0
    %652 = vmatpush.msra.mxu0 0.0
    %653 = vmatpush.msra.mxu0 0.0
    %654 = vmatpush.msra.mxu0 0.0
    %655 = vmatpush.msra.mxu0 0.0
    %656 = vmatpush.msra.mxu0 0.0
    %657 = vmatpush.msra.mxu0 0.0
    %658 = vmatpush.msra.mxu0 0.0
    %659 = vmatpush.msra.mxu0 0.0
    %660 = vmatpush.msra.mxu0 0.0
    %661 = vmatpush.msra.mxu0 0.0
    %662 = vmatpush.msra.mxu0 0.0
    %663 = vmatpush.msra.mxu0 0.0
    %664 = vmatpush.msra.mxu0 %v644
    %665 = vmatmul.f32.gmra.mxu0 %v647
    %v666 = vpop.f32.mrf.mxu0
    %v667 = vadd.f32 0.0, %v666
    %668 = vdwg.mxu0
    %669 = vrot.lane.b32.xlu0 %v391, 64
    %v670 = vpop.permute.xlu0 %669
    %v673 = vsel %vm399, %v601, 0
    %675 = vmatpush.msra.mxu0 0.0
    %676 = vmatpush.msra.mxu0 0.0
    %677 = vmatpush.msra.mxu0 0.0
    %678 = vmatpush.msra.mxu0 0.0
    %679 = vmatpush.msra.mxu0 0.0
    %680 = vmatpush.msra.mxu0 0.0
    %681 = vmatpush.msra.mxu0 0.0
    %682 = vmatpush.msra.mxu0 0.0
    %683 = vmatpush.msra.mxu0 0.0
    %684 = vmatpush.msra.mxu0 0.0
    %685 = vmatpush.msra.mxu0 0.0
    %686 = vmatpush.msra.mxu0 0.0
    %687 = vmatpush.msra.mxu0 0.0
    %688 = vmatpush.msra.mxu0 0.0
    %689 = vmatpush.msra.mxu0 0.0
    %690 = vmatpush.msra.mxu0 %v670
    %691 = vmatmul.f32.gmra.mxu0 %v673
    %v692 = vpop.f32.mrf.mxu0
    %v693 = vadd.f32 0.0, %v692
    %694 = vdwg.mxu0
    %695 = vrot.lane.b32.xlu0 %v394, 64
    %v696 = vpop.permute.xlu0 %695
    %v699 = vsel %vm399, %v616, 0
    %701 = vmatpush.msra.mxu0 0.0
    %702 = vmatpush.msra.mxu0 0.0
    %703 = vmatpush.msra.mxu0 0.0
    %704 = vmatpush.msra.mxu0 0.0
    %705 = vmatpush.msra.mxu0 0.0
    %706 = vmatpush.msra.mxu0 0.0
    %707 = vmatpush.msra.mxu0 0.0
    %708 = vmatpush.msra.mxu0 0.0
    %709 = vmatpush.msra.mxu0 0.0
    %710 = vmatpush.msra.mxu0 0.0
    %711 = vmatpush.msra.mxu0 0.0
    %712 = vmatpush.msra.mxu0 0.0
    %713 = vmatpush.msra.mxu0 0.0
    %714 = vmatpush.msra.mxu0 0.0
    %715 = vmatpush.msra.mxu0 0.0
    %716 = vmatpush.msra.mxu0 %v696
    %717 = vmatmul.f32.gmra.mxu0 %v699
    %v718 = vpop.f32.mrf.mxu0
    %v719 = vadd.f32 0.0, %v718
    %720 = vdwg.mxu0
    %721 = vrot.lane.b32.xlu0 %v385, 120
    %v722 = vpop.permute.xlu0 %721
    %723 = vrot.lane.b32.xlu0 %v385, 88
    %v724 = vpop.permute.xlu0 %723
    %v725 = vsel %vm399, %v722, 0
    %v727 = vsel %vm399, %v724, 0
    %729 = vmatpush.xpose.msra.mxu0 0.0
    %730 = vmatpush.xpose.msra.mxu0 0.0
    %731 = vmatpush.xpose.msra.mxu0 0.0
    %732 = vmatpush.xpose.msra.mxu0 0.0
    %733 = vmatpush.xpose.msra.mxu0 0.0
    %734 = vmatpush.xpose.msra.mxu0 0.0
    %735 = vmatpush.xpose.msra.mxu0 0.0
    %736 = vmatpush.xpose.msra.mxu0 0.0
    %737 = vmatpush.xpose.msra.mxu0 0.0
    %738 = vmatpush.xpose.msra.mxu0 0.0
    %739 = vmatpush.xpose.msra.mxu0 0.0
    %740 = vmatpush.xpose.msra.mxu0 0.0
    %741 = vmatpush.xpose.msra.mxu0 0.0
    %742 = vmatpush.xpose.msra.mxu0 0.0
    %743 = vmatpush.xpose.msra.mxu0 0.0
    %744 = vmatpush.xpose.msra.mxu0 %v727
    %745 = vmatmul.f32.gmra.mxu0 %v725
    %v746 = vpop.f32.mrf.mxu0
    %v747 = vadd.f32 0.0, %v746
    %748 = vdwg.mxu0
    %749 = vrot.lane.b32.xlu0 %v388, 120
    %v750 = vpop.permute.xlu0 %749
    %751 = vrot.lane.b32.xlu0 %v388, 88
    %v752 = vpop.permute.xlu0 %751
    %v753 = vsel %vm399, %v750, 0
    %v755 = vsel %vm399, %v752, 0
    %757 = vmatpush.xpose.msra.mxu0 0.0
    %758 = vmatpush.xpose.msra.mxu0 0.0
    %759 = vmatpush.xpose.msra.mxu0 0.0
    %760 = vmatpush.xpose.msra.mxu0 0.0
    %761 = vmatpush.xpose.msra.mxu0 0.0
    %762 = vmatpush.xpose.msra.mxu0 0.0
    %763 = vmatpush.xpose.msra.mxu0 0.0
    %764 = vmatpush.xpose.msra.mxu0 0.0
    %765 = vmatpush.xpose.msra.mxu0 0.0
    %766 = vmatpush.xpose.msra.mxu0 0.0
    %767 = vmatpush.xpose.msra.mxu0 0.0
    %768 = vmatpush.xpose.msra.mxu0 0.0
    %769 = vmatpush.xpose.msra.mxu0 0.0
    %770 = vmatpush.xpose.msra.mxu0 0.0
    %771 = vmatpush.xpose.msra.mxu0 0.0
    %772 = vmatpush.xpose.msra.mxu0 %v755
    %773 = vmatmul.f32.gmra.mxu0 %v753
    %v774 = vpop.f32.mrf.mxu0
    %v775 = vadd.f32 0.0, %v774
    %776 = vdwg.mxu0
    %777 = vrot.lane.b32.xlu0 %v391, 120
    %v778 = vpop.permute.xlu0 %777
    %779 = vrot.lane.b32.xlu0 %v391, 88
    %v780 = vpop.permute.xlu0 %779
    %v781 = vsel %vm399, %v778, 0
    %v783 = vsel %vm399, %v780, 0
    %785 = vmatpush.xpose.msra.mxu0 0.0
    %786 = vmatpush.xpose.msra.mxu0 0.0
    %787 = vmatpush.xpose.msra.mxu0 0.0
    %788 = vmatpush.xpose.msra.mxu0 0.0
    %789 = vmatpush.xpose.msra.mxu0 0.0
    %790 = vmatpush.xpose.msra.mxu0 0.0
    %791 = vmatpush.xpose.msra.mxu0 0.0
    %792 = vmatpush.xpose.msra.mxu0 0.0
    %793 = vmatpush.xpose.msra.mxu0 0.0
    %794 = vmatpush.xpose.msra.mxu0 0.0
    %795 = vmatpush.xpose.msra.mxu0 0.0
    %796 = vmatpush.xpose.msra.mxu0 0.0
    %797 = vmatpush.xpose.msra.mxu0 0.0
    %798 = vmatpush.xpose.msra.mxu0 0.0
    %799 = vmatpush.xpose.msra.mxu0 0.0
    %800 = vmatpush.xpose.msra.mxu0 %v783
    %801 = vmatmul.f32.gmra.mxu0 %v781
    %v802 = vpop.f32.mrf.mxu0
    %v803 = vadd.f32 0.0, %v802
    %804 = vdwg.mxu0
    %805 = vrot.lane.b32.xlu0 %v394, 120
    %v806 = vpop.permute.xlu0 %805
    %807 = vrot.lane.b32.xlu0 %v394, 88
    %v808 = vpop.permute.xlu0 %807
    %v809 = vsel %vm399, %v806, 0
    %v811 = vsel %vm399, %v808, 0
    %813 = vmatpush.xpose.msra.mxu0 0.0
    %814 = vmatpush.xpose.msra.mxu0 0.0
    %815 = vmatpush.xpose.msra.mxu0 0.0
    %816 = vmatpush.xpose.msra.mxu0 0.0
    %817 = vmatpush.xpose.msra.mxu0 0.0
    %818 = vmatpush.xpose.msra.mxu0 0.0
    %819 = vmatpush.xpose.msra.mxu0 0.0
    %820 = vmatpush.xpose.msra.mxu0 0.0
    %821 = vmatpush.xpose.msra.mxu0 0.0
    %822 = vmatpush.xpose.msra.mxu0 0.0
    %823 = vmatpush.xpose.msra.mxu0 0.0
    %824 = vmatpush.xpose.msra.mxu0 0.0
    %825 = vmatpush.xpose.msra.mxu0 0.0
    %826 = vmatpush.xpose.msra.mxu0 0.0
    %827 = vmatpush.xpose.msra.mxu0 0.0
    %828 = vmatpush.xpose.msra.mxu0 %v811
    %829 = vmatmul.f32.gmra.mxu0 %v809
    %v830 = vpop.f32.mrf.mxu0
    %v831 = vadd.f32 0.0, %v830
    %832 = vdwg.mxu0
    %v833 = vmul.f32 %v747, 0.35355338
    %v834 = vmul.f32 %v775, 0.35355338
    %v835 = vmul.f32 %v803, 0.35355338
    %v836 = vmul.f32 %v831, 0.35355338
    %v837 = vadd.f32 %v833, %v509
    %v838 = vadd.f32 %v834, %v510
    %v839 = vadd.f32 %v835, %v511
    %v840 = vadd.f32 %v836, %v512
    %v841 = vsel %vm399, %v837, -inf
    %842 = vmax.xlane.f32.xlu0 %v841
    %v843 = vpop.xlane.xlu0 %842
    %v844 = vsel %vm399, %v838, -inf
    %845 = vmax.xlane.f32.xlu0 %v844
    %v846 = vpop.xlane.xlu0 %845
    %v847 = vsel %vm399, %v839, -inf
    %848 = vmax.xlane.f32.xlu0 %v847
    %v849 = vpop.xlane.xlu0 %848
    %v850 = vsel %vm399, %v840, -inf
    %851 = vmax.xlane.f32.xlu0 %v850
    %v852 = vpop.xlane.xlu0 %851
    %v853 = vsub.f32 %v837, %v843
    %v854 = vsub.f32 %v838, %v846
    %v855 = vsub.f32 %v839, %v849
    %v856 = vsub.f32 %v840, %v852
    %v857 = vmul.f32 %v853, 1.442695
    %v858 = vpow.pop %v857
    %v859 = vmul.f32 %v854, 1.442695
    %v860 = vpow.pop %v859
    %v861 = vmul.f32 %v855, 1.442695
    %v862 = vpow.pop %v861
    %v863 = vmul.f32 %v856, 1.442695
    %v864 = vpow.pop %v863
    %v865 = vsel %vm399, %v858, 0.0
    %866 = vadd.xlane.f32.xlu0 %v865
    %v867 = vpop.xlane.xlu0 %866
    %v868 = vsel %vm399, %v860, 0.0
    %869 = vadd.xlane.f32.xlu0 %v868
    %v870 = vpop.xlane.xlu0 %869
    %v871 = vsel %vm399, %v862, 0.0
    %872 = vadd.xlane.f32.xlu0 %v871
    %v873 = vpop.xlane.xlu0 %872
    %v874 = vsel %vm399, %v864, 0.0
    %875 = vadd.xlane.f32.xlu0 %v874
    %v876 = vpop.xlane.xlu0 %875
    %v877 = vrcp.pop %v867
    %v878 = vmul.f32 %v867, %v877
    %v879 = vsub.f32 1.0, %v878
    %v880 = vmul.f32 %v877, %v879
    %v881 = vadd.f32 %v877, %v880
    %vm882 = vweird.f32 %v867
    %vm883 = vweird.f32 %v877
    %vm884 = vmor %vm882, %vm883
    %v885 = vsel %vm884, %v877, %v881
    %v886 = vand.u32 2147483647, %v867
    %vm887 = vcmp.eq.f32.partialorder %v886, 8.507059e+37
    %v888 = vand.u32 %v867, 2147483648
    %v889 = vor.u32 1.1754944e-38, %v888
    %v890 = vsel %vm887, %v889, %v885
    %v891 = vmul.f32 %v858, %v890
    %v892 = vrcp.pop %v870
    %v893 = vmul.f32 %v870, %v892
    %v894 = vsub.f32 1.0, %v893
    %v895 = vmul.f32 %v892, %v894
    %v896 = vadd.f32 %v892, %v895
    %vm897 = vweird.f32 %v870
    %vm898 = vweird.f32 %v892
    %vm899 = vmor %vm897, %vm898
    %v900 = vsel %vm899, %v892, %v896
    %v901 = vand.u32 2147483647, %v870
    %vm902 = vcmp.eq.f32.partialorder %v901, 8.507059e+37
    %v903 = vand.u32 %v870, 2147483648
    %v904 = vor.u32 1.1754944e-38, %v903
    %v905 = vsel %vm902, %v904, %v900
    %v906 = vmul.f32 %v860, %v905
    %v907 = vrcp.pop %v873
    %v908 = vmul.f32 %v873, %v907
    %v909 = vsub.f32 1.0, %v908
    %v910 = vmul.f32 %v907, %v909
    %v911 = vadd.f32 %v907, %v910
    %vm912 = vweird.f32 %v873
    %vm913 = vweird.f32 %v907
    %vm914 = vmor %vm912, %vm913
    %v915 = vsel %vm914, %v907, %v911
    %v916 = vand.u32 2147483647, %v873
    %vm917 = vcmp.eq.f32.partialorder %v916, 8.507059e+37
    %v918 = vand.u32 %v873, 2147483648
    %v919 = vor.u32 1.1754944e-38, %v918
    %v920 = vsel %vm917, %v919, %v915
    %v921 = vmul.f32 %v862, %v920
    %v922 = vrcp.pop %v876
    %v923 = vmul.f32 %v876, %v922
    %v924 = vsub.f32 1.0, %v923
    %v925 = vmul.f32 %v922, %v924
    %v926 = vadd.f32 %v922, %v925
    %vm927 = vweird.f32 %v876
    %vm928 = vweird.f32 %v922
    %vm929 = vmor %vm927, %vm928
    %v930 = vsel %vm929, %v922, %v926
    %v931 = vand.u32 2147483647, %v876
    %vm932 = vcmp.eq.f32.partialorder %v931, 8.507059e+37
    %v933 = vand.u32 %v876, 2147483648
    %v934 = vor.u32 1.1754944e-38, %v933
    %v935 = vsel %vm932, %v934, %v930
    %v936 = vmul.f32 %v864, %v935
    %937 = vrot.lane.b32.xlu0 %v385, 56
    %v938 = vpop.permute.xlu0 %937
    %v941 = vsel %vm399, %v891, 0
    %943 = vmatpush.msra.mxu0 0.0
    %944 = vmatpush.msra.mxu0 0.0
    %945 = vmatpush.msra.mxu0 0.0
    %946 = vmatpush.msra.mxu0 0.0
    %947 = vmatpush.msra.mxu0 0.0
    %948 = vmatpush.msra.mxu0 0.0
    %949 = vmatpush.msra.mxu0 0.0
    %950 = vmatpush.msra.mxu0 0.0
    %951 = vmatpush.msra.mxu0 0.0
    %952 = vmatpush.msra.mxu0 0.0
    %953 = vmatpush.msra.mxu0 0.0
    %954 = vmatpush.msra.mxu0 0.0
    %955 = vmatpush.msra.mxu0 0.0
    %956 = vmatpush.msra.mxu0 0.0
    %957 = vmatpush.msra.mxu0 0.0
    %958 = vmatpush.msra.mxu0 %v938
    %959 = vmatmul.f32.gmra.mxu0 %v941
    %v960 = vpop.f32.mrf.mxu0
    %v961 = vadd.f32 0.0, %v960
    %962 = vdwg.mxu0
    %963 = vrot.lane.b32.xlu0 %v388, 56
    %v964 = vpop.permute.xlu0 %963
    %v967 = vsel %vm399, %v906, 0
    %969 = vmatpush.msra.mxu0 0.0
    %970 = vmatpush.msra.mxu0 0.0
    %971 = vmatpush.msra.mxu0 0.0
    %972 = vmatpush.msra.mxu0 0.0
    %973 = vmatpush.msra.mxu0 0.0
    %974 = vmatpush.msra.mxu0 0.0
    %975 = vmatpush.msra.mxu0 0.0
    %976 = vmatpush.msra.mxu0 0.0
    %977 = vmatpush.msra.mxu0 0.0
    %978 = vmatpush.msra.mxu0 0.0
    %979 = vmatpush.msra.mxu0 0.0
    %980 = vmatpush.msra.mxu0 0.0
    %981 = vmatpush.msra.mxu0 0.0
    %982 = vmatpush.msra.mxu0 0.0
    %983 = vmatpush.msra.mxu0 0.0
    %984 = vmatpush.msra.mxu0 %v964
    %985 = vmatmul.f32.gmra.mxu0 %v967
    %v986 = vpop.f32.mrf.mxu0
    %v987 = vadd.f32 0.0, %v986
    %988 = vdwg.mxu0
    %989 = vrot.lane.b32.xlu0 %v391, 56
    %v990 = vpop.permute.xlu0 %989
    %v993 = vsel %vm399, %v921, 0
    %995 = vmatpush.msra.mxu0 0.0
    %996 = vmatpush.msra.mxu0 0.0
    %997 = vmatpush.msra.mxu0 0.0
    %998 = vmatpush.msra.mxu0 0.0
    %999 = vmatpush.msra.mxu0 0.0
    %1000 = vmatpush.msra.mxu0 0.0
    %1001 = vmatpush.msra.mxu0 0.0
    %1002 = vmatpush.msra.mxu0 0.0
    %1003 = vmatpush.msra.mxu0 0.0
    %1004 = vmatpush.msra.mxu0 0.0
    %1005 = vmatpush.msra.mxu0 0.0
    %1006 = vmatpush.msra.mxu0 0.0
    %1007 = vmatpush.msra.mxu0 0.0
    %1008 = vmatpush.msra.mxu0 0.0
    %1009 = vmatpush.msra.mxu0 0.0
    %1010 = vmatpush.msra.mxu0 %v990
    %1011 = vmatmul.f32.gmra.mxu0 %v993
    %v1012 = vpop.f32.mrf.mxu0
    %v1013 = vadd.f32 0.0, %v1012
    %1014 = vdwg.mxu0
    %1015 = vrot.lane.b32.xlu0 %v394, 56
    %v1016 = vpop.permute.xlu0 %1015
    %v1019 = vsel %vm399, %v936, 0
    %1021 = vmatpush.msra.mxu0 0.0
    %1022 = vmatpush.msra.mxu0 0.0
    %1023 = vmatpush.msra.mxu0 0.0
    %1024 = vmatpush.msra.mxu0 0.0
    %1025 = vmatpush.msra.mxu0 0.0
    %1026 = vmatpush.msra.mxu0 0.0
    %1027 = vmatpush.msra.mxu0 0.0
    %1028 = vmatpush.msra.mxu0 0.0
    %1029 = vmatpush.msra.mxu0 0.0
    %1030 = vmatpush.msra.mxu0 0.0
    %1031 = vmatpush.msra.mxu0 0.0
    %1032 = vmatpush.msra.mxu0 0.0
    %1033 = vmatpush.msra.mxu0 0.0
    %1034 = vmatpush.msra.mxu0 0.0
    %1035 = vmatpush.msra.mxu0 0.0
    %1036 = vmatpush.msra.mxu0 %v1016
    %1037 = vmatmul.f32.gmra.mxu0 %v1019
    %v1038 = vpop.f32.mrf.mxu0
    %v1039 = vadd.f32 0.0, %v1038
    %1040 = vdwg.mxu0
    %1041 = vrot.lane.b32.xlu0 %v385, 112
    %v1042 = vpop.permute.xlu0 %1041
    %1043 = vrot.lane.b32.xlu0 %v385, 80
    %v1044 = vpop.permute.xlu0 %1043
    %v1045 = vsel %vm399, %v1042, 0
    %v1047 = vsel %vm399, %v1044, 0
    %1049 = vmatpush.xpose.msra.mxu0 0.0
    %1050 = vmatpush.xpose.msra.mxu0 0.0
    %1051 = vmatpush.xpose.msra.mxu0 0.0
    %1052 = vmatpush.xpose.msra.mxu0 0.0
    %1053 = vmatpush.xpose.msra.mxu0 0.0
    %1054 = vmatpush.xpose.msra.mxu0 0.0
    %1055 = vmatpush.xpose.msra.mxu0 0.0
    %1056 = vmatpush.xpose.msra.mxu0 0.0
    %1057 = vmatpush.xpose.msra.mxu0 0.0
    %1058 = vmatpush.xpose.msra.mxu0 0.0
    %1059 = vmatpush.xpose.msra.mxu0 0.0
    %1060 = vmatpush.xpose.msra.mxu0 0.0
    %1061 = vmatpush.xpose.msra.mxu0 0.0
    %1062 = vmatpush.xpose.msra.mxu0 0.0
    %1063 = vmatpush.xpose.msra.mxu0 0.0
    %1064 = vmatpush.xpose.msra.mxu0 %v1047
    %1065 = vmatmul.f32.gmra.mxu0 %v1045
    %v1066 = vpop.f32.mrf.mxu0
    %v1067 = vadd.f32 0.0, %v1066
    %1068 = vdwg.mxu0
    %1069 = vrot.lane.b32.xlu0 %v388, 112
    %v1070 = vpop.permute.xlu0 %1069
    %1071 = vrot.lane.b32.xlu0 %v388, 80
    %v1072 = vpop.permute.xlu0 %1071
    %v1073 = vsel %vm399, %v1070, 0
    %v1075 = vsel %vm399, %v1072, 0
    %1077 = vmatpush.xpose.msra.mxu0 0.0
    %1078 = vmatpush.xpose.msra.mxu0 0.0
    %1079 = vmatpush.xpose.msra.mxu0 0.0
    %1080 = vmatpush.xpose.msra.mxu0 0.0
    %1081 = vmatpush.xpose.msra.mxu0 0.0
    %1082 = vmatpush.xpose.msra.mxu0 0.0
    %1083 = vmatpush.xpose.msra.mxu0 0.0
    %1084 = vmatpush.xpose.msra.mxu0 0.0
    %1085 = vmatpush.xpose.msra.mxu0 0.0
    %1086 = vmatpush.xpose.msra.mxu0 0.0
    %1087 = vmatpush.xpose.msra.mxu0 0.0
    %1088 = vmatpush.xpose.msra.mxu0 0.0
    %1089 = vmatpush.xpose.msra.mxu0 0.0
    %1090 = vmatpush.xpose.msra.mxu0 0.0
    %1091 = vmatpush.xpose.msra.mxu0 0.0
    %1092 = vmatpush.xpose.msra.mxu0 %v1075
    %1093 = vmatmul.f32.gmra.mxu0 %v1073
    %v1094 = vpop.f32.mrf.mxu0
    %v1095 = vadd.f32 0.0, %v1094
    %1096 = vdwg.mxu0
    %1097 = vrot.lane.b32.xlu0 %v391, 112
    %v1098 = vpop.permute.xlu0 %1097
    %1099 = vrot.lane.b32.xlu0 %v391, 80
    %v1100 = vpop.permute.xlu0 %1099
    %v1101 = vsel %vm399, %v1098, 0
    %v1103 = vsel %vm399, %v1100, 0
    %1105 = vmatpush.xpose.msra.mxu0 0.0
    %1106 = vmatpush.xpose.msra.mxu0 0.0
    %1107 = vmatpush.xpose.msra.mxu0 0.0
    %1108 = vmatpush.xpose.msra.mxu0 0.0
    %1109 = vmatpush.xpose.msra.mxu0 0.0
    %1110 = vmatpush.xpose.msra.mxu0 0.0
    %1111 = vmatpush.xpose.msra.mxu0 0.0
    %1112 = vmatpush.xpose.msra.mxu0 0.0
    %1113 = vmatpush.xpose.msra.mxu0 0.0
    %1114 = vmatpush.xpose.msra.mxu0 0.0
    %1115 = vmatpush.xpose.msra.mxu0 0.0
    %1116 = vmatpush.xpose.msra.mxu0 0.0
    %1117 = vmatpush.xpose.msra.mxu0 0.0
    %1118 = vmatpush.xpose.msra.mxu0 0.0
    %1119 = vmatpush.xpose.msra.mxu0 0.0
    %1120 = vmatpush.xpose.msra.mxu0 %v1103
    %1121 = vmatmul.f32.gmra.mxu0 %v1101
    %v1122 = vpop.f32.mrf.mxu0
    %v1123 = vadd.f32 0.0, %v1122
    %1124 = vdwg.mxu0
    %1125 = vrot.lane.b32.xlu0 %v394, 112
    %v1126 = vpop.permute.xlu0 %1125
    %1127 = vrot.lane.b32.xlu0 %v394, 80
    %v1128 = vpop.permute.xlu0 %1127
    %v1129 = vsel %vm399, %v1126, 0
    %v1131 = vsel %vm399, %v1128, 0
    %1133 = vmatpush.xpose.msra.mxu0 0.0
    %1134 = vmatpush.xpose.msra.mxu0 0.0
    %1135 = vmatpush.xpose.msra.mxu0 0.0
    %1136 = vmatpush.xpose.msra.mxu0 0.0
    %1137 = vmatpush.xpose.msra.mxu0 0.0
    %1138 = vmatpush.xpose.msra.mxu0 0.0
    %1139 = vmatpush.xpose.msra.mxu0 0.0
    %1140 = vmatpush.xpose.msra.mxu0 0.0
    %1141 = vmatpush.xpose.msra.mxu0 0.0
    %1142 = vmatpush.xpose.msra.mxu0 0.0
    %1143 = vmatpush.xpose.msra.mxu0 0.0
    %1144 = vmatpush.xpose.msra.mxu0 0.0
    %1145 = vmatpush.xpose.msra.mxu0 0.0
    %1146 = vmatpush.xpose.msra.mxu0 0.0
    %1147 = vmatpush.xpose.msra.mxu0 0.0
    %1148 = vmatpush.xpose.msra.mxu0 %v1131
    %1149 = vmatmul.f32.gmra.mxu0 %v1129
    %v1150 = vpop.f32.mrf.mxu0
    %v1151 = vadd.f32 0.0, %v1150
    %1152 = vdwg.mxu0
    %v1153 = vmul.f32 %v1067, 0.35355338
    %v1154 = vmul.f32 %v1095, 0.35355338
    %v1155 = vmul.f32 %v1123, 0.35355338
    %v1156 = vmul.f32 %v1151, 0.35355338
    %v1157 = vadd.f32 %v1153, %v509
    %v1158 = vadd.f32 %v1154, %v510
    %v1159 = vadd.f32 %v1155, %v511
    %v1160 = vadd.f32 %v1156, %v512
    %v1161 = vsel %vm399, %v1157, -inf
    %1162 = vmax.xlane.f32.xlu0 %v1161
    %v1163 = vpop.xlane.xlu0 %1162
    %v1164 = vsel %vm399, %v1158, -inf
    %1165 = vmax.xlane.f32.xlu0 %v1164
    %v1166 = vpop.xlane.xlu0 %1165
    %v1167 = vsel %vm399, %v1159, -inf
    %1168 = vmax.xlane.f32.xlu0 %v1167
    %v1169 = vpop.xlane.xlu0 %1168
    %v1170 = vsel %vm399, %v1160, -inf
    %1171 = vmax.xlane.f32.xlu0 %v1170
    %v1172 = vpop.xlane.xlu0 %1171
    %v1173 = vsub.f32 %v1157, %v1163
    %v1174 = vsub.f32 %v1158, %v1166
    %v1175 = vsub.f32 %v1159, %v1169
    %v1176 = vsub.f32 %v1160, %v1172
    %v1177 = vmul.f32 %v1173, 1.442695
    %v1178 = vpow.pop %v1177
    %v1179 = vmul.f32 %v1174, 1.442695
    %v1180 = vpow.pop %v1179
    %v1181 = vmul.f32 %v1175, 1.442695
    %v1182 = vpow.pop %v1181
    %v1183 = vmul.f32 %v1176, 1.442695
    %v1184 = vpow.pop %v1183
    %v1185 = vsel %vm399, %v1178, 0.0
    %1186 = vadd.xlane.f32.xlu0 %v1185
    %v1187 = vpop.xlane.xlu0 %1186
    %v1188 = vsel %vm399, %v1180, 0.0
    %1189 = vadd.xlane.f32.xlu0 %v1188
    %v1190 = vpop.xlane.xlu0 %1189
    %v1191 = vsel %vm399, %v1182, 0.0
    %1192 = vadd.xlane.f32.xlu0 %v1191
    %v1193 = vpop.xlane.xlu0 %1192
    %v1194 = vsel %vm399, %v1184, 0.0
    %1195 = vadd.xlane.f32.xlu0 %v1194
    %v1196 = vpop.xlane.xlu0 %1195
    %v1197 = vrcp.pop %v1187
    %v1198 = vmul.f32 %v1187, %v1197
    %v1199 = vsub.f32 1.0, %v1198
    %v1200 = vmul.f32 %v1197, %v1199
    %v1201 = vadd.f32 %v1197, %v1200
    %vm1202 = vweird.f32 %v1187
    %vm1203 = vweird.f32 %v1197
    %vm1204 = vmor %vm1202, %vm1203
    %v1205 = vsel %vm1204, %v1197, %v1201
    %v1206 = vand.u32 2147483647, %v1187
    %vm1207 = vcmp.eq.f32.partialorder %v1206, 8.507059e+37
    %v1208 = vand.u32 %v1187, 2147483648
    %v1209 = vor.u32 1.1754944e-38, %v1208
    %v1210 = vsel %vm1207, %v1209, %v1205
    %v1211 = vmul.f32 %v1178, %v1210
    %v1212 = vrcp.pop %v1190
    %v1213 = vmul.f32 %v1190, %v1212
    %v1214 = vsub.f32 1.0, %v1213
    %v1215 = vmul.f32 %v1212, %v1214
    %v1216 = vadd.f32 %v1212, %v1215
    %vm1217 = vweird.f32 %v1190
    %vm1218 = vweird.f32 %v1212
    %vm1219 = vmor %vm1217, %vm1218
    %v1220 = vsel %vm1219, %v1212, %v1216
    %v1221 = vand.u32 2147483647, %v1190
    %vm1222 = vcmp.eq.f32.partialorder %v1221, 8.507059e+37
    %v1223 = vand.u32 %v1190, 2147483648
    %v1224 = vor.u32 1.1754944e-38, %v1223
    %v1225 = vsel %vm1222, %v1224, %v1220
    %v1226 = vmul.f32 %v1180, %v1225
    %v1227 = vrcp.pop %v1193
    %v1228 = vmul.f32 %v1193, %v1227
    %v1229 = vsub.f32 1.0, %v1228
    %v1230 = vmul.f32 %v1227, %v1229
    %v1231 = vadd.f32 %v1227, %v1230
    %vm1232 = vweird.f32 %v1193
    %vm1233 = vweird.f32 %v1227
    %vm1234 = vmor %vm1232, %vm1233
    %v1235 = vsel %vm1234, %v1227, %v1231
    %v1236 = vand.u32 2147483647, %v1193
    %vm1237 = vcmp.eq.f32.partialorder %v1236, 8.507059e+37
    %v1238 = vand.u32 %v1193, 2147483648
    %v1239 = vor.u32 1.1754944e-38, %v1238
    %v1240 = vsel %vm1237, %v1239, %v1235
    %v1241 = vmul.f32 %v1182, %v1240
    %v1242 = vrcp.pop %v1196
    %v1243 = vmul.f32 %v1196, %v1242
    %v1244 = vsub.f32 1.0, %v1243
    %v1245 = vmul.f32 %v1242, %v1244
    %v1246 = vadd.f32 %v1242, %v1245
    %vm1247 = vweird.f32 %v1196
    %vm1248 = vweird.f32 %v1242
    %vm1249 = vmor %vm1247, %vm1248
    %v1250 = vsel %vm1249, %v1242, %v1246
    %v1251 = vand.u32 2147483647, %v1196
    %vm1252 = vcmp.eq.f32.partialorder %v1251, 8.507059e+37
    %v1253 = vand.u32 %v1196, 2147483648
    %v1254 = vor.u32 1.1754944e-38, %v1253
    %v1255 = vsel %vm1252, %v1254, %v1250
    %v1256 = vmul.f32 %v1184, %v1255
    %1257 = vrot.lane.b32.xlu0 %v385, 48
    %v1258 = vpop.permute.xlu0 %1257
    %v1261 = vsel %vm399, %v1211, 0
    %1263 = vmatpush.msra.mxu0 0.0
    %1264 = vmatpush.msra.mxu0 0.0
    %1265 = vmatpush.msra.mxu0 0.0
    %1266 = vmatpush.msra.mxu0 0.0
    %1267 = vmatpush.msra.mxu0 0.0
    %1268 = vmatpush.msra.mxu0 0.0
    %1269 = vmatpush.msra.mxu0 0.0
    %1270 = vmatpush.msra.mxu0 0.0
    %1271 = vmatpush.msra.mxu0 0.0
    %1272 = vmatpush.msra.mxu0 0.0
    %1273 = vmatpush.msra.mxu0 0.0
    %1274 = vmatpush.msra.mxu0 0.0
    %1275 = vmatpush.msra.mxu0 0.0
    %1276 = vmatpush.msra.mxu0 0.0
    %1277 = vmatpush.msra.mxu0 0.0
    %1278 = vmatpush.msra.mxu0 %v1258
    %1279 = vmatmul.f32.gmra.mxu0 %v1261
    %v1280 = vpop.f32.mrf.mxu0
    %v1281 = vadd.f32 0.0, %v1280
    %1282 = vdwg.mxu0
    %1283 = vrot.lane.b32.xlu0 %v388, 48
    %v1284 = vpop.permute.xlu0 %1283
    %v1287 = vsel %vm399, %v1226, 0
    %1289 = vmatpush.msra.mxu0 0.0
    %1290 = vmatpush.msra.mxu0 0.0
    %1291 = vmatpush.msra.mxu0 0.0
    %1292 = vmatpush.msra.mxu0 0.0
    %1293 = vmatpush.msra.mxu0 0.0
    %1294 = vmatpush.msra.mxu0 0.0
    %1295 = vmatpush.msra.mxu0 0.0
    %1296 = vmatpush.msra.mxu0 0.0
    %1297 = vmatpush.msra.mxu0 0.0
    %1298 = vmatpush.msra.mxu0 0.0
    %1299 = vmatpush.msra.mxu0 0.0
    %1300 = vmatpush.msra.mxu0 0.0
    %1301 = vmatpush.msra.mxu0 0.0
    %1302 = vmatpush.msra.mxu0 0.0
    %1303 = vmatpush.msra.mxu0 0.0
    %1304 = vmatpush.msra.mxu0 %v1284
    %1305 = vmatmul.f32.gmra.mxu0 %v1287
    %v1306 = vpop.f32.mrf.mxu0
    %v1307 = vadd.f32 0.0, %v1306
    %1308 = vdwg.mxu0
    %1309 = vrot.lane.b32.xlu0 %v391, 48
    %v1310 = vpop.permute.xlu0 %1309
    %v1313 = vsel %vm399, %v1241, 0
    %1315 = vmatpush.msra.mxu0 0.0
    %1316 = vmatpush.msra.mxu0 0.0
    %1317 = vmatpush.msra.mxu0 0.0
    %1318 = vmatpush.msra.mxu0 0.0
    %1319 = vmatpush.msra.mxu0 0.0
    %1320 = vmatpush.msra.mxu0 0.0
    %1321 = vmatpush.msra.mxu0 0.0
    %1322 = vmatpush.msra.mxu0 0.0
    %1323 = vmatpush.msra.mxu0 0.0
    %1324 = vmatpush.msra.mxu0 0.0
    %1325 = vmatpush.msra.mxu0 0.0
    %1326 = vmatpush.msra.mxu0 0.0
    %1327 = vmatpush.msra.mxu0 0.0
    %1328 = vmatpush.msra.mxu0 0.0
    %1329 = vmatpush.msra.mxu0 0.0
    %1330 = vmatpush.msra.mxu0 %v1310
    %1331 = vmatmul.f32.gmra.mxu0 %v1313
    %v1332 = vpop.f32.mrf.mxu0
    %v1333 = vadd.f32 0.0, %v1332
    %1334 = vdwg.mxu0
    %1335 = vrot.lane.b32.xlu0 %v394, 48
    %v1336 = vpop.permute.xlu0 %1335
    %v1339 = vsel %vm399, %v1256, 0
    %1341 = vmatpush.msra.mxu0 0.0
    %1342 = vmatpush.msra.mxu0 0.0
    %1343 = vmatpush.msra.mxu0 0.0
    %1344 = vmatpush.msra.mxu0 0.0
    %1345 = vmatpush.msra.mxu0 0.0
    %1346 = vmatpush.msra.mxu0 0.0
    %1347 = vmatpush.msra.mxu0 0.0
    %1348 = vmatpush.msra.mxu0 0.0
    %1349 = vmatpush.msra.mxu0 0.0
    %1350 = vmatpush.msra.mxu0 0.0
    %1351 = vmatpush.msra.mxu0 0.0
    %1352 = vmatpush.msra.mxu0 0.0
    %1353 = vmatpush.msra.mxu0 0.0
    %1354 = vmatpush.msra.mxu0 0.0
    %1355 = vmatpush.msra.mxu0 0.0
    %1356 = vmatpush.msra.mxu0 %v1336
    %1357 = vmatmul.f32.gmra.mxu0 %v1339
    %v1358 = vpop.f32.mrf.mxu0
    %v1359 = vadd.f32 0.0, %v1358
    %1360 = vdwg.mxu0
    %1361 = vrot.lane.b32.xlu0 %v385, 104
    %v1362 = vpop.permute.xlu0 %1361
    %1363 = vrot.lane.b32.xlu0 %v385, 72
    %v1364 = vpop.permute.xlu0 %1363
    %v1365 = vsel %vm399, %v1362, 0
    %v1367 = vsel %vm399, %v1364, 0
    %1369 = vmatpush.xpose.msra.mxu0 0.0
    %1370 = vmatpush.xpose.msra.mxu0 0.0
    %1371 = vmatpush.xpose.msra.mxu0 0.0
    %1372 = vmatpush.xpose.msra.mxu0 0.0
    %1373 = vmatpush.xpose.msra.mxu0 0.0
    %1374 = vmatpush.xpose.msra.mxu0 0.0
    %1375 = vmatpush.xpose.msra.mxu0 0.0
    %1376 = vmatpush.xpose.msra.mxu0 0.0
    %1377 = vmatpush.xpose.msra.mxu0 0.0
    %1378 = vmatpush.xpose.msra.mxu0 0.0
    %1379 = vmatpush.xpose.msra.mxu0 0.0
    %1380 = vmatpush.xpose.msra.mxu0 0.0
    %1381 = vmatpush.xpose.msra.mxu0 0.0
    %1382 = vmatpush.xpose.msra.mxu0 0.0
    %1383 = vmatpush.xpose.msra.mxu0 0.0
    %1384 = vmatpush.xpose.msra.mxu0 %v1367
    %1385 = vmatmul.f32.gmra.mxu0 %v1365
    %v1386 = vpop.f32.mrf.mxu0
    %v1387 = vadd.f32 0.0, %v1386
    %1388 = vdwg.mxu0
    %1389 = vrot.lane.b32.xlu0 %v388, 104
    %v1390 = vpop.permute.xlu0 %1389
    %1391 = vrot.lane.b32.xlu0 %v388, 72
    %v1392 = vpop.permute.xlu0 %1391
    %v1393 = vsel %vm399, %v1390, 0
    %v1395 = vsel %vm399, %v1392, 0
    %1397 = vmatpush.xpose.msra.mxu0 0.0
    %1398 = vmatpush.xpose.msra.mxu0 0.0
    %1399 = vmatpush.xpose.msra.mxu0 0.0
    %1400 = vmatpush.xpose.msra.mxu0 0.0
    %1401 = vmatpush.xpose.msra.mxu0 0.0
    %1402 = vmatpush.xpose.msra.mxu0 0.0
    %1403 = vmatpush.xpose.msra.mxu0 0.0
    %1404 = vmatpush.xpose.msra.mxu0 0.0
    %1405 = vmatpush.xpose.msra.mxu0 0.0
    %1406 = vmatpush.xpose.msra.mxu0 0.0
    %1407 = vmatpush.xpose.msra.mxu0 0.0
    %1408 = vmatpush.xpose.msra.mxu0 0.0
    %1409 = vmatpush.xpose.msra.mxu0 0.0
    %1410 = vmatpush.xpose.msra.mxu0 0.0
    %1411 = vmatpush.xpose.msra.mxu0 0.0
    %1412 = vmatpush.xpose.msra.mxu0 %v1395
    %1413 = vmatmul.f32.gmra.mxu0 %v1393
    %v1414 = vpop.f32.mrf.mxu0
    %v1415 = vadd.f32 0.0, %v1414
    %1416 = vdwg.mxu0
    %1417 = vrot.lane.b32.xlu0 %v391, 104
    %v1418 = vpop.permute.xlu0 %1417
    %1419 = vrot.lane.b32.xlu0 %v391, 72
    %v1420 = vpop.permute.xlu0 %1419
    %v1421 = vsel %vm399, %v1418, 0
    %v1423 = vsel %vm399, %v1420, 0
    %1425 = vmatpush.xpose.msra.mxu0 0.0
    %1426 = vmatpush.xpose.msra.mxu0 0.0
    %1427 = vmatpush.xpose.msra.mxu0 0.0
    %1428 = vmatpush.xpose.msra.mxu0 0.0
    %1429 = vmatpush.xpose.msra.mxu0 0.0
    %1430 = vmatpush.xpose.msra.mxu0 0.0
    %1431 = vmatpush.xpose.msra.mxu0 0.0
    %1432 = vmatpush.xpose.msra.mxu0 0.0
    %1433 = vmatpush.xpose.msra.mxu0 0.0
    %1434 = vmatpush.xpose.msra.mxu0 0.0
    %1435 = vmatpush.xpose.msra.mxu0 0.0
    %1436 = vmatpush.xpose.msra.mxu0 0.0
    %1437 = vmatpush.xpose.msra.mxu0 0.0
    %1438 = vmatpush.xpose.msra.mxu0 0.0
    %1439 = vmatpush.xpose.msra.mxu0 0.0
    %1440 = vmatpush.xpose.msra.mxu0 %v1423
    %1441 = vmatmul.f32.gmra.mxu0 %v1421
    %v1442 = vpop.f32.mrf.mxu0
    %v1443 = vadd.f32 0.0, %v1442
    %1444 = vdwg.mxu0
    %1445 = vrot.lane.b32.xlu0 %v394, 104
    %v1446 = vpop.permute.xlu0 %1445
    %1447 = vrot.lane.b32.xlu0 %v394, 72
    %v1448 = vpop.permute.xlu0 %1447
    %v1449 = vsel %vm399, %v1446, 0
    %v1451 = vsel %vm399, %v1448, 0
    %1453 = vmatpush.xpose.msra.mxu0 0.0
    %1454 = vmatpush.xpose.msra.mxu0 0.0
    %1455 = vmatpush.xpose.msra.mxu0 0.0
    %1456 = vmatpush.xpose.msra.mxu0 0.0
    %1457 = vmatpush.xpose.msra.mxu0 0.0
    %1458 = vmatpush.xpose.msra.mxu0 0.0
    %1459 = vmatpush.xpose.msra.mxu0 0.0
    %1460 = vmatpush.xpose.msra.mxu0 0.0
    %1461 = vmatpush.xpose.msra.mxu0 0.0
    %1462 = vmatpush.xpose.msra.mxu0 0.0
    %1463 = vmatpush.xpose.msra.mxu0 0.0
    %1464 = vmatpush.xpose.msra.mxu0 0.0
    %1465 = vmatpush.xpose.msra.mxu0 0.0
    %1466 = vmatpush.xpose.msra.mxu0 0.0
    %1467 = vmatpush.xpose.msra.mxu0 0.0
    %1468 = vmatpush.xpose.msra.mxu0 %v1451
    %1469 = vmatmul.f32.gmra.mxu0 %v1449
    %v1470 = vpop.f32.mrf.mxu0
    %v1471 = vadd.f32 0.0, %v1470
    %1472 = vdwg.mxu0
    %v1473 = vmul.f32 %v1387, 0.35355338
    %v1474 = vmul.f32 %v1415, 0.35355338
    %v1475 = vmul.f32 %v1443, 0.35355338
    %v1476 = vmul.f32 %v1471, 0.35355338
    %v1477 = vadd.f32 %v1473, %v509
    %v1478 = vadd.f32 %v1474, %v510
    %v1479 = vadd.f32 %v1475, %v511
    %v1480 = vadd.f32 %v1476, %v512
    %v1481 = vsel %vm399, %v1477, -inf
    %1482 = vmax.xlane.f32.xlu0 %v1481
    %v1483 = vpop.xlane.xlu0 %1482
    %v1484 = vsel %vm399, %v1478, -inf
    %1485 = vmax.xlane.f32.xlu0 %v1484
    %v1486 = vpop.xlane.xlu0 %1485
    %v1487 = vsel %vm399, %v1479, -inf
    %1488 = vmax.xlane.f32.xlu0 %v1487
    %v1489 = vpop.xlane.xlu0 %1488
    %v1490 = vsel %vm399, %v1480, -inf
    %1491 = vmax.xlane.f32.xlu0 %v1490
    %v1492 = vpop.xlane.xlu0 %1491
    %v1493 = vsub.f32 %v1477, %v1483
    %v1494 = vsub.f32 %v1478, %v1486
    %v1495 = vsub.f32 %v1479, %v1489
    %v1496 = vsub.f32 %v1480, %v1492
    %v1497 = vmul.f32 %v1493, 1.442695
    %v1498 = vpow.pop %v1497
    %v1499 = vmul.f32 %v1494, 1.442695
    %v1500 = vpow.pop %v1499
    %v1501 = vmul.f32 %v1495, 1.442695
    %v1502 = vpow.pop %v1501
    %v1503 = vmul.f32 %v1496, 1.442695
    %v1504 = vpow.pop %v1503
    %v1505 = vsel %vm399, %v1498, 0.0
    %1506 = vadd.xlane.f32.xlu0 %v1505
    %v1507 = vpop.xlane.xlu0 %1506
    %v1508 = vsel %vm399, %v1500, 0.0
    %1509 = vadd.xlane.f32.xlu0 %v1508
    %v1510 = vpop.xlane.xlu0 %1509
    %v1511 = vsel %vm399, %v1502, 0.0
    %1512 = vadd.xlane.f32.xlu0 %v1511
    %v1513 = vpop.xlane.xlu0 %1512
    %v1514 = vsel %vm399, %v1504, 0.0
    %1515 = vadd.xlane.f32.xlu0 %v1514
    %v1516 = vpop.xlane.xlu0 %1515
    %v1517 = vrcp.pop %v1507
    %v1518 = vmul.f32 %v1507, %v1517
    %v1519 = vsub.f32 1.0, %v1518
    %v1520 = vmul.f32 %v1517, %v1519
    %v1521 = vadd.f32 %v1517, %v1520
    %vm1522 = vweird.f32 %v1507
    %vm1523 = vweird.f32 %v1517
    %vm1524 = vmor %vm1522, %vm1523
    %v1525 = vsel %vm1524, %v1517, %v1521
    %v1526 = vand.u32 2147483647, %v1507
    %vm1527 = vcmp.eq.f32.partialorder %v1526, 8.507059e+37
    %v1528 = vand.u32 %v1507, 2147483648
    %v1529 = vor.u32 1.1754944e-38, %v1528
    %v1530 = vsel %vm1527, %v1529, %v1525
    %v1531 = vmul.f32 %v1498, %v1530
    %v1532 = vrcp.pop %v1510
    %v1533 = vmul.f32 %v1510, %v1532
    %v1534 = vsub.f32 1.0, %v1533
    %v1535 = vmul.f32 %v1532, %v1534
    %v1536 = vadd.f32 %v1532, %v1535
    %vm1537 = vweird.f32 %v1510
    %vm1538 = vweird.f32 %v1532
    %vm1539 = vmor %vm1537, %vm1538
    %v1540 = vsel %vm1539, %v1532, %v1536
    %v1541 = vand.u32 2147483647, %v1510
    %vm1542 = vcmp.eq.f32.partialorder %v1541, 8.507059e+37
    %v1543 = vand.u32 %v1510, 2147483648
    %v1544 = vor.u32 1.1754944e-38, %v1543
    %v1545 = vsel %vm1542, %v1544, %v1540
    %v1546 = vmul.f32 %v1500, %v1545
    %v1547 = vrcp.pop %v1513
    %v1548 = vmul.f32 %v1513, %v1547
    %v1549 = vsub.f32 1.0, %v1548
    %v1550 = vmul.f32 %v1547, %v1549
    %v1551 = vadd.f32 %v1547, %v1550
    %vm1552 = vweird.f32 %v1513
    %vm1553 = vweird.f32 %v1547
    %vm1554 = vmor %vm1552, %vm1553
    %v1555 = vsel %vm1554, %v1547, %v1551
    %v1556 = vand.u32 2147483647, %v1513
    %vm1557 = vcmp.eq.f32.partialorder %v1556, 8.507059e+37
    %v1558 = vand.u32 %v1513, 2147483648
    %v1559 = vor.u32 1.1754944e-38, %v1558
    %v1560 = vsel %vm1557, %v1559, %v1555
    %v1561 = vmul.f32 %v1502, %v1560
    %v1562 = vrcp.pop %v1516
    %v1563 = vmul.f32 %v1516, %v1562
    %v1564 = vsub.f32 1.0, %v1563
    %v1565 = vmul.f32 %v1562, %v1564
    %v1566 = vadd.f32 %v1562, %v1565
    %vm1567 = vweird.f32 %v1516
    %vm1568 = vweird.f32 %v1562
    %vm1569 = vmor %vm1567, %vm1568
    %v1570 = vsel %vm1569, %v1562, %v1566
    %v1571 = vand.u32 2147483647, %v1516
    %vm1572 = vcmp.eq.f32.partialorder %v1571, 8.507059e+37
    %v1573 = vand.u32 %v1516, 2147483648
    %v1574 = vor.u32 1.1754944e-38, %v1573
    %v1575 = vsel %vm1572, %v1574, %v1570
    %v1576 = vmul.f32 %v1504, %v1575
    %1577 = vrot.lane.b32.xlu0 %v385, 40
    %v1578 = vpop.permute.xlu0 %1577
    %v1581 = vsel %vm399, %v1531, 0
    %1583 = vmatpush.msra.mxu0 0.0
    %1584 = vmatpush.msra.mxu0 0.0
    %1585 = vmatpush.msra.mxu0 0.0
    %1586 = vmatpush.msra.mxu0 0.0
    %1587 = vmatpush.msra.mxu0 0.0
    %1588 = vmatpush.msra.mxu0 0.0
    %1589 = vmatpush.msra.mxu0 0.0
    %1590 = vmatpush.msra.mxu0 0.0
    %1591 = vmatpush.msra.mxu0 0.0
    %1592 = vmatpush.msra.mxu0 0.0
    %1593 = vmatpush.msra.mxu0 0.0
    %1594 = vmatpush.msra.mxu0 0.0
    %1595 = vmatpush.msra.mxu0 0.0
    %1596 = vmatpush.msra.mxu0 0.0
    %1597 = vmatpush.msra.mxu0 0.0
    %1598 = vmatpush.msra.mxu0 %v1578
    %1599 = vmatmul.f32.gmra.mxu0 %v1581
    %v1600 = vpop.f32.mrf.mxu0
    %v1601 = vadd.f32 0.0, %v1600
    %1602 = vdwg.mxu0
    %1603 = vrot.lane.b32.xlu0 %v388, 40
    %v1604 = vpop.permute.xlu0 %1603
    %v1607 = vsel %vm399, %v1546, 0
    %1609 = vmatpush.msra.mxu0 0.0
    %1610 = vmatpush.msra.mxu0 0.0
    %1611 = vmatpush.msra.mxu0 0.0
    %1612 = vmatpush.msra.mxu0 0.0
    %1613 = vmatpush.msra.mxu0 0.0
    %1614 = vmatpush.msra.mxu0 0.0
    %1615 = vmatpush.msra.mxu0 0.0
    %1616 = vmatpush.msra.mxu0 0.0
    %1617 = vmatpush.msra.mxu0 0.0
    %1618 = vmatpush.msra.mxu0 0.0
    %1619 = vmatpush.msra.mxu0 0.0
    %1620 = vmatpush.msra.mxu0 0.0
    %1621 = vmatpush.msra.mxu0 0.0
    %1622 = vmatpush.msra.mxu0 0.0
    %1623 = vmatpush.msra.mxu0 0.0
    %1624 = vmatpush.msra.mxu0 %v1604
    %1625 = vmatmul.f32.gmra.mxu0 %v1607
    %v1626 = vpop.f32.mrf.mxu0
    %v1627 = vadd.f32 0.0, %v1626
    %1628 = vdwg.mxu0
    %1629 = vrot.lane.b32.xlu0 %v391, 40
    %v1630 = vpop.permute.xlu0 %1629
    %v1633 = vsel %vm399, %v1561, 0
    %1635 = vmatpush.msra.mxu0 0.0
    %1636 = vmatpush.msra.mxu0 0.0
    %1637 = vmatpush.msra.mxu0 0.0
    %1638 = vmatpush.msra.mxu0 0.0
    %1639 = vmatpush.msra.mxu0 0.0
    %1640 = vmatpush.msra.mxu0 0.0
    %1641 = vmatpush.msra.mxu0 0.0
    %1642 = vmatpush.msra.mxu0 0.0
    %1643 = vmatpush.msra.mxu0 0.0
    %1644 = vmatpush.msra.mxu0 0.0
    %1645 = vmatpush.msra.mxu0 0.0
    %1646 = vmatpush.msra.mxu0 0.0
    %1647 = vmatpush.msra.mxu0 0.0
    %1648 = vmatpush.msra.mxu0 0.0
    %1649 = vmatpush.msra.mxu0 0.0
    %1650 = vmatpush.msra.mxu0 %v1630
    %1651 = vmatmul.f32.gmra.mxu0 %v1633
    %v1652 = vpop.f32.mrf.mxu0
    %v1653 = vadd.f32 0.0, %v1652
    %1654 = vdwg.mxu0
    %1655 = vrot.lane.b32.xlu0 %v394, 40
    %v1656 = vpop.permute.xlu0 %1655
    %v1659 = vsel %vm399, %v1576, 0
    %1661 = vmatpush.msra.mxu0 0.0
    %1662 = vmatpush.msra.mxu0 0.0
    %1663 = vmatpush.msra.mxu0 0.0
    %1664 = vmatpush.msra.mxu0 0.0
    %1665 = vmatpush.msra.mxu0 0.0
    %1666 = vmatpush.msra.mxu0 0.0
    %1667 = vmatpush.msra.mxu0 0.0
    %1668 = vmatpush.msra.mxu0 0.0
    %1669 = vmatpush.msra.mxu0 0.0
    %1670 = vmatpush.msra.mxu0 0.0
    %1671 = vmatpush.msra.mxu0 0.0
    %1672 = vmatpush.msra.mxu0 0.0
    %1673 = vmatpush.msra.mxu0 0.0
    %1674 = vmatpush.msra.mxu0 0.0
    %1675 = vmatpush.msra.mxu0 0.0
    %1676 = vmatpush.msra.mxu0 %v1656
    %1677 = vmatmul.f32.gmra.mxu0 %v1659
    %v1678 = vpop.f32.mrf.mxu0
    %v1679 = vadd.f32 0.0, %v1678
    %1680 = vdwg.mxu0
    %1685 = vrot.lane.b32.xlu0 %v961, 8
    %v1686 = vpop.permute.xlu0 %1685
    %1687 = vrot.lane.b32.xlu0 %v987, 8
    %v1688 = vpop.permute.xlu0 %1687
    %1689 = vrot.lane.b32.xlu0 %v1013, 8
    %v1690 = vpop.permute.xlu0 %1689
    %1691 = vrot.lane.b32.xlu0 %v1039, 8
    %v1692 = vpop.permute.xlu0 %1691
    %1701 = vrot.lane.b32.xlu0 %v1281, 16
    %v1702 = vpop.permute.xlu0 %1701
    %1703 = vrot.lane.b32.xlu0 %v1307, 16
    %v1704 = vpop.permute.xlu0 %1703
    %1705 = vrot.lane.b32.xlu0 %v1333, 16
    %v1706 = vpop.permute.xlu0 %1705
    %1707 = vrot.lane.b32.xlu0 %v1359, 16
    %v1708 = vpop.permute.xlu0 %1707
    %1717 = vrot.lane.b32.xlu0 %v1601, 24
    %v1718 = vpop.permute.xlu0 %1717
    %1719 = vrot.lane.b32.xlu0 %v1627, 24
    %v1720 = vpop.permute.xlu0 %1719
    %1721 = vrot.lane.b32.xlu0 %v1653, 24
    %v1722 = vpop.permute.xlu0 %1721
    %1723 = vrot.lane.b32.xlu0 %v1679, 24
    %v1724 = vpop.permute.xlu0 %1723
    %v1729 = vsel %vm399, %v641, %v1686
    %v1730 = vsel %vm399, %v667, %v1688
    %v1731 = vsel %vm399, %v693, %v1690
    %v1732 = vsel %vm399, %v719, %v1692
    %vm1733 = vcmask 130048
    %v1734 = vsel %vm1733, %v1729, %v1702
    %v1735 = vsel %vm1733, %v1730, %v1704
    %v1736 = vsel %vm1733, %v1731, %v1706
    %v1737 = vsel %vm1733, %v1732, %v1708
    %vm1738 = vcmask 195584
    %v1739 = vsel %vm1738, %v1734, %v1718
    %v1740 = vsel %vm1738, %v1735, %v1720
    %v1741 = vsel %vm1738, %v1736, %v1722
    %v1742 = vsel %vm1738, %v1737, %v1724
    %v1743 = vld [vmem:[%s10] sm:$0xff]
    %v1744 = vld [vmem:[%s10 + $0x8] sm:$0xff]
    %v1745 = vld [vmem:[%s10 + $0x10] sm:$0xff]
    %v1746 = vld [vmem:[%s10 + $0x18] sm:$0xff]
    %v1747 = vld [vmem:[%s11] sm:$0x1]
    %v1749 = vperm.slane %v1747, 0
    %v1752 = vsel %vm230, %v1739, 0
    %v1755 = vsel %vm230, %v1740, 0
    %v1758 = vsel %vm230, %v1741, 0
    %v1761 = vsel %vm230, %v1742, 0
    %1763 = vmatpush.msra.mxu0 0.0
    %1764 = vmatpush.msra.mxu0 0.0
    %1765 = vmatpush.msra.mxu0 0.0
    %1766 = vmatpush.msra.mxu0 0.0
    %1767 = vmatpush.msra.mxu0 0.0
    %1768 = vmatpush.msra.mxu0 0.0
    %1769 = vmatpush.msra.mxu0 0.0
    %1770 = vmatpush.msra.mxu0 0.0
    %1771 = vmatpush.msra.mxu0 0.0
    %1772 = vmatpush.msra.mxu0 0.0
    %1773 = vmatpush.msra.mxu0 0.0
    %1774 = vmatpush.msra.mxu0 0.0
    %1775 = vmatpush.msra.mxu0 %v1746
    %1776 = vmatpush.msra.mxu0 %v1745
    %1777 = vmatpush.msra.mxu0 %v1744
    %1778 = vmatpush.msra.mxu0 %v1743
    %1779 = vmatmul.f32.gmra.mxu0 %v1752
    %v1780 = vpop.f32.mrf.mxu0
    %v1781 = vadd.f32 %v1749, %v1780
    %1782 = vmatmul.f32.gmra.mxu0 %v1755
    %v1783 = vpop.f32.mrf.mxu0
    %v1784 = vadd.f32 %v1749, %v1783
    %1785 = vmatmul.f32.gmra.mxu0 %v1758
    %v1786 = vpop.f32.mrf.mxu0
    %v1787 = vadd.f32 %v1749, %v1786
    %1788 = vmatmul.f32.gmra.mxu0 %v1761
    %v1789 = vpop.f32.mrf.mxu0
    %v1790 = vadd.f32 %v1749, %v1789
    %1791 = vdwg.mxu0
    %v1792 = vadd.f32 %v336, %v1781
    %v1793 = vadd.f32 %v337, %v1784
    %v1794 = vadd.f32 %v338, %v1787
    %v1795 = vadd.f32 %v339, %v1790
    %v1796 = vld [vmem:[%s12] sm:$0x1]
    %v1797 = vld [vmem:[%s13] sm:$0x1]
    %v1798 = vsel %vm230, %v1792, 0.0
    %1799 = vadd.xlane.f32.xlu0 %v1798
    %v1800 = vpop.xlane.xlu0 %1799
    %v1801 = vsel %vm230, %v1793, 0.0
    %1802 = vadd.xlane.f32.xlu0 %v1801
    %v1803 = vpop.xlane.xlu0 %1802
    %v1804 = vsel %vm230, %v1794, 0.0
    %1805 = vadd.xlane.f32.xlu0 %v1804
    %v1806 = vpop.xlane.xlu0 %1805
    %v1807 = vsel %vm230, %v1795, 0.0
    %1808 = vadd.xlane.f32.xlu0 %v1807
    %v1809 = vpop.xlane.xlu0 %1808
    %v1810 = vmul.f32 %v1800, %v249
    %v1811 = vmul.f32 %v1803, %v249
    %v1812 = vmul.f32 %v1806, %v249
    %v1813 = vmul.f32 %v1809, %v249
    %v1814 = vsub.f32 %v1792, %v1810
    %v1815 = vsub.f32 %v1793, %v1811
    %v1816 = vsub.f32 %v1794, %v1812
    %v1817 = vsub.f32 %v1795, %v1813
    %v1818 = vmul.f32 %v1814, %v1814
    %v1819 = vmul.f32 %v1815, %v1815
    %v1820 = vmul.f32 %v1816, %v1816
    %v1821 = vmul.f32 %v1817, %v1817
    %v1822 = vsel %vm230, %v1818, 0.0
    %1823 = vadd.xlane.f32.xlu0 %v1822
    %v1824 = vpop.xlane.xlu0 %1823
    %v1825 = vsel %vm230, %v1819, 0.0
    %1826 = vadd.xlane.f32.xlu0 %v1825
    %v1827 = vpop.xlane.xlu0 %1826
    %v1828 = vsel %vm230, %v1820, 0.0
    %1829 = vadd.xlane.f32.xlu0 %v1828
    %v1830 = vpop.xlane.xlu0 %1829
    %v1831 = vsel %vm230, %v1821, 0.0
    %1832 = vadd.xlane.f32.xlu0 %v1831
    %v1833 = vpop.xlane.xlu0 %1832
    %v1834 = vmul.f32 %v1824, %v249
    %v1835 = vmul.f32 %v1827, %v249
    %v1836 = vmul.f32 %v1830, %v249
    %v1837 = vmul.f32 %v1833, %v249
    %v1838 = vadd.f32 %v1834, 1e-12
    %v1839 = vadd.f32 %v1835, 1e-12
    %v1840 = vadd.f32 %v1836, 1e-12
    %v1841 = vadd.f32 %v1837, 1e-12
    %v1842 = vrsqrt.pop %v1838
    %v1843 = vmul.f32 %v1842, %v1838
    %v1844 = vmul.f32 %v1843, %v1842
    %v1845 = vmul.f32 0.5, %v1844
    %v1846 = vsub.f32 1.5, %v1845
    %v1847 = vmul.f32 %v1842, %v1846
    %vm1848 = vweird.f32 %v1838
    %vm1849 = vweird.f32 %v1842
    %vm1850 = vmor %vm1848, %vm1849
    %v1851 = vsel %vm1850, %v1842, %v1847
    %v1852 = vrsqrt.pop %v1839
    %v1853 = vmul.f32 %v1852, %v1839
    %v1854 = vmul.f32 %v1853, %v1852
    %v1855 = vmul.f32 0.5, %v1854
    %v1856 = vsub.f32 1.5, %v1855
    %v1857 = vmul.f32 %v1852, %v1856
    %vm1858 = vweird.f32 %v1839
    %vm1859 = vweird.f32 %v1852
    %vm1860 = vmor %vm1858, %vm1859
    %v1861 = vsel %vm1860, %v1852, %v1857
    %v1862 = vrsqrt.pop %v1840
    %v1863 = vmul.f32 %v1862, %v1840
    %v1864 = vmul.f32 %v1863, %v1862
    %v1865 = vmul.f32 0.5, %v1864
    %v1866 = vsub.f32 1.5, %v1865
    %v1867 = vmul.f32 %v1862, %v1866
    %vm1868 = vweird.f32 %v1840
    %vm1869 = vweird.f32 %v1862
    %vm1870 = vmor %vm1868, %vm1869
    %v1871 = vsel %vm1870, %v1862, %v1867
    %v1872 = vrsqrt.pop %v1841
    %v1873 = vmul.f32 %v1872, %v1841
    %v1874 = vmul.f32 %v1873, %v1872
    %v1875 = vmul.f32 0.5, %v1874
    %v1876 = vsub.f32 1.5, %v1875
    %v1877 = vmul.f32 %v1872, %v1876
    %vm1878 = vweird.f32 %v1841
    %vm1879 = vweird.f32 %v1872
    %vm1880 = vmor %vm1878, %vm1879
    %v1881 = vsel %vm1880, %v1872, %v1877
    %v1882 = vmul.f32 %v1814, %v1851
    %v1883 = vmul.f32 %v1815, %v1861
    %v1884 = vmul.f32 %v1816, %v1871
    %v1885 = vmul.f32 %v1817, %v1881
    %v1887 = vperm.slane %v1796, 0
    %v1889 = vmul.f32 %v1882, %v1887
    %v1890 = vmul.f32 %v1883, %v1887
    %v1891 = vmul.f32 %v1884, %v1887
    %v1892 = vmul.f32 %v1885, %v1887
    %v1894 = vperm.slane %v1797, 0
    %v1896 = vadd.f32 %v1889, %v1894
    %v1897 = vadd.f32 %v1890, %v1894
    %v1898 = vadd.f32 %v1891, %v1894
    %v1899 = vadd.f32 %v1892, %v1894
    %v1900 = vld [vmem:[%s14] sm:$0xff]
    %v1901 = vld [vmem:[%s14 + $0x8] sm:$0xff]
    %v1902 = vld [vmem:[%s14 + $0x10] sm:$0xff]
    %v1903 = vld [vmem:[%s14 + $0x18] sm:$0xff]
    %v1904 = vld [vmem:[%s15] sm:$0x1]
    %v1906 = vperm.slane %v1904, 0
    %v1909 = vsel %vm230, %v1896, 0
    %v1912 = vsel %vm230, %v1897, 0
    %v1915 = vsel %vm230, %v1898, 0
    %v1918 = vsel %vm230, %v1899, 0
    %1920 = vmatpush.msra.mxu0 0.0
    %1921 = vmatpush.msra.mxu0 0.0
    %1922 = vmatpush.msra.mxu0 0.0
    %1923 = vmatpush.msra.mxu0 0.0
    %1924 = vmatpush.msra.mxu0 0.0
    %1925 = vmatpush.msra.mxu0 0.0
    %1926 = vmatpush.msra.mxu0 0.0
    %1927 = vmatpush.msra.mxu0 0.0
    %1928 = vmatpush.msra.mxu0 0.0
    %1929 = vmatpush.msra.mxu0 0.0
    %1930 = vmatpush.msra.mxu0 0.0
    %1931 = vmatpush.msra.mxu0 0.0
    %1932 = vmatpush.msra.mxu0 %v1903
    %1933 = vmatpush.msra.mxu0 %v1902
    %1934 = vmatpush.msra.mxu0 %v1901
    %1935 = vmatpush.msra.mxu0 %v1900
    %1936 = vmatmul.f32.gmra.mxu0 %v1909
    %v1937 = vpop.f32.mrf.mxu0
    %v1938 = vadd.f32 %v1906, %v1937
    %1939 = vmatmul.f32.gmra.mxu0 %v1912
    %v1940 = vpop.f32.mrf.mxu0
    %v1941 = vadd.f32 %v1906, %v1940
    %1942 = vmatmul.f32.gmra.mxu0 %v1915
    %v1943 = vpop.f32.mrf.mxu0
    %v1944 = vadd.f32 %v1906, %v1943
    %1945 = vmatmul.f32.gmra.mxu0 %v1918
    %v1946 = vpop.f32.mrf.mxu0
    %v1947 = vadd.f32 %v1906, %v1946
    %1948 = vdwg.mxu0
    %v1949 = vmul.f32 %v1938, %v1938
    %v1950 = vmul.f32 %v1941, %v1941
    %v1951 = vmul.f32 %v1944, %v1944
    %v1952 = vmul.f32 %v1947, %v1947
    %v1953 = vmul.f32 %v1938, %v1949
    %v1954 = vmul.f32 %v1941, %v1950
    %v1955 = vmul.f32 %v1944, %v1951
    %v1956 = vmul.f32 %v1947, %v1952
    %v1957 = vmul.f32 %v1953, 0.044715
    %v1958 = vmul.f32 %v1954, 0.044715
    %v1959 = vmul.f32 %v1955, 0.044715
    %v1960 = vmul.f32 %v1956, 0.044715
    %v1961 = vadd.f32 %v1938, %v1957
    %v1962 = vadd.f32 %v1941, %v1958
    %v1963 = vadd.f32 %v1944, %v1959
    %v1964 = vadd.f32 %v1947, %v1960
    %v1965 = vmul.f32 %v1961, 0.7978846
    %v1966 = vmul.f32 %v1962, 0.7978846
    %v1967 = vmul.f32 %v1963, 0.7978846
    %v1968 = vmul.f32 %v1964, 0.7978846
    %v1969 = vtanh.pop %v1965
    %v1970 = vtanh.pop %v1966
    %v1971 = vtanh.pop %v1967
    %v1972 = vtanh.pop %v1968
    %v1973 = vadd.f32 %v1969, 1.0
    %v1974 = vadd.f32 %v1970, 1.0
    %v1975 = vadd.f32 %v1971, 1.0
    %v1976 = vadd.f32 %v1972, 1.0
    %v1977 = vmul.f32 %v1973, 0.5
    %v1978 = vmul.f32 %v1974, 0.5
    %v1979 = vmul.f32 %v1975, 0.5
    %v1980 = vmul.f32 %v1976, 0.5
    %v1981 = vmul.f32 %v1938, %v1977
    %v1982 = vmul.f32 %v1941, %v1978
    %v1983 = vmul.f32 %v1944, %v1979
    %v1984 = vmul.f32 %v1947, %v1980
    %v1985 = vld [vmem:[%s16] sm:$0xff]
    %v1986 = vld [vmem:[%s16 + $0x8] sm:$0xff]
    %v1987 = vld [vmem:[%s16 + $0x10] sm:$0xff]
    %v1988 = vld [vmem:[%s16 + $0x18] sm:$0xff]
    %v1989 = vld [vmem:[%s16 + $0x20] sm:$0xff]
    %v1990 = vld [vmem:[%s16 + $0x28] sm:$0xff]
    %v1991 = vld [vmem:[%s16 + $0x30] sm:$0xff]
    %v1992 = vld [vmem:[%s16 + $0x38] sm:$0xff]
    %v1993 = vld [vmem:[%s17] sm:$0x1]
    %v1995 = vperm.slane %v1993, 0
    %vm1997 = vcmask 523264
    %v1999 = vsel %vm1997, %v1981, 0
    %v2002 = vsel %vm1997, %v1982, 0
    %v2005 = vsel %vm1997, %v1983, 0
    %v2008 = vsel %vm1997, %v1984, 0
    %2010 = vmatpush.msra.mxu0 0.0
    %2011 = vmatpush.msra.mxu0 0.0
    %2012 = vmatpush.msra.mxu0 0.0
    %2013 = vmatpush.msra.mxu0 0.0
    %2014 = vmatpush.msra.mxu0 0.0
    %2015 = vmatpush.msra.mxu0 0.0
    %2016 = vmatpush.msra.mxu0 0.0
    %2017 = vmatpush.msra.mxu0 0.0
    %2018 = vmatpush.msra.mxu0 %v1992
    %2019 = vmatpush.msra.mxu0 %v1991
    %2020 = vmatpush.msra.mxu0 %v1990
    %2021 = vmatpush.msra.mxu0 %v1989
    %2022 = vmatpush.msra.mxu0 %v1988
    %2023 = vmatpush.msra.mxu0 %v1987
    %2024 = vmatpush.msra.mxu0 %v1986
    %2025 = vmatpush.msra.mxu0 %v1985
    %2026 = vmatmul.f32.gmra.mxu0 %v1999
    %v2027 = vpop.f32.mrf.mxu0
    %v2028 = vadd.f32 %v1995, %v2027
    %2029 = vmatmul.f32.gmra.mxu0 %v2002
    %v2030 = vpop.f32.mrf.mxu0
    %v2031 = vadd.f32 %v1995, %v2030
    %2032 = vmatmul.f32.gmra.mxu0 %v2005
    %v2033 = vpop.f32.mrf.mxu0
    %v2034 = vadd.f32 %v1995, %v2033
    %2035 = vmatmul.f32.gmra.mxu0 %v2008
    %v2036 = vpop.f32.mrf.mxu0
    %v2037 = vadd.f32 %v1995, %v2036
    %2038 = vdwg.mxu0
    %v2039 = vadd.f32 %v1896, %v2028
    %v2040 = vadd.f32 %v1897, %v2031
    %v2041 = vadd.f32 %v1898, %v2034
    %v2042 = vadd.f32 %v1899, %v2037
    %v2043 = vld [vmem:[%s18] sm:$0x1]
    %v2044 = vld [vmem:[%s19] sm:$0x1]
    %v2045 = vsel %vm230, %v2039, 0.0
    %2046 = vadd.xlane.f32.xlu0 %v2045
    %v2047 = vpop.xlane.xlu0 %2046
    %v2048 = vsel %vm230, %v2040, 0.0
    %2049 = vadd.xlane.f32.xlu0 %v2048
    %v2050 = vpop.xlane.xlu0 %2049
    %v2051 = vsel %vm230, %v2041, 0.0
    %2052 = vadd.xlane.f32.xlu0 %v2051
    %v2053 = vpop.xlane.xlu0 %2052
    %v2054 = vsel %vm230, %v2042, 0.0
    %2055 = vadd.xlane.f32.xlu0 %v2054
    %v2056 = vpop.xlane.xlu0 %2055
    %v2057 = vmul.f32 %v2047, %v249
    %v2058 = vmul.f32 %v2050, %v249
    %v2059 = vmul.f32 %v2053, %v249
    %v2060 = vmul.f32 %v2056, %v249
    %v2061 = vsub.f32 %v2039, %v2057
    %v2062 = vsub.f32 %v2040, %v2058
    %v2063 = vsub.f32 %v2041, %v2059
    %v2064 = vsub.f32 %v2042, %v2060
    %v2065 = vmul.f32 %v2061, %v2061
    %v2066 = vmul.f32 %v2062, %v2062
    %v2067 = vmul.f32 %v2063, %v2063
    %v2068 = vmul.f32 %v2064, %v2064
    %v2069 = vsel %vm230, %v2065, 0.0
    %2070 = vadd.xlane.f32.xlu0 %v2069
    %v2071 = vpop.xlane.xlu0 %2070
    %v2072 = vsel %vm230, %v2066, 0.0
    %2073 = vadd.xlane.f32.xlu0 %v2072
    %v2074 = vpop.xlane.xlu0 %2073
    %v2075 = vsel %vm230, %v2067, 0.0
    %2076 = vadd.xlane.f32.xlu0 %v2075
    %v2077 = vpop.xlane.xlu0 %2076
    %v2078 = vsel %vm230, %v2068, 0.0
    %2079 = vadd.xlane.f32.xlu0 %v2078
    %v2080 = vpop.xlane.xlu0 %2079
    %v2081 = vmul.f32 %v2071, %v249
    %v2082 = vmul.f32 %v2074, %v249
    %v2083 = vmul.f32 %v2077, %v249
    %v2084 = vmul.f32 %v2080, %v249
    %v2085 = vadd.f32 %v2081, 1e-12
    %v2086 = vadd.f32 %v2082, 1e-12
    %v2087 = vadd.f32 %v2083, 1e-12
    %v2088 = vadd.f32 %v2084, 1e-12
    %v2089 = vrsqrt.pop %v2085
    %v2090 = vmul.f32 %v2089, %v2085
    %v2091 = vmul.f32 %v2090, %v2089
    %v2092 = vmul.f32 0.5, %v2091
    %v2093 = vsub.f32 1.5, %v2092
    %v2094 = vmul.f32 %v2089, %v2093
    %vm2095 = vweird.f32 %v2085
    %vm2096 = vweird.f32 %v2089
    %vm2097 = vmor %vm2095, %vm2096
    %v2098 = vsel %vm2097, %v2089, %v2094
    %v2099 = vrsqrt.pop %v2086
    %v2100 = vmul.f32 %v2099, %v2086
    %v2101 = vmul.f32 %v2100, %v2099
    %v2102 = vmul.f32 0.5, %v2101
    %v2103 = vsub.f32 1.5, %v2102
    %v2104 = vmul.f32 %v2099, %v2103
    %vm2105 = vweird.f32 %v2086
    %vm2106 = vweird.f32 %v2099
    %vm2107 = vmor %vm2105, %vm2106
    %v2108 = vsel %vm2107, %v2099, %v2104
    %v2109 = vrsqrt.pop %v2087
    %v2110 = vmul.f32 %v2109, %v2087
    %v2111 = vmul.f32 %v2110, %v2109
    %v2112 = vmul.f32 0.5, %v2111
    %v2113 = vsub.f32 1.5, %v2112
    %v2114 = vmul.f32 %v2109, %v2113
    %vm2115 = vweird.f32 %v2087
    %vm2116 = vweird.f32 %v2109
    %vm2117 = vmor %vm2115, %vm2116
    %v2118 = vsel %vm2117, %v2109, %v2114
    %v2119 = vrsqrt.pop %v2088
    %v2120 = vmul.f32 %v2119, %v2088
    %v2121 = vmul.f32 %v2120, %v2119
    %v2122 = vmul.f32 0.5, %v2121
    %v2123 = vsub.f32 1.5, %v2122
    %v2124 = vmul.f32 %v2119, %v2123
    %vm2125 = vweird.f32 %v2088
    %vm2126 = vweird.f32 %v2119
    %vm2127 = vmor %vm2125, %vm2126
    %v2128 = vsel %vm2127, %v2119, %v2124
    %v2129 = vmul.f32 %v2061, %v2098
    %v2130 = vmul.f32 %v2062, %v2108
    %v2131 = vmul.f32 %v2063, %v2118
    %v2132 = vmul.f32 %v2064, %v2128
    %v2134 = vperm.slane %v2043, 0
    %v2136 = vmul.f32 %v2129, %v2134
    %v2137 = vmul.f32 %v2130, %v2134
    %v2138 = vmul.f32 %v2131, %v2134
    %v2139 = vmul.f32 %v2132, %v2134
    %v2141 = vperm.slane %v2044, 0
    %v2143 = vadd.f32 %v2136, %v2141
    %v2144 = vadd.f32 %v2137, %v2141
    %v2145 = vadd.f32 %v2138, %v2141
    %v2146 = vadd.f32 %v2139, %v2141
    %s2147 = scalar_lea.vmem %s8, 32
    %v2148 = vld [vmem:[%s2147] sm:$0xff]
    %v2149 = vld [vmem:[%s2147 + $0x8] sm:$0xff]
    %v2150 = vld [vmem:[%s2147 + $0x10] sm:$0xff]
    %v2151 = vld [vmem:[%s2147 + $0x18] sm:$0xff]
    %s2152 = scalar_lea.vmem %s9, 1
    %v2153 = vld [vmem:[%s2152] sm:$0x1]
    %v2155 = vperm.slane %v2153, 0
    %v2158 = vsel %vm230, %v2143, 0
    %v2161 = vsel %vm230, %v2144, 0
    %v2164 = vsel %vm230, %v2145, 0
    %v2167 = vsel %vm230, %v2146, 0
    %2169 = vmatpush.msra.mxu0 0.0
    %2170 = vmatpush.msra.mxu0 0.0
    %2171 = vmatpush.msra.mxu0 0.0
    %2172 = vmatpush.msra.mxu0 0.0
    %2173 = vmatpush.msra.mxu0 0.0
    %2174 = vmatpush.msra.mxu0 0.0
    %2175 = vmatpush.msra.mxu0 0.0
    %2176 = vmatpush.msra.mxu0 0.0
    %2177 = vmatpush.msra.mxu0 0.0
    %2178 = vmatpush.msra.mxu0 0.0
    %2179 = vmatpush.msra.mxu0 0.0
    %2180 = vmatpush.msra.mxu0 0.0
    %2181 = vmatpush.msra.mxu0 %v2151
    %2182 = vmatpush.msra.mxu0 %v2150
    %2183 = vmatpush.msra.mxu0 %v2149
    %2184 = vmatpush.msra.mxu0 %v2148
    %2185 = vmatmul.f32.gmra.mxu0 %v2158
    %v2186 = vpop.f32.mrf.mxu0
    %v2187 = vadd.f32 %v2155, %v2186
    %2188 = vmatmul.f32.gmra.mxu0 %v2161
    %v2189 = vpop.f32.mrf.mxu0
    %v2190 = vadd.f32 %v2155, %v2189
    %2191 = vmatmul.f32.gmra.mxu0 %v2164
    %v2192 = vpop.f32.mrf.mxu0
    %v2193 = vadd.f32 %v2155, %v2192
    %2194 = vmatmul.f32.gmra.mxu0 %v2167
    %v2195 = vpop.f32.mrf.mxu0
    %v2196 = vadd.f32 %v2155, %v2195
    %2197 = vdwg.mxu0
    %2199 = vrot.lane.b32.xlu0 %v2187, 96
    %v2200 = vpop.permute.xlu0 %2199
    %v2201 = vsel %vm399, %v2187, 0
    %v2203 = vsel %vm399, %v2200, 0
    %2205 = vmatpush.xpose.msra.mxu0 0.0
    %2206 = vmatpush.xpose.msra.mxu0 0.0
    %2207 = vmatpush.xpose.msra.mxu0 0.0
    %2208 = vmatpush.xpose.msra.mxu0 0.0
    %2209 = vmatpush.xpose.msra.mxu0 0.0
    %2210 = vmatpush.xpose.msra.mxu0 0.0
    %2211 = vmatpush.xpose.msra.mxu0 0.0
    %2212 = vmatpush.xpose.msra.mxu0 0.0
    %2213 = vmatpush.xpose.msra.mxu0 0.0
    %2214 = vmatpush.xpose.msra.mxu0 0.0
    %2215 = vmatpush.xpose.msra.mxu0 0.0
    %2216 = vmatpush.xpose.msra.mxu0 0.0
    %2217 = vmatpush.xpose.msra.mxu0 0.0
    %2218 = vmatpush.xpose.msra.mxu0 0.0
    %2219 = vmatpush.xpose.msra.mxu0 0.0
    %2220 = vmatpush.xpose.msra.mxu0 %v2203
    %2221 = vmatmul.f32.gmra.mxu0 %v2201
    %v2222 = vpop.f32.mrf.mxu0
    %v2223 = vadd.f32 0.0, %v2222
    %2224 = vdwg.mxu0
    %2226 = vrot.lane.b32.xlu0 %v2190, 96
    %v2227 = vpop.permute.xlu0 %2226
    %v2228 = vsel %vm399, %v2190, 0
    %v2230 = vsel %vm399, %v2227, 0
    %2232 = vmatpush.xpose.msra.mxu0 0.0
    %2233 = vmatpush.xpose.msra.mxu0 0.0
    %2234 = vmatpush.xpose.msra.mxu0 0.0
    %2235 = vmatpush.xpose.msra.mxu0 0.0
    %2236 = vmatpush.xpose.msra.mxu0 0.0
    %2237 = vmatpush.xpose.msra.mxu0 0.0
    %2238 = vmatpush.xpose.msra.mxu0 0.0
    %2239 = vmatpush.xpose.msra.mxu0 0.0
    %2240 = vmatpush.xpose.msra.mxu0 0.0
    %2241 = vmatpush.xpose.msra.mxu0 0.0
    %2242 = vmatpush.xpose.msra.mxu0 0.0
    %2243 = vmatpush.xpose.msra.mxu0 0.0
    %2244 = vmatpush.xpose.msra.mxu0 0.0
    %2245 = vmatpush.xpose.msra.mxu0 0.0
    %2246 = vmatpush.xpose.msra.mxu0 0.0
    %2247 = vmatpush.xpose.msra.mxu0 %v2230
    %2248 = vmatmul.f32.gmra.mxu0 %v2228
    %v2249 = vpop.f32.mrf.mxu0
    %v2250 = vadd.f32 0.0, %v2249
    %2251 = vdwg.mxu0
    %2253 = vrot.lane.b32.xlu0 %v2193, 96
    %v2254 = vpop.permute.xlu0 %2253
    %v2255 = vsel %vm399, %v2193, 0
    %v2257 = vsel %vm399, %v2254, 0
    %2259 = vmatpush.xpose.msra.mxu0 0.0
    %2260 = vmatpush.xpose.msra.mxu0 0.0
    %2261 = vmatpush.xpose.msra.mxu0 0.0
    %2262 = vmatpush.xpose.msra.mxu0 0.0
    %2263 = vmatpush.xpose.msra.mxu0 0.0
    %2264 = vmatpush.xpose.msra.mxu0 0.0
    %2265 = vmatpush.xpose.msra.mxu0 0.0
    %2266 = vmatpush.xpose.msra.mxu0 0.0
    %2267 = vmatpush.xpose.msra.mxu0 0.0
    %2268 = vmatpush.xpose.msra.mxu0 0.0
    %2269 = vmatpush.xpose.msra.mxu0 0.0
    %2270 = vmatpush.xpose.msra.mxu0 0.0
    %2271 = vmatpush.xpose.msra.mxu0 0.0
    %2272 = vmatpush.xpose.msra.mxu0 0.0
    %2273 = vmatpush.xpose.msra.mxu0 0.0
    %2274 = vmatpush.xpose.msra.mxu0 %v2257
    %2275 = vmatmul.f32.gmra.mxu0 %v2255
    %v2276 = vpop.f32.mrf.mxu0
    %v2277 = vadd.f32 0.0, %v2276
    %2278 = vdwg.mxu0
    %2280 = vrot.lane.b32.xlu0 %v2196, 96
    %v2281 = vpop.permute.xlu0 %2280
    %v2282 = vsel %vm399, %v2196, 0
    %v2284 = vsel %vm399, %v2281, 0
    %2286 = vmatpush.xpose.msra.mxu0 0.0
    %2287 = vmatpush.xpose.msra.mxu0 0.0
    %2288 = vmatpush.xpose.msra.mxu0 0.0
    %2289 = vmatpush.xpose.msra.mxu0 0.0
    %2290 = vmatpush.xpose.msra.mxu0 0.0
    %2291 = vmatpush.xpose.msra.mxu0 0.0
    %2292 = vmatpush.xpose.msra.mxu0 0.0
    %2293 = vmatpush.xpose.msra.mxu0 0.0
    %2294 = vmatpush.xpose.msra.mxu0 0.0
    %2295 = vmatpush.xpose.msra.mxu0 0.0
    %2296 = vmatpush.xpose.msra.mxu0 0.0
    %2297 = vmatpush.xpose.msra.mxu0 0.0
    %2298 = vmatpush.xpose.msra.mxu0 0.0
    %2299 = vmatpush.xpose.msra.mxu0 0.0
    %2300 = vmatpush.xpose.msra.mxu0 0.0
    %2301 = vmatpush.xpose.msra.mxu0 %v2284
    %2302 = vmatmul.f32.gmra.mxu0 %v2282
    %v2303 = vpop.f32.mrf.mxu0
    %v2304 = vadd.f32 0.0, %v2303
    %2305 = vdwg.mxu0
    %v2306 = vmul.f32 %v2223, 0.35355338
    %v2307 = vmul.f32 %v2250, 0.35355338
    %v2308 = vmul.f32 %v2277, 0.35355338
    %v2309 = vmul.f32 %v2304, 0.35355338
    %v2310 = vadd.f32 %v2306, %v509
    %v2311 = vadd.f32 %v2307, %v510
    %v2312 = vadd.f32 %v2308, %v511
    %v2313 = vadd.f32 %v2309, %v512
    %v2314 = vsel %vm399, %v2310, -inf
    %2315 = vmax.xlane.f32.xlu0 %v2314
    %v2316 = vpop.xlane.xlu0 %2315
    %v2317 = vsel %vm399, %v2311, -inf
    %2318 = vmax.xlane.f32.xlu0 %v2317
    %v2319 = vpop.xlane.xlu0 %2318
    %v2320 = vsel %vm399, %v2312, -inf
    %2321 = vmax.xlane.f32.xlu0 %v2320
    %v2322 = vpop.xlane.xlu0 %2321
    %v2323 = vsel %vm399, %v2313, -inf
    %2324 = vmax.xlane.f32.xlu0 %v2323
    %v2325 = vpop.xlane.xlu0 %2324
    %v2326 = vsub.f32 %v2310, %v2316
    %v2327 = vsub.f32 %v2311, %v2319
    %v2328 = vsub.f32 %v2312, %v2322
    %v2329 = vsub.f32 %v2313, %v2325
    %v2330 = vmul.f32 %v2326, 1.442695
    %v2331 = vpow.pop %v2330
    %v2332 = vmul.f32 %v2327, 1.442695
    %v2333 = vpow.pop %v2332
    %v2334 = vmul.f32 %v2328, 1.442695
    %v2335 = vpow.pop %v2334
    %v2336 = vmul.f32 %v2329, 1.442695
    %v2337 = vpow.pop %v2336
    %v2338 = vsel %vm399, %v2331, 0.0
    %2339 = vadd.xlane.f32.xlu0 %v2338
    %v2340 = vpop.xlane.xlu0 %2339
    %v2341 = vsel %vm399, %v2333, 0.0
    %2342 = vadd.xlane.f32.xlu0 %v2341
    %v2343 = vpop.xlane.xlu0 %2342
    %v2344 = vsel %vm399, %v2335, 0.0
    %2345 = vadd.xlane.f32.xlu0 %v2344
    %v2346 = vpop.xlane.xlu0 %2345
    %v2347 = vsel %vm399, %v2337, 0.0
    %2348 = vadd.xlane.f32.xlu0 %v2347
    %v2349 = vpop.xlane.xlu0 %2348
    %v2350 = vrcp.pop %v2340
    %v2351 = vmul.f32 %v2340, %v2350
    %v2352 = vsub.f32 1.0, %v2351
    %v2353 = vmul.f32 %v2350, %v2352
    %v2354 = vadd.f32 %v2350, %v2353
    %vm2355 = vweird.f32 %v2340
    %vm2356 = vweird.f32 %v2350
    %vm2357 = vmor %vm2355, %vm2356
    %v2358 = vsel %vm2357, %v2350, %v2354
    %v2359 = vand.u32 2147483647, %v2340
    %vm2360 = vcmp.eq.f32.partialorder %v2359, 8.507059e+37
    %v2361 = vand.u32 %v2340, 2147483648
    %v2362 = vor.u32 1.1754944e-38, %v2361
    %v2363 = vsel %vm2360, %v2362, %v2358
    %v2364 = vmul.f32 %v2331, %v2363
    %v2365 = vrcp.pop %v2343
    %v2366 = vmul.f32 %v2343, %v2365
    %v2367 = vsub.f32 1.0, %v2366
    %v2368 = vmul.f32 %v2365, %v2367
    %v2369 = vadd.f32 %v2365, %v2368
    %vm2370 = vweird.f32 %v2343
    %vm2371 = vweird.f32 %v2365
    %vm2372 = vmor %vm2370, %vm2371
    %v2373 = vsel %vm2372, %v2365, %v2369
    %v2374 = vand.u32 2147483647, %v2343
    %vm2375 = vcmp.eq.f32.partialorder %v2374, 8.507059e+37
    %v2376 = vand.u32 %v2343, 2147483648
    %v2377 = vor.u32 1.1754944e-38, %v2376
    %v2378 = vsel %vm2375, %v2377, %v2373
    %v2379 = vmul.f32 %v2333, %v2378
    %v2380 = vrcp.pop %v2346
    %v2381 = vmul.f32 %v2346, %v2380
    %v2382 = vsub.f32 1.0, %v2381
    %v2383 = vmul.f32 %v2380, %v2382
    %v2384 = vadd.f32 %v2380, %v2383
    %vm2385 = vweird.f32 %v2346
    %vm2386 = vweird.f32 %v2380
    %vm2387 = vmor %vm2385, %vm2386
    %v2388 = vsel %vm2387, %v2380, %v2384
    %v2389 = vand.u32 2147483647, %v2346
    %vm2390 = vcmp.eq.f32.partialorder %v2389, 8.507059e+37
    %v2391 = vand.u32 %v2346, 2147483648
    %v2392 = vor.u32 1.1754944e-38, %v2391
    %v2393 = vsel %vm2390, %v2392, %v2388
    %v2394 = vmul.f32 %v2335, %v2393
    %v2395 = vrcp.pop %v2349
    %v2396 = vmul.f32 %v2349, %v2395
    %v2397 = vsub.f32 1.0, %v2396
    %v2398 = vmul.f32 %v2395, %v2397
    %v2399 = vadd.f32 %v2395, %v2398
    %vm2400 = vweird.f32 %v2349
    %vm2401 = vweird.f32 %v2395
    %vm2402 = vmor %vm2400, %vm2401
    %v2403 = vsel %vm2402, %v2395, %v2399
    %v2404 = vand.u32 2147483647, %v2349
    %vm2405 = vcmp.eq.f32.partialorder %v2404, 8.507059e+37
    %v2406 = vand.u32 %v2349, 2147483648
    %v2407 = vor.u32 1.1754944e-38, %v2406
    %v2408 = vsel %vm2405, %v2407, %v2403
    %v2409 = vmul.f32 %v2337, %v2408
    %2410 = vrot.lane.b32.xlu0 %v2187, 64
    %v2411 = vpop.permute.xlu0 %2410
    %v2414 = vsel %vm399, %v2364, 0
    %2416 = vmatpush.msra.mxu0 0.0
    %2417 = vmatpush.msra.mxu0 0.0
    %2418 = vmatpush.msra.mxu0 0.0
    %2419 = vmatpush.msra.mxu0 0.0
    %2420 = vmatpush.msra.mxu0 0.0
    %2421 = vmatpush.msra.mxu0 0.0
    %2422 = vmatpush.msra.mxu0 0.0
    %2423 = vmatpush.msra.mxu0 0.0
    %2424 = vmatpush.msra.mxu0 0.0
    %2425 = vmatpush.msra.mxu0 0.0
    %2426 = vmatpush.msra.mxu0 0.0
    %2427 = vmatpush.msra.mxu0 0.0
    %2428 = vmatpush.msra.mxu0 0.0
    %2429 = vmatpush.msra.mxu0 0.0
    %2430 = vmatpush.msra.mxu0 0.0
    %2431 = vmatpush.msra.mxu0 %v2411
    %2432 = vmatmul.f32.gmra.mxu0 %v2414
    %v2433 = vpop.f32.mrf.mxu0
    %v2434 = vadd.f32 0.0, %v2433
    %2435 = vdwg.mxu0
    %2436 = vrot.lane.b32.xlu0 %v2190, 64
    %v2437 = vpop.permute.xlu0 %2436
    %v2440 = vsel %vm399, %v2379, 0
    %2442 = vmatpush.msra.mxu0 0.0
    %2443 = vmatpush.msra.mxu0 0.0
    %2444 = vmatpush.msra.mxu0 0.0
    %2445 = vmatpush.msra.mxu0 0.0
    %2446 = vmatpush.msra.mxu0 0.0
    %2447 = vmatpush.msra.mxu0 0.0
    %2448 = vmatpush.msra.mxu0 0.0
    %2449 = vmatpush.msra.mxu0 0.0
    %2450 = vmatpush.msra.mxu0 0.0
    %2451 = vmatpush.msra.mxu0 0.0
    %2452 = vmatpush.msra.mxu0 0.0
    %2453 = vmatpush.msra.mxu0 0.0
    %2454 = vmatpush.msra.mxu0 0.0
    %2455 = vmatpush.msra.mxu0 0.0
    %2456 = vmatpush.msra.mxu0 0.0
    %2457 = vmatpush.msra.mxu0 %v2437
    %2458 = vmatmul.f32.gmra.mxu0 %v2440
    %v2459 = vpop.f32.mrf.mxu0
    %v2460 = vadd.f32 0.0, %v2459
    %2461 = vdwg.mxu0
    %2462 = vrot.lane.b32.xlu0 %v2193, 64
    %v2463 = vpop.permute.xlu0 %2462
    %v2466 = vsel %vm399, %v2394, 0
    %2468 = vmatpush.msra.mxu0 0.0
    %2469 = vmatpush.msra.mxu0 0.0
    %2470 = vmatpush.msra.mxu0 0.0
    %2471 = vmatpush.msra.mxu0 0.0
    %2472 = vmatpush.msra.mxu0 0.0
    %2473 = vmatpush.msra.mxu0 0.0
    %2474 = vmatpush.msra.mxu0 0.0
    %2475 = vmatpush.msra.mxu0 0.0
    %2476 = vmatpush.msra.mxu0 0.0
    %2477 = vmatpush.msra.mxu0 0.0
    %2478 = vmatpush.msra.mxu0 0.0
    %2479 = vmatpush.msra.mxu0 0.0
    %2480 = vmatpush.msra.mxu0 0.0
    %2481 = vmatpush.msra.mxu0 0.0
    %2482 = vmatpush.msra.mxu0 0.0
    %2483 = vmatpush.msra.mxu0 %v2463
    %2484 = vmatmul.f32.gmra.mxu0 %v2466
    %v2485 = vpop.f32.mrf.mxu0
    %v2486 = vadd.f32 0.0, %v2485
    %2487 = vdwg.mxu0
    %2488 = vrot.lane.b32.xlu0 %v2196, 64
    %v2489 = vpop.permute.xlu0 %2488
    %v2492 = vsel %vm399, %v2409, 0
    %2494 = vmatpush.msra.mxu0 0.0
    %2495 = vmatpush.msra.mxu0 0.0
    %2496 = vmatpush.msra.mxu0 0.0
    %2497 = vmatpush.msra.mxu0 0.0
    %2498 = vmatpush.msra.mxu0 0.0
    %2499 = vmatpush.msra.mxu0 0.0
    %2500 = vmatpush.msra.mxu0 0.0
    %2501 = vmatpush.msra.mxu0 0.0
    %2502 = vmatpush.msra.mxu0 0.0
    %2503 = vmatpush.msra.mxu0 0.0
    %2504 = vmatpush.msra.mxu0 0.0
    %2505 = vmatpush.msra.mxu0 0.0
    %2506 = vmatpush.msra.mxu0 0.0
    %2507 = vmatpush.msra.mxu0 0.0
    %2508 = vmatpush.msra.mxu0 0.0
    %2509 = vmatpush.msra.mxu0 %v2489
    %2510 = vmatmul.f32.gmra.mxu0 %v2492
    %v2511 = vpop.f32.mrf.mxu0
    %v2512 = vadd.f32 0.0, %v2511
    %2513 = vdwg.mxu0
    %2514 = vrot.lane.b32.xlu0 %v2187, 120
    %v2515 = vpop.permute.xlu0 %2514
    %2516 = vrot.lane.b32.xlu0 %v2187, 88
    %v2517 = vpop.permute.xlu0 %2516
    %v2518 = vsel %vm399, %v2515, 0
    %v2520 = vsel %vm399, %v2517, 0
    %2522 = vmatpush.xpose.msra.mxu0 0.0
    %2523 = vmatpush.xpose.msra.mxu0 0.0
    %2524 = vmatpush.xpose.msra.mxu0 0.0
    %2525 = vmatpush.xpose.msra.mxu0 0.0
    %2526 = vmatpush.xpose.msra.mxu0 0.0
    %2527 = vmatpush.xpose.msra.mxu0 0.0
    %2528 = vmatpush.xpose.msra.mxu0 0.0
    %2529 = vmatpush.xpose.msra.mxu0 0.0
    %2530 = vmatpush.xpose.msra.mxu0 0.0
    %2531 = vmatpush.xpose.msra.mxu0 0.0
    %2532 = vmatpush.xpose.msra.mxu0 0.0
    %2533 = vmatpush.xpose.msra.mxu0 0.0
    %2534 = vmatpush.xpose.msra.mxu0 0.0
    %2535 = vmatpush.xpose.msra.mxu0 0.0
    %2536 = vmatpush.xpose.msra.mxu0 0.0
    %2537 = vmatpush.xpose.msra.mxu0 %v2520
    %2538 = vmatmul.f32.gmra.mxu0 %v2518
    %v2539 = vpop.f32.mrf.mxu0
    %v2540 = vadd.f32 0.0, %v2539
    %2541 = vdwg.mxu0
    %2542 = vrot.lane.b32.xlu0 %v2190, 120
    %v2543 = vpop.permute.xlu0 %2542
    %2544 = vrot.lane.b32.xlu0 %v2190, 88
    %v2545 = vpop.permute.xlu0 %2544
    %v2546 = vsel %vm399, %v2543, 0
    %v2548 = vsel %vm399, %v2545, 0
    %2550 = vmatpush.xpose.msra.mxu0 0.0
    %2551 = vmatpush.xpose.msra.mxu0 0.0
    %2552 = vmatpush.xpose.msra.mxu0 0.0
    %2553 = vmatpush.xpose.msra.mxu0 0.0
    %2554 = vmatpush.xpose.msra.mxu0 0.0
    %2555 = vmatpush.xpose.msra.mxu0 0.0
    %2556 = vmatpush.xpose.msra.mxu0 0.0
    %2557 = vmatpush.xpose.msra.mxu0 0.0
    %2558 = vmatpush.xpose.msra.mxu0 0.0
    %2559 = vmatpush.xpose.msra.mxu0 0.0
    %2560 = vmatpush.xpose.msra.mxu0 0.0
    %2561 = vmatpush.xpose.msra.mxu0 0.0
    %2562 = vmatpush.xpose.msra.mxu0 0.0
    %2563 = vmatpush.xpose.msra.mxu0 0.0
    %2564 = vmatpush.xpose.msra.mxu0 0.0
    %2565 = vmatpush.xpose.msra.mxu0 %v2548
    %2566 = vmatmul.f32.gmra.mxu0 %v2546
    %v2567 = vpop.f32.mrf.mxu0
    %v2568 = vadd.f32 0.0, %v2567
    %2569 = vdwg.mxu0
    %2570 = vrot.lane.b32.xlu0 %v2193, 120
    %v2571 = vpop.permute.xlu0 %2570
    %2572 = vrot.lane.b32.xlu0 %v2193, 88
    %v2573 = vpop.permute.xlu0 %2572
    %v2574 = vsel %vm399, %v2571, 0
    %v2576 = vsel %vm399, %v2573, 0
    %2578 = vmatpush.xpose.msra.mxu0 0.0
    %2579 = vmatpush.xpose.msra.mxu0 0.0
    %2580 = vmatpush.xpose.msra.mxu0 0.0
    %2581 = vmatpush.xpose.msra.mxu0 0.0
    %2582 = vmatpush.xpose.msra.mxu0 0.0
    %2583 = vmatpush.xpose.msra.mxu0 0.0
    %2584 = vmatpush.xpose.msra.mxu0 0.0
    %2585 = vmatpush.xpose.msra.mxu0 0.0
    %2586 = vmatpush.xpose.msra.mxu0 0.0
    %2587 = vmatpush.xpose.msra.mxu0 0.0
    %2588 = vmatpush.xpose.msra.mxu0 0.0
    %2589 = vmatpush.xpose.msra.mxu0 0.0
    %2590 = vmatpush.xpose.msra.mxu0 0.0
    %2591 = vmatpush.xpose.msra.mxu0 0.0
    %2592 = vmatpush.xpose.msra.mxu0 0.0
    %2593 = vmatpush.xpose.msra.mxu0 %v2576
    %2594 = vmatmul.f32.gmra.mxu0 %v2574
    %v2595 = vpop.f32.mrf.mxu0
    %v2596 = vadd.f32 0.0, %v2595
    %2597 = vdwg.mxu0
    %2598 = vrot.lane.b32.xlu0 %v2196, 120
    %v2599 = vpop.permute.xlu0 %2598
    %2600 = vrot.lane.b32.xlu0 %v2196, 88
    %v2601 = vpop.permute.xlu0 %2600
    %v2602 = vsel %vm399, %v2599, 0
    %v2604 = vsel %vm399, %v2601, 0
    %2606 = vmatpush.xpose.msra.mxu0 0.0
    %2607 = vmatpush.xpose.msra.mxu0 0.0
    %2608 = vmatpush.xpose.msra.mxu0 0.0
    %2609 = vmatpush.xpose.msra.mxu0 0.0
    %2610 = vmatpush.xpose.msra.mxu0 0.0
    %2611 = vmatpush.xpose.msra.mxu0 0.0
    %2612 = vmatpush.xpose.msra.mxu0 0.0
    %2613 = vmatpush.xpose.msra.mxu0 0.0
    %2614 = vmatpush.xpose.msra.mxu0 0.0
    %2615 = vmatpush.xpose.msra.mxu0 0.0
    %2616 = vmatpush.xpose.msra.mxu0 0.0
    %2617 = vmatpush.xpose.msra.mxu0 0.0
    %2618 = vmatpush.xpose.msra.mxu0 0.0
    %2619 = vmatpush.xpose.msra.mxu0 0.0
    %2620 = vmatpush.xpose.msra.mxu0 0.0
    %2621 = vmatpush.xpose.msra.mxu0 %v2604
    %2622 = vmatmul.f32.gmra.mxu0 %v2602
    %v2623 = vpop.f32.mrf.mxu0
    %v2624 = vadd.f32 0.0, %v2623
    %2625 = vdwg.mxu0
    %v2626 = vmul.f32 %v2540, 0.35355338
    %v2627 = vmul.f32 %v2568, 0.35355338
    %v2628 = vmul.f32 %v2596, 0.35355338
    %v2629 = vmul.f32 %v2624, 0.35355338
    %v2630 = vadd.f32 %v2626, %v509
    %v2631 = vadd.f32 %v2627, %v510
    %v2632 = vadd.f32 %v2628, %v511
    %v2633 = vadd.f32 %v2629, %v512
    %v2634 = vsel %vm399, %v2630, -inf
    %2635 = vmax.xlane.f32.xlu0 %v2634
    %v2636 = vpop.xlane.xlu0 %2635
    %v2637 = vsel %vm399, %v2631, -inf
    %2638 = vmax.xlane.f32.xlu0 %v2637
    %v2639 = vpop.xlane.xlu0 %2638
    %v2640 = vsel %vm399, %v2632, -inf
    %2641 = vmax.xlane.f32.xlu0 %v2640
    %v2642 = vpop.xlane.xlu0 %2641
    %v2643 = vsel %vm399, %v2633, -inf
    %2644 = vmax.xlane.f32.xlu0 %v2643
    %v2645 = vpop.xlane.xlu0 %2644
    %v2646 = vsub.f32 %v2630, %v2636
    %v2647 = vsub.f32 %v2631, %v2639
    %v2648 = vsub.f32 %v2632, %v2642
    %v2649 = vsub.f32 %v2633, %v2645
    %v2650 = vmul.f32 %v2646, 1.442695
    %v2651 = vpow.pop %v2650
    %v2652 = vmul.f32 %v2647, 1.442695
    %v2653 = vpow.pop %v2652
    %v2654 = vmul.f32 %v2648, 1.442695
    %v2655 = vpow.pop %v2654
    %v2656 = vmul.f32 %v2649, 1.442695
    %v2657 = vpow.pop %v2656
    %v2658 = vsel %vm399, %v2651, 0.0
    %2659 = vadd.xlane.f32.xlu0 %v2658
    %v2660 = vpop.xlane.xlu0 %2659
    %v2661 = vsel %vm399, %v2653, 0.0
    %2662 = vadd.xlane.f32.xlu0 %v2661
    %v2663 = vpop.xlane.xlu0 %2662
    %v2664 = vsel %vm399, %v2655, 0.0
    %2665 = vadd.xlane.f32.xlu0 %v2664
    %v2666 = vpop.xlane.xlu0 %2665
    %v2667 = vsel %vm399, %v2657, 0.0
    %2668 = vadd.xlane.f32.xlu0 %v2667
    %v2669 = vpop.xlane.xlu0 %2668
    %v2670 = vrcp.pop %v2660
    %v2671 = vmul.f32 %v2660, %v2670
    %v2672 = vsub.f32 1.0, %v2671
    %v2673 = vmul.f32 %v2670, %v2672
    %v2674 = vadd.f32 %v2670, %v2673
    %vm2675 = vweird.f32 %v2660
    %vm2676 = vweird.f32 %v2670
    %vm2677 = vmor %vm2675, %vm2676
    %v2678 = vsel %vm2677, %v2670, %v2674
    %v2679 = vand.u32 2147483647, %v2660
    %vm2680 = vcmp.eq.f32.partialorder %v2679, 8.507059e+37
    %v2681 = vand.u32 %v2660, 2147483648
    %v2682 = vor.u32 1.1754944e-38, %v2681
    %v2683 = vsel %vm2680, %v2682, %v2678
    %v2684 = vmul.f32 %v2651, %v2683
    %v2685 = vrcp.pop %v2663
    %v2686 = vmul.f32 %v2663, %v2685
    %v2687 = vsub.f32 1.0, %v2686
    %v2688 = vmul.f32 %v2685, %v2687
    %v2689 = vadd.f32 %v2685, %v2688
    %vm2690 = vweird.f32 %v2663
    %vm2691 = vweird.f32 %v2685
    %vm2692 = vmor %vm2690, %vm2691
    %v2693 = vsel %vm2692, %v2685, %v2689
    %v2694 = vand.u32 2147483647, %v2663
    %vm2695 = vcmp.eq.f32.partialorder %v2694, 8.507059e+37
    %v2696 = vand.u32 %v2663, 2147483648
    %v2697 = vor.u32 1.1754944e-38, %v2696
    %v2698 = vsel %vm2695, %v2697, %v2693
    %v2699 = vmul.f32 %v2653, %v2698
    %v2700 = vrcp.pop %v2666
    %v2701 = vmul.f32 %v2666, %v2700
    %v2702 = vsub.f32 1.0, %v2701
    %v2703 = vmul.f32 %v2700, %v2702
    %v2704 = vadd.f32 %v2700, %v2703
    %vm2705 = vweird.f32 %v2666
    %vm2706 = vweird.f32 %v2700
    %vm2707 = vmor %vm2705, %vm2706
    %v2708 = vsel %vm2707, %v2700, %v2704
    %v2709 = vand.u32 2147483647, %v2666
    %vm2710 = vcmp.eq.f32.partialorder %v2709, 8.507059e+37
    %v2711 = vand.u32 %v2666, 2147483648
    %v2712 = vor.u32 1.1754944e-38, %v2711
    %v2713 = vsel %vm2710, %v2712, %v2708
    %v2714 = vmul.f32 %v2655, %v2713
    %v2715 = vrcp.pop %v2669
    %v2716 = vmul.f32 %v2669, %v2715
    %v2717 = vsub.f32 1.0, %v2716
    %v2718 = vmul.f32 %v2715, %v2717
    %v2719 = vadd.f32 %v2715, %v2718
    %vm2720 = vweird.f32 %v2669
    %vm2721 = vweird.f32 %v2715
    %vm2722 = vmor %vm2720, %vm2721
    %v2723 = vsel %vm2722, %v2715, %v2719
    %v2724 = vand.u32 2147483647, %v2669
    %vm2725 = vcmp.eq.f32.partialorder %v2724, 8.507059e+37
    %v2726 = vand.u32 %v2669, 2147483648
    %v2727 = vor.u32 1.1754944e-38, %v2726
    %v2728 = vsel %vm2725, %v2727, %v2723
    %v2729 = vmul.f32 %v2657, %v2728
    %2730 = vrot.lane.b32.xlu0 %v2187, 56
    %v2731 = vpop.permute.xlu0 %2730
    %v2734 = vsel %vm399, %v2684, 0
    %2736 = vmatpush.msra.mxu0 0.0
    %2737 = vmatpush.msra.mxu0 0.0
    %2738 = vmatpush.msra.mxu0 0.0
    %2739 = vmatpush.msra.mxu0 0.0
    %2740 = vmatpush.msra.mxu0 0.0
    %2741 = vmatpush.msra.mxu0 0.0
    %2742 = vmatpush.msra.mxu0 0.0
    %2743 = vmatpush.msra.mxu0 0.0
    %2744 = vmatpush.msra.mxu0 0.0
    %2745 = vmatpush.msra.mxu0 0.0
    %2746 = vmatpush.msra.mxu0 0.0
    %2747 = vmatpush.msra.mxu0 0.0
    %2748 = vmatpush.msra.mxu0 0.0
    %2749 = vmatpush.msra.mxu0 0.0
    %2750 = vmatpush.msra.mxu0 0.0
    %2751 = vmatpush.msra.mxu0 %v2731
    %2752 = vmatmul.f32.gmra.mxu0 %v2734
    %v2753 = vpop.f32.mrf.mxu0
    %v2754 = vadd.f32 0.0, %v2753
    %2755 = vdwg.mxu0
    %2756 = vrot.lane.b32.xlu0 %v2190, 56
    %v2757 = vpop.permute.xlu0 %2756
    %v2760 = vsel %vm399, %v2699, 0
    %2762 = vmatpush.msra.mxu0 0.0
    %2763 = vmatpush.msra.mxu0 0.0
    %2764 = vmatpush.msra.mxu0 0.0
    %2765 = vmatpush.msra.mxu0 0.0
    %2766 = vmatpush.msra.mxu0 0.0
    %2767 = vmatpush.msra.mxu0 0.0
    %2768 = vmatpush.msra.mxu0 0.0
    %2769 = vmatpush.msra.mxu0 0.0
    %2770 = vmatpush.msra.mxu0 0.0
    %2771 = vmatpush.msra.mxu0 0.0
    %2772 = vmatpush.msra.mxu0 0.0
    %2773 = vmatpush.msra.mxu0 0.0
    %2774 = vmatpush.msra.mxu0 0.0
    %2775 = vmatpush.msra.mxu0 0.0
    %2776 = vmatpush.msra.mxu0 0.0
    %2777 = vmatpush.msra.mxu0 %v2757
    %2778 = vmatmul.f32.gmra.mxu0 %v2760
    %v2779 = vpop.f32.mrf.mxu0
    %v2780 = vadd.f32 0.0, %v2779
    %2781 = vdwg.mxu0
    %2782 = vrot.lane.b32.xlu0 %v2193, 56
    %v2783 = vpop.permute.xlu0 %2782
    %v2786 = vsel %vm399, %v2714, 0
    %2788 = vmatpush.msra.mxu0 0.0
    %2789 = vmatpush.msra.mxu0 0.0
    %2790 = vmatpush.msra.mxu0 0.0
    %2791 = vmatpush.msra.mxu0 0.0
    %2792 = vmatpush.msra.mxu0 0.0
    %2793 = vmatpush.msra.mxu0 0.0
    %2794 = vmatpush.msra.mxu0 0.0
    %2795 = vmatpush.msra.mxu0 0.0
    %2796 = vmatpush.msra.mxu0 0.0
    %2797 = vmatpush.msra.mxu0 0.0
    %2798 = vmatpush.msra.mxu0 0.0
    %2799 = vmatpush.msra.mxu0 0.0
    %2800 = vmatpush.msra.mxu0 0.0
    %2801 = vmatpush.msra.mxu0 0.0
    %2802 = vmatpush.msra.mxu0 0.0
    %2803 = vmatpush.msra.mxu0 %v2783
    %2804 = vmatmul.f32.gmra.mxu0 %v2786
    %v2805 = vpop.f32.mrf.mxu0
    %v2806 = vadd.f32 0.0, %v2805
    %2807 = vdwg.mxu0
    %2808 = vrot.lane.b32.xlu0 %v2196, 56
    %v2809 = vpop.permute.xlu0 %2808
    %v2812 = vsel %vm399, %v2729, 0
    %2814 = vmatpush.msra.mxu0 0.0
    %2815 = vmatpush.msra.mxu0 0.0
    %2816 = vmatpush.msra.mxu0 0.0
    %2817 = vmatpush.msra.mxu0 0.0
    %2818 = vmatpush.msra.mxu0 0.0
    %2819 = vmatpush.msra.mxu0 0.0
    %2820 = vmatpush.msra.mxu0 0.0
    %2821 = vmatpush.msra.mxu0 0.0
    %2822 = vmatpush.msra.mxu0 0.0
    %2823 = vmatpush.msra.mxu0 0.0
    %2824 = vmatpush.msra.mxu0 0.0
    %2825 = vmatpush.msra.mxu0 0.0
    %2826 = vmatpush.msra.mxu0 0.0
    %2827 = vmatpush.msra.mxu0 0.0
    %2828 = vmatpush.msra.mxu0 0.0
    %2829 = vmatpush.msra.mxu0 %v2809
    %2830 = vmatmul.f32.gmra.mxu0 %v2812
    %v2831 = vpop.f32.mrf.mxu0
    %v2832 = vadd.f32 0.0, %v2831
    %2833 = vdwg.mxu0
    %2834 = vrot.lane.b32.xlu0 %v2187, 112
    %v2835 = vpop.permute.xlu0 %2834
    %2836 = vrot.lane.b32.xlu0 %v2187, 80
    %v2837 = vpop.permute.xlu0 %2836
    %v2838 = vsel %vm399, %v2835, 0
    %v2840 = vsel %vm399, %v2837, 0
    %2842 = vmatpush.xpose.msra.mxu0 0.0
    %2843 = vmatpush.xpose.msra.mxu0 0.0
    %2844 = vmatpush.xpose.msra.mxu0 0.0
    %2845 = vmatpush.xpose.msra.mxu0 0.0
    %2846 = vmatpush.xpose.msra.mxu0 0.0
    %2847 = vmatpush.xpose.msra.mxu0 0.0
    %2848 = vmatpush.xpose.msra.mxu0 0.0
    %2849 = vmatpush.xpose.msra.mxu0 0.0
    %2850 = vmatpush.xpose.msra.mxu0 0.0
    %2851 = vmatpush.xpose.msra.mxu0 0.0
    %2852 = vmatpush.xpose.msra.mxu0 0.0
    %2853 = vmatpush.xpose.msra.mxu0 0.0
    %2854 = vmatpush.xpose.msra.mxu0 0.0
    %2855 = vmatpush.xpose.msra.mxu0 0.0
    %2856 = vmatpush.xpose.msra.mxu0 0.0
    %2857 = vmatpush.xpose.msra.mxu0 %v2840
    %2858 = vmatmul.f32.gmra.mxu0 %v2838
    %v2859 = vpop.f32.mrf.mxu0
    %v2860 = vadd.f32 0.0, %v2859
    %2861 = vdwg.mxu0
    %2862 = vrot.lane.b32.xlu0 %v2190, 112
    %v2863 = vpop.permute.xlu0 %2862
    %2864 = vrot.lane.b32.xlu0 %v2190, 80
    %v2865 = vpop.permute.xlu0 %2864
    %v2866 = vsel %vm399, %v2863, 0
    %v2868 = vsel %vm399, %v2865, 0
    %2870 = vmatpush.xpose.msra.mxu0 0.0
    %2871 = vmatpush.xpose.msra.mxu0 0.0
    %2872 = vmatpush.xpose.msra.mxu0 0.0
    %2873 = vmatpush.xpose.msra.mxu0 0.0
    %2874 = vmatpush.xpose.msra.mxu0 0.0
    %2875 = vmatpush.xpose.msra.mxu0 0.0
    %2876 = vmatpush.xpose.msra.mxu0 0.0
    %2877 = vmatpush.xpose.msra.mxu0 0.0
    %2878 = vmatpush.xpose.msra.mxu0 0.0
    %2879 = vmatpush.xpose.msra.mxu0 0.0
    %2880 = vmatpush.xpose.msra.mxu0 0.0
    %2881 = vmatpush.xpose.msra.mxu0 0.0
    %2882 = vmatpush.xpose.msra.mxu0 0.0
    %2883 = vmatpush.xpose.msra.mxu0 0.0
    %2884 = vmatpush.xpose.msra.mxu0 0.0
    %2885 = vmatpush.xpose.msra.mxu0 %v2868
    %2886 = vmatmul.f32.gmra.mxu0 %v2866
    %v2887 = vpop.f32.mrf.mxu0
    %v2888 = vadd.f32 0.0, %v2887
    %2889 = vdwg.mxu0
    %2890 = vrot.lane.b32.xlu0 %v2193, 112
    %v2891 = vpop.permute.xlu0 %2890
    %2892 = vrot.lane.b32.xlu0 %v2193, 80
    %v2893 = vpop.permute.xlu0 %2892
    %v2894 = vsel %vm399, %v2891, 0
    %v2896 = vsel %vm399, %v2893, 0
    %2898 = vmatpush.xpose.msra.mxu0 0.0
    %2899 = vmatpush.xpose.msra.mxu0 0.0
    %2900 = vmatpush.xpose.msra.mxu0 0.0
    %2901 = vmatpush.xpose.msra.mxu0 0.0
    %2902 = vmatpush.xpose.msra.mxu0 0.0
    %2903 = vmatpush.xpose.msra.mxu0 0.0
    %2904 = vmatpush.xpose.msra.mxu0 0.0
    %2905 = vmatpush.xpose.msra.mxu0 0.0
    %2906 = vmatpush.xpose.msra.mxu0 0.0
    %2907 = vmatpush.xpose.msra.mxu0 0.0
    %2908 = vmatpush.xpose.msra.mxu0 0.0
    %2909 = vmatpush.xpose.msra.mxu0 0.0
    %2910 = vmatpush.xpose.msra.mxu0 0.0
    %2911 = vmatpush.xpose.msra.mxu0 0.0
    %2912 = vmatpush.xpose.msra.mxu0 0.0
    %2913 = vmatpush.xpose.msra.mxu0 %v2896
    %2914 = vmatmul.f32.gmra.mxu0 %v2894
    %v2915 = vpop.f32.mrf.mxu0
    %v2916 = vadd.f32 0.0, %v2915
    %2917 = vdwg.mxu0
    %2918 = vrot.lane.b32.xlu0 %v2196, 112
    %v2919 = vpop.permute.xlu0 %2918
    %2920 = vrot.lane.b32.xlu0 %v2196, 80
    %v2921 = vpop.permute.xlu0 %2920
    %v2922 = vsel %vm399, %v2919, 0
    %v2924 = vsel %vm399, %v2921, 0
    %2926 = vmatpush.xpose.msra.mxu0 0.0
    %2927 = vmatpush.xpose.msra.mxu0 0.0
    %2928 = vmatpush.xpose.msra.mxu0 0.0
    %2929 = vmatpush.xpose.msra.mxu0 0.0
    %2930 = vmatpush.xpose.msra.mxu0 0.0
    %2931 = vmatpush.xpose.msra.mxu0 0.0
    %2932 = vmatpush.xpose.msra.mxu0 0.0
    %2933 = vmatpush.xpose.msra.mxu0 0.0
    %2934 = vmatpush.xpose.msra.mxu0 0.0
    %2935 = vmatpush.xpose.msra.mxu0 0.0
    %2936 = vmatpush.xpose.msra.mxu0 0.0
    %2937 = vmatpush.xpose.msra.mxu0 0.0
    %2938 = vmatpush.xpose.msra.mxu0 0.0
    %2939 = vmatpush.xpose.msra.mxu0 0.0
    %2940 = vmatpush.xpose.msra.mxu0 0.0
    %2941 = vmatpush.xpose.msra.mxu0 %v2924
    %2942 = vmatmul.f32.gmra.mxu0 %v2922
    %v2943 = vpop.f32.mrf.mxu0
    %v2944 = vadd.f32 0.0, %v2943
    %2945 = vdwg.mxu0
    %v2946 = vmul.f32 %v2860, 0.35355338
    %v2947 = vmul.f32 %v2888, 0.35355338
    %v2948 = vmul.f32 %v2916, 0.35355338
    %v2949 = vmul.f32 %v2944, 0.35355338
    %v2950 = vadd.f32 %v2946, %v509
    %v2951 = vadd.f32 %v2947, %v510
    %v2952 = vadd.f32 %v2948, %v511
    %v2953 = vadd.f32 %v2949, %v512
    %v2954 = vsel %vm399, %v2950, -inf
    %2955 = vmax.xlane.f32.xlu0 %v2954
    %v2956 = vpop.xlane.xlu0 %2955
    %v2957 = vsel %vm399, %v2951, -inf
    %2958 = vmax.xlane.f32.xlu0 %v2957
    %v2959 = vpop.xlane.xlu0 %2958
    %v2960 = vsel %vm399, %v2952, -inf
    %2961 = vmax.xlane.f32.xlu0 %v2960
    %v2962 = vpop.xlane.xlu0 %2961
    %v2963 = vsel %vm399, %v2953, -inf
    %2964 = vmax.xlane.f32.xlu0 %v2963
    %v2965 = vpop.xlane.xlu0 %2964
    %v2966 = vsub.f32 %v2950, %v2956
    %v2967 = vsub.f32 %v2951, %v2959
    %v2968 = vsub.f32 %v2952, %v2962
    %v2969 = vsub.f32 %v2953, %v2965
    %v2970 = vmul.f32 %v2966, 1.442695
    %v2971 = vpow.pop %v2970
    %v2972 = vmul.f32 %v2967, 1.442695
    %v2973 = vpow.pop %v2972
    %v2974 = vmul.f32 %v2968, 1.442695
    %v2975 = vpow.pop %v2974
    %v2976 = vmul.f32 %v2969, 1.442695
    %v2977 = vpow.pop %v2976
    %v2978 = vsel %vm399, %v2971, 0.0
    %2979 = vadd.xlane.f32.xlu0 %v2978
    %v2980 = vpop.xlane.xlu0 %2979
    %v2981 = vsel %vm399, %v2973, 0.0
    %2982 = vadd.xlane.f32.xlu0 %v2981
    %v2983 = vpop.xlane.xlu0 %2982
    %v2984 = vsel %vm399, %v2975, 0.0
    %2985 = vadd.xlane.f32.xlu0 %v2984
    %v2986 = vpop.xlane.xlu0 %2985
    %v2987 = vsel %vm399, %v2977, 0.0
    %2988 = vadd.xlane.f32.xlu0 %v2987
    %v2989 = vpop.xlane.xlu0 %2988
    %v2990 = vrcp.pop %v2980
    %v2991 = vmul.f32 %v2980, %v2990
    %v2992 = vsub.f32 1.0, %v2991
    %v2993 = vmul.f32 %v2990, %v2992
    %v2994 = vadd.f32 %v2990, %v2993
    %vm2995 = vweird.f32 %v2980
    %vm2996 = vweird.f32 %v2990
    %vm2997 = vmor %vm2995, %vm2996
    %v2998 = vsel %vm2997, %v2990, %v2994
    %v2999 = vand.u32 2147483647, %v2980
    %vm3000 = vcmp.eq.f32.partialorder %v2999, 8.507059e+37
    %v3001 = vand.u32 %v2980, 2147483648
    %v3002 = vor.u32 1.1754944e-38, %v3001
    %v3003 = vsel %vm3000, %v3002, %v2998
    %v3004 = vmul.f32 %v2971, %v3003
    %v3005 = vrcp.pop %v2983
    %v3006 = vmul.f32 %v2983, %v3005
    %v3007 = vsub.f32 1.0, %v3006
    %v3008 = vmul.f32 %v3005, %v3007
    %v3009 = vadd.f32 %v3005, %v3008
    %vm3010 = vweird.f32 %v2983
    %vm3011 = vweird.f32 %v3005
    %vm3012 = vmor %vm3010, %vm3011
    %v3013 = vsel %vm3012, %v3005, %v3009
    %v3014 = vand.u32 2147483647, %v2983
    %vm3015 = vcmp.eq.f32.partialorder %v3014, 8.507059e+37
    %v3016 = vand.u32 %v2983, 2147483648
    %v3017 = vor.u32 1.1754944e-38, %v3016
    %v3018 = vsel %vm3015, %v3017, %v3013
    %v3019 = vmul.f32 %v2973, %v3018
    %v3020 = vrcp.pop %v2986
    %v3021 = vmul.f32 %v2986, %v3020
    %v3022 = vsub.f32 1.0, %v3021
    %v3023 = vmul.f32 %v3020, %v3022
    %v3024 = vadd.f32 %v3020, %v3023
    %vm3025 = vweird.f32 %v2986
    %vm3026 = vweird.f32 %v3020
    %vm3027 = vmor %vm3025, %vm3026
    %v3028 = vsel %vm3027, %v3020, %v3024
    %v3029 = vand.u32 2147483647, %v2986
    %vm3030 = vcmp.eq.f32.partialorder %v3029, 8.507059e+37
    %v3031 = vand.u32 %v2986, 2147483648
    %v3032 = vor.u32 1.1754944e-38, %v3031
    %v3033 = vsel %vm3030, %v3032, %v3028
    %v3034 = vmul.f32 %v2975, %v3033
    %v3035 = vrcp.pop %v2989
    %v3036 = vmul.f32 %v2989, %v3035
    %v3037 = vsub.f32 1.0, %v3036
    %v3038 = vmul.f32 %v3035, %v3037
    %v3039 = vadd.f32 %v3035, %v3038
    %vm3040 = vweird.f32 %v2989
    %vm3041 = vweird.f32 %v3035
    %vm3042 = vmor %vm3040, %vm3041
    %v3043 = vsel %vm3042, %v3035, %v3039
    %v3044 = vand.u32 2147483647, %v2989
    %vm3045 = vcmp.eq.f32.partialorder %v3044, 8.507059e+37
    %v3046 = vand.u32 %v2989, 2147483648
    %v3047 = vor.u32 1.1754944e-38, %v3046
    %v3048 = vsel %vm3045, %v3047, %v3043
    %v3049 = vmul.f32 %v2977, %v3048
    %3050 = vrot.lane.b32.xlu0 %v2187, 48
    %v3051 = vpop.permute.xlu0 %3050
    %v3054 = vsel %vm399, %v3004, 0
    %3056 = vmatpush.msra.mxu0 0.0
    %3057 = vmatpush.msra.mxu0 0.0
    %3058 = vmatpush.msra.mxu0 0.0
    %3059 = vmatpush.msra.mxu0 0.0
    %3060 = vmatpush.msra.mxu0 0.0
    %3061 = vmatpush.msra.mxu0 0.0
    %3062 = vmatpush.msra.mxu0 0.0
    %3063 = vmatpush.msra.mxu0 0.0
    %3064 = vmatpush.msra.mxu0 0.0
    %3065 = vmatpush.msra.mxu0 0.0
    %3066 = vmatpush.msra.mxu0 0.0
    %3067 = vmatpush.msra.mxu0 0.0
    %3068 = vmatpush.msra.mxu0 0.0
    %3069 = vmatpush.msra.mxu0 0.0
    %3070 = vmatpush.msra.mxu0 0.0
    %3071 = vmatpush.msra.mxu0 %v3051
    %3072 = vmatmul.f32.gmra.mxu0 %v3054
    %v3073 = vpop.f32.mrf.mxu0
    %v3074 = vadd.f32 0.0, %v3073
    %3075 = vdwg.mxu0
    %3076 = vrot.lane.b32.xlu0 %v2190, 48
    %v3077 = vpop.permute.xlu0 %3076
    %v3080 = vsel %vm399, %v3019, 0
    %3082 = vmatpush.msra.mxu0 0.0
    %3083 = vmatpush.msra.mxu0 0.0
    %3084 = vmatpush.msra.mxu0 0.0
    %3085 = vmatpush.msra.mxu0 0.0
    %3086 = vmatpush.msra.mxu0 0.0
    %3087 = vmatpush.msra.mxu0 0.0
    %3088 = vmatpush.msra.mxu0 0.0
    %3089 = vmatpush.msra.mxu0 0.0
    %3090 = vmatpush.msra.mxu0 0.0
    %3091 = vmatpush.msra.mxu0 0.0
    %3092 = vmatpush.msra.mxu0 0.0
    %3093 = vmatpush.msra.mxu0 0.0
    %3094 = vmatpush.msra.mxu0 0.0
    %3095 = vmatpush.msra.mxu0 0.0
    %3096 = vmatpush.msra.mxu0 0.0
    %3097 = vmatpush.msra.mxu0 %v3077
    %3098 = vmatmul.f32.gmra.mxu0 %v3080
    %v3099 = vpop.f32.mrf.mxu0
    %v3100 = vadd.f32 0.0, %v3099
    %3101 = vdwg.mxu0
    %3102 = vrot.lane.b32.xlu0 %v2193, 48
    %v3103 = vpop.permute.xlu0 %3102
    %v3106 = vsel %vm399, %v3034, 0
    %3108 = vmatpush.msra.mxu0 0.0
    %3109 = vmatpush.msra.mxu0 0.0
    %3110 = vmatpush.msra.mxu0 0.0
    %3111 = vmatpush.msra.mxu0 0.0
    %3112 = vmatpush.msra.mxu0 0.0
    %3113 = vmatpush.msra.mxu0 0.0
    %3114 = vmatpush.msra.mxu0 0.0
    %3115 = vmatpush.msra.mxu0 0.0
    %3116 = vmatpush.msra.mxu0 0.0
    %3117 = vmatpush.msra.mxu0 0.0
    %3118 = vmatpush.msra.mxu0 0.0
    %3119 = vmatpush.msra.mxu0 0.0
    %3120 = vmatpush.msra.mxu0 0.0
    %3121 = vmatpush.msra.mxu0 0.0
    %3122 = vmatpush.msra.mxu0 0.0
    %3123 = vmatpush.msra.mxu0 %v3103
    %3124 = vmatmul.f32.gmra.mxu0 %v3106
    %v3125 = vpop.f32.mrf.mxu0
    %v3126 = vadd.f32 0.0, %v3125
    %3127 = vdwg.mxu0
    %3128 = vrot.lane.b32.xlu0 %v2196, 48
    %v3129 = vpop.permute.xlu0 %3128
    %v3132 = vsel %vm399, %v3049, 0
    %3134 = vmatpush.msra.mxu0 0.0
    %3135 = vmatpush.msra.mxu0 0.0
    %3136 = vmatpush.msra.mxu0 0.0
    %3137 = vmatpush.msra.mxu0 0.0
    %3138 = vmatpush.msra.mxu0 0.0
    %3139 = vmatpush.msra.mxu0 0.0
    %3140 = vmatpush.msra.mxu0 0.0
    %3141 = vmatpush.msra.mxu0 0.0
    %3142 = vmatpush.msra.mxu0 0.0
    %3143 = vmatpush.msra.mxu0 0.0
    %3144 = vmatpush.msra.mxu0 0.0
    %3145 = vmatpush.msra.mxu0 0.0
    %3146 = vmatpush.msra.mxu0 0.0
    %3147 = vmatpush.msra.mxu0 0.0
    %3148 = vmatpush.msra.mxu0 0.0
    %3149 = vmatpush.msra.mxu0 %v3129
    %3150 = vmatmul.f32.gmra.mxu0 %v3132
    %v3151 = vpop.f32.mrf.mxu0
    %v3152 = vadd.f32 0.0, %v3151
    %3153 = vdwg.mxu0
    %3154 = vrot.lane.b32.xlu0 %v2187, 104
    %v3155 = vpop.permute.xlu0 %3154
    %3156 = vrot.lane.b32.xlu0 %v2187, 72
    %v3157 = vpop.permute.xlu0 %3156
    %v3158 = vsel %vm399, %v3155, 0
    %v3160 = vsel %vm399, %v3157, 0
    %3162 = vmatpush.xpose.msra.mxu0 0.0
    %3163 = vmatpush.xpose.msra.mxu0 0.0
    %3164 = vmatpush.xpose.msra.mxu0 0.0
    %3165 = vmatpush.xpose.msra.mxu0 0.0
    %3166 = vmatpush.xpose.msra.mxu0 0.0
    %3167 = vmatpush.xpose.msra.mxu0 0.0
    %3168 = vmatpush.xpose.msra.mxu0 0.0
    %3169 = vmatpush.xpose.msra.mxu0 0.0
    %3170 = vmatpush.xpose.msra.mxu0 0.0
    %3171 = vmatpush.xpose.msra.mxu0 0.0
    %3172 = vmatpush.xpose.msra.mxu0 0.0
    %3173 = vmatpush.xpose.msra.mxu0 0.0
    %3174 = vmatpush.xpose.msra.mxu0 0.0
    %3175 = vmatpush.xpose.msra.mxu0 0.0
    %3176 = vmatpush.xpose.msra.mxu0 0.0
    %3177 = vmatpush.xpose.msra.mxu0 %v3160
    %3178 = vmatmul.f32.gmra.mxu0 %v3158
    %v3179 = vpop.f32.mrf.mxu0
    %v3180 = vadd.f32 0.0, %v3179
    %3181 = vdwg.mxu0
    %3182 = vrot.lane.b32.xlu0 %v2190, 104
    %v3183 = vpop.permute.xlu0 %3182
    %3184 = vrot.lane.b32.xlu0 %v2190, 72
    %v3185 = vpop.permute.xlu0 %3184
    %v3186 = vsel %vm399, %v3183, 0
    %v3188 = vsel %vm399, %v3185, 0
    %3190 = vmatpush.xpose.msra.mxu0 0.0
    %3191 = vmatpush.xpose.msra.mxu0 0.0
    %3192 = vmatpush.xpose.msra.mxu0 0.0
    %3193 = vmatpush.xpose.msra.mxu0 0.0
    %3194 = vmatpush.xpose.msra.mxu0 0.0
    %3195 = vmatpush.xpose.msra.mxu0 0.0
    %3196 = vmatpush.xpose.msra.mxu0 0.0
    %3197 = vmatpush.xpose.msra.mxu0 0.0
    %3198 = vmatpush.xpose.msra.mxu0 0.0
    %3199 = vmatpush.xpose.msra.mxu0 0.0
    %3200 = vmatpush.xpose.msra.mxu0 0.0
    %3201 = vmatpush.xpose.msra.mxu0 0.0
    %3202 = vmatpush.xpose.msra.mxu0 0.0
    %3203 = vmatpush.xpose.msra.mxu0 0.0
    %3204 = vmatpush.xpose.msra.mxu0 0.0
    %3205 = vmatpush.xpose.msra.mxu0 %v3188
    %3206 = vmatmul.f32.gmra.mxu0 %v3186
    %v3207 = vpop.f32.mrf.mxu0
    %v3208 = vadd.f32 0.0, %v3207
    %3209 = vdwg.mxu0
    %3210 = vrot.lane.b32.xlu0 %v2193, 104
    %v3211 = vpop.permute.xlu0 %3210
    %3212 = vrot.lane.b32.xlu0 %v2193, 72
    %v3213 = vpop.permute.xlu0 %3212
    %v3214 = vsel %vm399, %v3211, 0
    %v3216 = vsel %vm399, %v3213, 0
    %3218 = vmatpush.xpose.msra.mxu0 0.0
    %3219 = vmatpush.xpose.msra.mxu0 0.0
    %3220 = vmatpush.xpose.msra.mxu0 0.0
    %3221 = vmatpush.xpose.msra.mxu0 0.0
    %3222 = vmatpush.xpose.msra.mxu0 0.0
    %3223 = vmatpush.xpose.msra.mxu0 0.0
    %3224 = vmatpush.xpose.msra.mxu0 0.0
    %3225 = vmatpush.xpose.msra.mxu0 0.0
    %3226 = vmatpush.xpose.msra.mxu0 0.0
    %3227 = vmatpush.xpose.msra.mxu0 0.0
    %3228 = vmatpush.xpose.msra.mxu0 0.0
    %3229 = vmatpush.xpose.msra.mxu0 0.0
    %3230 = vmatpush.xpose.msra.mxu0 0.0
    %3231 = vmatpush.xpose.msra.mxu0 0.0
    %3232 = vmatpush.xpose.msra.mxu0 0.0
    %3233 = vmatpush.xpose.msra.mxu0 %v3216
    %3234 = vmatmul.f32.gmra.mxu0 %v3214
    %v3235 = vpop.f32.mrf.mxu0
    %v3236 = vadd.f32 0.0, %v3235
    %3237 = vdwg.mxu0
    %3238 = vrot.lane.b32.xlu0 %v2196, 104
    %v3239 = vpop.permute.xlu0 %3238
    %3240 = vrot.lane.b32.xlu0 %v2196, 72
    %v3241 = vpop.permute.xlu0 %3240
    %v3242 = vsel %vm399, %v3239, 0
    %v3244 = vsel %vm399, %v3241, 0
    %3246 = vmatpush.xpose.msra.mxu0 0.0
    %3247 = vmatpush.xpose.msra.mxu0 0.0
    %3248 = vmatpush.xpose.msra.mxu0 0.0
    %3249 = vmatpush.xpose.msra.mxu0 0.0
    %3250 = vmatpush.xpose.msra.mxu0 0.0
    %3251 = vmatpush.xpose.msra.mxu0 0.0
    %3252 = vmatpush.xpose.msra.mxu0 0.0
    %3253 = vmatpush.xpose.msra.mxu0 0.0
    %3254 = vmatpush.xpose.msra.mxu0 0.0
    %3255 = vmatpush.xpose.msra.mxu0 0.0
    %3256 = vmatpush.xpose.msra.mxu0 0.0
    %3257 = vmatpush.xpose.msra.mxu0 0.0
    %3258 = vmatpush.xpose.msra.mxu0 0.0
    %3259 = vmatpush.xpose.msra.mxu0 0.0
    %3260 = vmatpush.xpose.msra.mxu0 0.0
    %3261 = vmatpush.xpose.msra.mxu0 %v3244
    %3262 = vmatmul.f32.gmra.mxu0 %v3242
    %v3263 = vpop.f32.mrf.mxu0
    %v3264 = vadd.f32 0.0, %v3263
    %3265 = vdwg.mxu0
    %v3266 = vmul.f32 %v3180, 0.35355338
    %v3267 = vmul.f32 %v3208, 0.35355338
    %v3268 = vmul.f32 %v3236, 0.35355338
    %v3269 = vmul.f32 %v3264, 0.35355338
    %v3270 = vadd.f32 %v3266, %v509
    %v3271 = vadd.f32 %v3267, %v510
    %v3272 = vadd.f32 %v3268, %v511
    %v3273 = vadd.f32 %v3269, %v512
    %v3274 = vsel %vm399, %v3270, -inf
    %3275 = vmax.xlane.f32.xlu0 %v3274
    %v3276 = vpop.xlane.xlu0 %3275
    %v3277 = vsel %vm399, %v3271, -inf
    %3278 = vmax.xlane.f32.xlu0 %v3277
    %v3279 = vpop.xlane.xlu0 %3278
    %v3280 = vsel %vm399, %v3272, -inf
    %3281 = vmax.xlane.f32.xlu0 %v3280
    %v3282 = vpop.xlane.xlu0 %3281
    %v3283 = vsel %vm399, %v3273, -inf
    %3284 = vmax.xlane.f32.xlu0 %v3283
    %v3285 = vpop.xlane.xlu0 %3284
    %v3286 = vsub.f32 %v3270, %v3276
    %v3287 = vsub.f32 %v3271, %v3279
    %v3288 = vsub.f32 %v3272, %v3282
    %v3289 = vsub.f32 %v3273, %v3285
    %v3290 = vmul.f32 %v3286, 1.442695
    %v3291 = vpow.pop %v3290
    %v3292 = vmul.f32 %v3287, 1.442695
    %v3293 = vpow.pop %v3292
    %v3294 = vmul.f32 %v3288, 1.442695
    %v3295 = vpow.pop %v3294
    %v3296 = vmul.f32 %v3289, 1.442695
    %v3297 = vpow.pop %v3296
    %v3298 = vsel %vm399, %v3291, 0.0
    %3299 = vadd.xlane.f32.xlu0 %v3298
    %v3300 = vpop.xlane.xlu0 %3299
    %v3301 = vsel %vm399, %v3293, 0.0
    %3302 = vadd.xlane.f32.xlu0 %v3301
    %v3303 = vpop.xlane.xlu0 %3302
    %v3304 = vsel %vm399, %v3295, 0.0
    %3305 = vadd.xlane.f32.xlu0 %v3304
    %v3306 = vpop.xlane.xlu0 %3305
    %v3307 = vsel %vm399, %v3297, 0.0
    %3308 = vadd.xlane.f32.xlu0 %v3307
    %v3309 = vpop.xlane.xlu0 %3308
    %v3310 = vrcp.pop %v3300
    %v3311 = vmul.f32 %v3300, %v3310
    %v3312 = vsub.f32 1.0, %v3311
    %v3313 = vmul.f32 %v3310, %v3312
    %v3314 = vadd.f32 %v3310, %v3313
    %vm3315 = vweird.f32 %v3300
    %vm3316 = vweird.f32 %v3310
    %vm3317 = vmor %vm3315, %vm3316
    %v3318 = vsel %vm3317, %v3310, %v3314
    %v3319 = vand.u32 2147483647, %v3300
    %vm3320 = vcmp.eq.f32.partialorder %v3319, 8.507059e+37
    %v3321 = vand.u32 %v3300, 2147483648
    %v3322 = vor.u32 1.1754944e-38, %v3321
    %v3323 = vsel %vm3320, %v3322, %v3318
    %v3324 = vmul.f32 %v3291, %v3323
    %v3325 = vrcp.pop %v3303
    %v3326 = vmul.f32 %v3303, %v3325
    %v3327 = vsub.f32 1.0, %v3326
    %v3328 = vmul.f32 %v3325, %v3327
    %v3329 = vadd.f32 %v3325, %v3328
    %vm3330 = vweird.f32 %v3303
    %vm3331 = vweird.f32 %v3325
    %vm3332 = vmor %vm3330, %vm3331
    %v3333 = vsel %vm3332, %v3325, %v3329
    %v3334 = vand.u32 2147483647, %v3303
    %vm3335 = vcmp.eq.f32.partialorder %v3334, 8.507059e+37
    %v3336 = vand.u32 %v3303, 2147483648
    %v3337 = vor.u32 1.1754944e-38, %v3336
    %v3338 = vsel %vm3335, %v3337, %v3333
    %v3339 = vmul.f32 %v3293, %v3338
    %v3340 = vrcp.pop %v3306
    %v3341 = vmul.f32 %v3306, %v3340
    %v3342 = vsub.f32 1.0, %v3341
    %v3343 = vmul.f32 %v3340, %v3342
    %v3344 = vadd.f32 %v3340, %v3343
    %vm3345 = vweird.f32 %v3306
    %vm3346 = vweird.f32 %v3340
    %vm3347 = vmor %vm3345, %vm3346
    %v3348 = vsel %vm3347, %v3340, %v3344
    %v3349 = vand.u32 2147483647, %v3306
    %vm3350 = vcmp.eq.f32.partialorder %v3349, 8.507059e+37
    %v3351 = vand.u32 %v3306, 2147483648
    %v3352 = vor.u32 1.1754944e-38, %v3351
    %v3353 = vsel %vm3350, %v3352, %v3348
    %v3354 = vmul.f32 %v3295, %v3353
    %v3355 = vrcp.pop %v3309
    %v3356 = vmul.f32 %v3309, %v3355
    %v3357 = vsub.f32 1.0, %v3356
    %v3358 = vmul.f32 %v3355, %v3357
    %v3359 = vadd.f32 %v3355, %v3358
    %vm3360 = vweird.f32 %v3309
    %vm3361 = vweird.f32 %v3355
    %vm3362 = vmor %vm3360, %vm3361
    %v3363 = vsel %vm3362, %v3355, %v3359
    %v3364 = vand.u32 2147483647, %v3309
    %vm3365 = vcmp.eq.f32.partialorder %v3364, 8.507059e+37
    %v3366 = vand.u32 %v3309, 2147483648
    %v3367 = vor.u32 1.1754944e-38, %v3366
    %v3368 = vsel %vm3365, %v3367, %v3363
    %v3369 = vmul.f32 %v3297, %v3368
    %3370 = vrot.lane.b32.xlu0 %v2187, 40
    %v3371 = vpop.permute.xlu0 %3370
    %v3374 = vsel %vm399, %v3324, 0
    %3376 = vmatpush.msra.mxu0 0.0
    %3377 = vmatpush.msra.mxu0 0.0
    %3378 = vmatpush.msra.mxu0 0.0
    %3379 = vmatpush.msra.mxu0 0.0
    %3380 = vmatpush.msra.mxu0 0.0
    %3381 = vmatpush.msra.mxu0 0.0
    %3382 = vmatpush.msra.mxu0 0.0
    %3383 = vmatpush.msra.mxu0 0.0
    %3384 = vmatpush.msra.mxu0 0.0
    %3385 = vmatpush.msra.mxu0 0.0
    %3386 = vmatpush.msra.mxu0 0.0
    %3387 = vmatpush.msra.mxu0 0.0
    %3388 = vmatpush.msra.mxu0 0.0
    %3389 = vmatpush.msra.mxu0 0.0
    %3390 = vmatpush.msra.mxu0 0.0
    %3391 = vmatpush.msra.mxu0 %v3371
    %3392 = vmatmul.f32.gmra.mxu0 %v3374
    %v3393 = vpop.f32.mrf.mxu0
    %v3394 = vadd.f32 0.0, %v3393
    %3395 = vdwg.mxu0
    %3396 = vrot.lane.b32.xlu0 %v2190, 40
    %v3397 = vpop.permute.xlu0 %3396
    %v3400 = vsel %vm399, %v3339, 0
    %3402 = vmatpush.msra.mxu0 0.0
    %3403 = vmatpush.msra.mxu0 0.0
    %3404 = vmatpush.msra.mxu0 0.0
    %3405 = vmatpush.msra.mxu0 0.0
    %3406 = vmatpush.msra.mxu0 0.0
    %3407 = vmatpush.msra.mxu0 0.0
    %3408 = vmatpush.msra.mxu0 0.0
    %3409 = vmatpush.msra.mxu0 0.0
    %3410 = vmatpush.msra.mxu0 0.0
    %3411 = vmatpush.msra.mxu0 0.0
    %3412 = vmatpush.msra.mxu0 0.0
    %3413 = vmatpush.msra.mxu0 0.0
    %3414 = vmatpush.msra.mxu0 0.0
    %3415 = vmatpush.msra.mxu0 0.0
    %3416 = vmatpush.msra.mxu0 0.0
    %3417 = vmatpush.msra.mxu0 %v3397
    %3418 = vmatmul.f32.gmra.mxu0 %v3400
    %v3419 = vpop.f32.mrf.mxu0
    %v3420 = vadd.f32 0.0, %v3419
    %3421 = vdwg.mxu0
    %3422 = vrot.lane.b32.xlu0 %v2193, 40
    %v3423 = vpop.permute.xlu0 %3422
    %v3426 = vsel %vm399, %v3354, 0
    %3428 = vmatpush.msra.mxu0 0.0
    %3429 = vmatpush.msra.mxu0 0.0
    %3430 = vmatpush.msra.mxu0 0.0
    %3431 = vmatpush.msra.mxu0 0.0
    %3432 = vmatpush.msra.mxu0 0.0
    %3433 = vmatpush.msra.mxu0 0.0
    %3434 = vmatpush.msra.mxu0 0.0
    %3435 = vmatpush.msra.mxu0 0.0
    %3436 = vmatpush.msra.mxu0 0.0
    %3437 = vmatpush.msra.mxu0 0.0
    %3438 = vmatpush.msra.mxu0 0.0
    %3439 = vmatpush.msra.mxu0 0.0
    %3440 = vmatpush.msra.mxu0 0.0
    %3441 = vmatpush.msra.mxu0 0.0
    %3442 = vmatpush.msra.mxu0 0.0
    %3443 = vmatpush.msra.mxu0 %v3423
    %3444 = vmatmul.f32.gmra.mxu0 %v3426
    %v3445 = vpop.f32.mrf.mxu0
    %v3446 = vadd.f32 0.0, %v3445
    %3447 = vdwg.mxu0
    %3448 = vrot.lane.b32.xlu0 %v2196, 40
    %v3449 = vpop.permute.xlu0 %3448
    %v3452 = vsel %vm399, %v3369, 0
    %3454 = vmatpush.msra.mxu0 0.0
    %3455 = vmatpush.msra.mxu0 0.0
    %3456 = vmatpush.msra.mxu0 0.0
    %3457 = vmatpush.msra.mxu0 0.0
    %3458 = vmatpush.msra.mxu0 0.0
    %3459 = vmatpush.msra.mxu0 0.0
    %3460 = vmatpush.msra.mxu0 0.0
    %3461 = vmatpush.msra.mxu0 0.0
    %3462 = vmatpush.msra.mxu0 0.0
    %3463 = vmatpush.msra.mxu0 0.0
    %3464 = vmatpush.msra.mxu0 0.0
    %3465 = vmatpush.msra.mxu0 0.0
    %3466 = vmatpush.msra.mxu0 0.0
    %3467 = vmatpush.msra.mxu0 0.0
    %3468 = vmatpush.msra.mxu0 0.0
    %3469 = vmatpush.msra.mxu0 %v3449
    %3470 = vmatmul.f32.gmra.mxu0 %v3452
    %v3471 = vpop.f32.mrf.mxu0
    %v3472 = vadd.f32 0.0, %v3471
    %3473 = vdwg.mxu0
    %3478 = vrot.lane.b32.xlu0 %v2754, 8
    %v3479 = vpop.permute.xlu0 %3478
    %3480 = vrot.lane.b32.xlu0 %v2780, 8
    %v3481 = vpop.permute.xlu0 %3480
    %3482 = vrot.lane.b32.xlu0 %v2806, 8
    %v3483 = vpop.permute.xlu0 %3482
    %3484 = vrot.lane.b32.xlu0 %v2832, 8
    %v3485 = vpop.permute.xlu0 %3484
    %3494 = vrot.lane.b32.xlu0 %v3074, 16
    %v3495 = vpop.permute.xlu0 %3494
    %3496 = vrot.lane.b32.xlu0 %v3100, 16
    %v3497 = vpop.permute.xlu0 %3496
    %3498 = vrot.lane.b32.xlu0 %v3126, 16
    %v3499 = vpop.permute.xlu0 %3498
    %3500 = vrot.lane.b32.xlu0 %v3152, 16
    %v3501 = vpop.permute.xlu0 %3500
    %3510 = vrot.lane.b32.xlu0 %v3394, 24
    %v3511 = vpop.permute.xlu0 %3510
    %3512 = vrot.lane.b32.xlu0 %v3420, 24
    %v3513 = vpop.permute.xlu0 %3512
    %3514 = vrot.lane.b32.xlu0 %v3446, 24
    %v3515 = vpop.permute.xlu0 %3514
    %3516 = vrot.lane.b32.xlu0 %v3472, 24
    %v3517 = vpop.permute.xlu0 %3516
    %v3522 = vsel %vm399, %v2434, %v3479
    %v3523 = vsel %vm399, %v2460, %v3481
    %v3524 = vsel %vm399, %v2486, %v3483
    %v3525 = vsel %vm399, %v2512, %v3485
    %v3526 = vsel %vm1733, %v3522, %v3495
    %v3527 = vsel %vm1733, %v3523, %v3497
    %v3528 = vsel %vm1733, %v3524, %v3499
    %v3529 = vsel %vm1733, %v3525, %v3501
    %v3530 = vsel %vm1738, %v3526, %v3511
    %v3531 = vsel %vm1738, %v3527, %v3513
    %v3532 = vsel %vm1738, %v3528, %v3515
    %v3533 = vsel %vm1738, %v3529, %v3517
    %s3534 = scalar_lea.vmem %s10, 32
    %v3535 = vld [vmem:[%s3534] sm:$0xff]
    %v3536 = vld [vmem:[%s3534 + $0x8] sm:$0xff]
    %v3537 = vld [vmem:[%s3534 + $0x10] sm:$0xff]
    %v3538 = vld [vmem:[%s3534 + $0x18] sm:$0xff]
    %s3539 = scalar_lea.vmem %s11, 1
    %v3540 = vld [vmem:[%s3539] sm:$0x1]
    %v3542 = vperm.slane %v3540, 0
    %v3545 = vsel %vm230, %v3530, 0
    %v3548 = vsel %vm230, %v3531, 0
    %v3551 = vsel %vm230, %v3532, 0
    %v3554 = vsel %vm230, %v3533, 0
    %3556 = vmatpush.msra.mxu0 0.0
    %3557 = vmatpush.msra.mxu0 0.0
    %3558 = vmatpush.msra.mxu0 0.0
    %3559 = vmatpush.msra.mxu0 0.0
    %3560 = vmatpush.msra.mxu0 0.0
    %3561 = vmatpush.msra.mxu0 0.0
    %3562 = vmatpush.msra.mxu0 0.0
    %3563 = vmatpush.msra.mxu0 0.0
    %3564 = vmatpush.msra.mxu0 0.0
    %3565 = vmatpush.msra.mxu0 0.0
    %3566 = vmatpush.msra.mxu0 0.0
    %3567 = vmatpush.msra.mxu0 0.0
    %3568 = vmatpush.msra.mxu0 %v3538
    %3569 = vmatpush.msra.mxu0 %v3537
    %3570 = vmatpush.msra.mxu0 %v3536
    %3571 = vmatpush.msra.mxu0 %v3535
    %3572 = vmatmul.f32.gmra.mxu0 %v3545
    %v3573 = vpop.f32.mrf.mxu0
    %v3574 = vadd.f32 %v3542, %v3573
    %3575 = vmatmul.f32.gmra.mxu0 %v3548
    %v3576 = vpop.f32.mrf.mxu0
    %v3577 = vadd.f32 %v3542, %v3576
    %3578 = vmatmul.f32.gmra.mxu0 %v3551
    %v3579 = vpop.f32.mrf.mxu0
    %v3580 = vadd.f32 %v3542, %v3579
    %3581 = vmatmul.f32.gmra.mxu0 %v3554
    %v3582 = vpop.f32.mrf.mxu0
    %v3583 = vadd.f32 %v3542, %v3582
    %3584 = vdwg.mxu0
    %v3585 = vadd.f32 %v2143, %v3574
    %v3586 = vadd.f32 %v2144, %v3577
    %v3587 = vadd.f32 %v2145, %v3580
    %v3588 = vadd.f32 %v2146, %v3583
    %s3589 = scalar_lea.vmem %s12, 1
    %v3590 = vld [vmem:[%s3589] sm:$0x1]
    %s3591 = scalar_lea.vmem %s13, 1
    %v3592 = vld [vmem:[%s3591] sm:$0x1]
    %v3593 = vsel %vm230, %v3585, 0.0
    %3594 = vadd.xlane.f32.xlu0 %v3593
    %v3595 = vpop.xlane.xlu0 %3594
    %v3596 = vsel %vm230, %v3586, 0.0
    %3597 = vadd.xlane.f32.xlu0 %v3596
    %v3598 = vpop.xlane.xlu0 %3597
    %v3599 = vsel %vm230, %v3587, 0.0
    %3600 = vadd.xlane.f32.xlu0 %v3599
    %v3601 = vpop.xlane.xlu0 %3600
    %v3602 = vsel %vm230, %v3588, 0.0
    %3603 = vadd.xlane.f32.xlu0 %v3602
    %v3604 = vpop.xlane.xlu0 %3603
    %v3605 = vmul.f32 %v3595, %v249
    %v3606 = vmul.f32 %v3598, %v249
    %v3607 = vmul.f32 %v3601, %v249
    %v3608 = vmul.f32 %v3604, %v249
    %v3609 = vsub.f32 %v3585, %v3605
    %v3610 = vsub.f32 %v3586, %v3606
    %v3611 = vsub.f32 %v3587, %v3607
    %v3612 = vsub.f32 %v3588, %v3608
    %v3613 = vmul.f32 %v3609, %v3609
    %v3614 = vmul.f32 %v3610, %v3610
    %v3615 = vmul.f32 %v3611, %v3611
    %v3616 = vmul.f32 %v3612, %v3612
    %v3617 = vsel %vm230, %v3613, 0.0
    %3618 = vadd.xlane.f32.xlu0 %v3617
    %v3619 = vpop.xlane.xlu0 %3618
    %v3620 = vsel %vm230, %v3614, 0.0
    %3621 = vadd.xlane.f32.xlu0 %v3620
    %v3622 = vpop.xlane.xlu0 %3621
    %v3623 = vsel %vm230, %v3615, 0.0
    %3624 = vadd.xlane.f32.xlu0 %v3623
    %v3625 = vpop.xlane.xlu0 %3624
    %v3626 = vsel %vm230, %v3616, 0.0
    %3627 = vadd.xlane.f32.xlu0 %v3626
    %v3628 = vpop.xlane.xlu0 %3627
    %v3629 = vmul.f32 %v3619, %v249
    %v3630 = vmul.f32 %v3622, %v249
    %v3631 = vmul.f32 %v3625, %v249
    %v3632 = vmul.f32 %v3628, %v249
    %v3633 = vadd.f32 %v3629, 1e-12
    %v3634 = vadd.f32 %v3630, 1e-12
    %v3635 = vadd.f32 %v3631, 1e-12
    %v3636 = vadd.f32 %v3632, 1e-12
    %v3637 = vrsqrt.pop %v3633
    %v3638 = vmul.f32 %v3637, %v3633
    %v3639 = vmul.f32 %v3638, %v3637
    %v3640 = vmul.f32 0.5, %v3639
    %v3641 = vsub.f32 1.5, %v3640
    %v3642 = vmul.f32 %v3637, %v3641
    %vm3643 = vweird.f32 %v3633
    %vm3644 = vweird.f32 %v3637
    %vm3645 = vmor %vm3643, %vm3644
    %v3646 = vsel %vm3645, %v3637, %v3642
    %v3647 = vrsqrt.pop %v3634
    %v3648 = vmul.f32 %v3647, %v3634
    %v3649 = vmul.f32 %v3648, %v3647
    %v3650 = vmul.f32 0.5, %v3649
    %v3651 = vsub.f32 1.5, %v3650
    %v3652 = vmul.f32 %v3647, %v3651
    %vm3653 = vweird.f32 %v3634
    %vm3654 = vweird.f32 %v3647
    %vm3655 = vmor %vm3653, %vm3654
    %v3656 = vsel %vm3655, %v3647, %v3652
    %v3657 = vrsqrt.pop %v3635
    %v3658 = vmul.f32 %v3657, %v3635
    %v3659 = vmul.f32 %v3658, %v3657
    %v3660 = vmul.f32 0.5, %v3659
    %v3661 = vsub.f32 1.5, %v3660
    %v3662 = vmul.f32 %v3657, %v3661
    %vm3663 = vweird.f32 %v3635
    %vm3664 = vweird.f32 %v3657
    %vm3665 = vmor %vm3663, %vm3664
    %v3666 = vsel %vm3665, %v3657, %v3662
    %v3667 = vrsqrt.pop %v3636
    %v3668 = vmul.f32 %v3667, %v3636
    %v3669 = vmul.f32 %v3668, %v3667
    %v3670 = vmul.f32 0.5, %v3669
    %v3671 = vsub.f32 1.5, %v3670
    %v3672 = vmul.f32 %v3667, %v3671
    %vm3673 = vweird.f32 %v3636
    %vm3674 = vweird.f32 %v3667
    %vm3675 = vmor %vm3673, %vm3674
    %v3676 = vsel %vm3675, %v3667, %v3672
    %v3677 = vmul.f32 %v3609, %v3646
    %v3678 = vmul.f32 %v3610, %v3656
    %v3679 = vmul.f32 %v3611, %v3666
    %v3680 = vmul.f32 %v3612, %v3676
    %v3682 = vperm.slane %v3590, 0
    %v3684 = vmul.f32 %v3677, %v3682
    %v3685 = vmul.f32 %v3678, %v3682
    %v3686 = vmul.f32 %v3679, %v3682
    %v3687 = vmul.f32 %v3680, %v3682
    %v3689 = vperm.slane %v3592, 0
    %v3691 = vadd.f32 %v3684, %v3689
    %v3692 = vadd.f32 %v3685, %v3689
    %v3693 = vadd.f32 %v3686, %v3689
    %v3694 = vadd.f32 %v3687, %v3689
    %s3695 = scalar_lea.vmem %s14, 32
    %v3696 = vld [vmem:[%s3695] sm:$0xff]
    %v3697 = vld [vmem:[%s3695 + $0x8] sm:$0xff]
    %v3698 = vld [vmem:[%s3695 + $0x10] sm:$0xff]
    %v3699 = vld [vmem:[%s3695 + $0x18] sm:$0xff]
    %s3700 = scalar_lea.vmem %s15, 1
    %v3701 = vld [vmem:[%s3700] sm:$0x1]
    %v3703 = vperm.slane %v3701, 0
    %v3706 = vsel %vm230, %v3691, 0
    %v3709 = vsel %vm230, %v3692, 0
    %v3712 = vsel %vm230, %v3693, 0
    %v3715 = vsel %vm230, %v3694, 0
    %3717 = vmatpush.msra.mxu0 0.0
    %3718 = vmatpush.msra.mxu0 0.0
    %3719 = vmatpush.msra.mxu0 0.0
    %3720 = vmatpush.msra.mxu0 0.0
    %3721 = vmatpush.msra.mxu0 0.0
    %3722 = vmatpush.msra.mxu0 0.0
    %3723 = vmatpush.msra.mxu0 0.0
    %3724 = vmatpush.msra.mxu0 0.0
    %3725 = vmatpush.msra.mxu0 0.0
    %3726 = vmatpush.msra.mxu0 0.0
    %3727 = vmatpush.msra.mxu0 0.0
    %3728 = vmatpush.msra.mxu0 0.0
    %3729 = vmatpush.msra.mxu0 %v3699
    %3730 = vmatpush.msra.mxu0 %v3698
    %3731 = vmatpush.msra.mxu0 %v3697
    %3732 = vmatpush.msra.mxu0 %v3696
    %3733 = vmatmul.f32.gmra.mxu0 %v3706
    %v3734 = vpop.f32.mrf.mxu0
    %v3735 = vadd.f32 %v3703, %v3734
    %3736 = vmatmul.f32.gmra.mxu0 %v3709
    %v3737 = vpop.f32.mrf.mxu0
    %v3738 = vadd.f32 %v3703, %v3737
    %3739 = vmatmul.f32.gmra.mxu0 %v3712
    %v3740 = vpop.f32.mrf.mxu0
    %v3741 = vadd.f32 %v3703, %v3740
    %3742 = vmatmul.f32.gmra.mxu0 %v3715
    %v3743 = vpop.f32.mrf.mxu0
    %v3744 = vadd.f32 %v3703, %v3743
    %3745 = vdwg.mxu0
    %v3746 = vmul.f32 %v3735, %v3735
    %v3747 = vmul.f32 %v3738, %v3738
    %v3748 = vmul.f32 %v3741, %v3741
    %v3749 = vmul.f32 %v3744, %v3744
    %v3750 = vmul.f32 %v3735, %v3746
    %v3751 = vmul.f32 %v3738, %v3747
    %v3752 = vmul.f32 %v3741, %v3748
    %v3753 = vmul.f32 %v3744, %v3749
    %v3754 = vmul.f32 %v3750, 0.044715
    %v3755 = vmul.f32 %v3751, 0.044715
    %v3756 = vmul.f32 %v3752, 0.044715
    %v3757 = vmul.f32 %v3753, 0.044715
    %v3758 = vadd.f32 %v3735, %v3754
    %v3759 = vadd.f32 %v3738, %v3755
    %v3760 = vadd.f32 %v3741, %v3756
    %v3761 = vadd.f32 %v3744, %v3757
    %v3762 = vmul.f32 %v3758, 0.7978846
    %v3763 = vmul.f32 %v3759, 0.7978846
    %v3764 = vmul.f32 %v3760, 0.7978846
    %v3765 = vmul.f32 %v3761, 0.7978846
    %v3766 = vtanh.pop %v3762
    %v3767 = vtanh.pop %v3763
    %v3768 = vtanh.pop %v3764
    %v3769 = vtanh.pop %v3765
    %v3770 = vadd.f32 %v3766, 1.0
    %v3771 = vadd.f32 %v3767, 1.0
    %v3772 = vadd.f32 %v3768, 1.0
    %v3773 = vadd.f32 %v3769, 1.0
    %v3774 = vmul.f32 %v3770, 0.5
    %v3775 = vmul.f32 %v3771, 0.5
    %v3776 = vmul.f32 %v3772, 0.5
    %v3777 = vmul.f32 %v3773, 0.5
    %v3778 = vmul.f32 %v3735, %v3774
    %v3779 = vmul.f32 %v3738, %v3775
    %v3780 = vmul.f32 %v3741, %v3776
    %v3781 = vmul.f32 %v3744, %v3777
    %s3782 = scalar_lea.vmem %s16, 64
    %v3783 = vld [vmem:[%s3782] sm:$0xff]
    %v3784 = vld [vmem:[%s3782 + $0x8] sm:$0xff]
    %v3785 = vld [vmem:[%s3782 + $0x10] sm:$0xff]
    %v3786 = vld [vmem:[%s3782 + $0x18] sm:$0xff]
    %v3787 = vld [vmem:[%s3782 + $0x20] sm:$0xff]
    %v3788 = vld [vmem:[%s3782 + $0x28] sm:$0xff]
    %v3789 = vld [vmem:[%s3782 + $0x30] sm:$0xff]
    %v3790 = vld [vmem:[%s3782 + $0x38] sm:$0xff]
    %s3791 = scalar_lea.vmem %s17, 1
    %v3792 = vld [vmem:[%s3791] sm:$0x1]
    %v3794 = vperm.slane %v3792, 0
    %v3797 = vsel %vm1997, %v3778, 0
    %v3800 = vsel %vm1997, %v3779, 0
    %v3803 = vsel %vm1997, %v3780, 0
    %v3806 = vsel %vm1997, %v3781, 0
    %3808 = vmatpush.msra.mxu0 0.0
    %3809 = vmatpush.msra.mxu0 0.0
    %3810 = vmatpush.msra.mxu0 0.0
    %3811 = vmatpush.msra.mxu0 0.0
    %3812 = vmatpush.msra.mxu0 0.0
    %3813 = vmatpush.msra.mxu0 0.0
    %3814 = vmatpush.msra.mxu0 0.0
    %3815 = vmatpush.msra.mxu0 0.0
    %3816 = vmatpush.msra.mxu0 %v3790
    %3817 = vmatpush.msra.mxu0 %v3789
    %3818 = vmatpush.msra.mxu0 %v3788
    %3819 = vmatpush.msra.mxu0 %v3787
    %3820 = vmatpush.msra.mxu0 %v3786
    %3821 = vmatpush.msra.mxu0 %v3785
    %3822 = vmatpush.msra.mxu0 %v3784
    %3823 = vmatpush.msra.mxu0 %v3783
    %3824 = vmatmul.f32.gmra.mxu0 %v3797
    %v3825 = vpop.f32.mrf.mxu0
    %v3826 = vadd.f32 %v3794, %v3825
    %3827 = vmatmul.f32.gmra.mxu0 %v3800
    %v3828 = vpop.f32.mrf.mxu0
    %v3829 = vadd.f32 %v3794, %v3828
    %3830 = vmatmul.f32.gmra.mxu0 %v3803
    %v3831 = vpop.f32.mrf.mxu0
    %v3832 = vadd.f32 %v3794, %v3831
    %3833 = vmatmul.f32.gmra.mxu0 %v3806
    %v3834 = vpop.f32.mrf.mxu0
    %v3835 = vadd.f32 %v3794, %v3834
    %3836 = vdwg.mxu0
    %v3837 = vadd.f32 %v3691, %v3826
    %v3838 = vadd.f32 %v3692, %v3829
    %v3839 = vadd.f32 %v3693, %v3832
    %v3840 = vadd.f32 %v3694, %v3835
    %s3841 = scalar_lea.vmem %s18, 1
    %v3842 = vld [vmem:[%s3841] sm:$0x1]
    %s3843 = scalar_lea.vmem %s19, 1
    %v3844 = vld [vmem:[%s3843] sm:$0x1]
    %v3845 = vsel %vm230, %v3837, 0.0
    %3846 = vadd.xlane.f32.xlu0 %v3845
    %v3847 = vpop.xlane.xlu0 %3846
    %v3848 = vsel %vm230, %v3838, 0.0
    %3849 = vadd.xlane.f32.xlu0 %v3848
    %v3850 = vpop.xlane.xlu0 %3849
    %v3851 = vsel %vm230, %v3839, 0.0
    %3852 = vadd.xlane.f32.xlu0 %v3851
    %v3853 = vpop.xlane.xlu0 %3852
    %v3854 = vsel %vm230, %v3840, 0.0
    %3855 = vadd.xlane.f32.xlu0 %v3854
    %v3856 = vpop.xlane.xlu0 %3855
    %v3857 = vmul.f32 %v3847, %v249
    %v3858 = vmul.f32 %v3850, %v249
    %v3859 = vmul.f32 %v3853, %v249
    %v3860 = vmul.f32 %v3856, %v249
    %v3861 = vsub.f32 %v3837, %v3857
    %v3862 = vsub.f32 %v3838, %v3858
    %v3863 = vsub.f32 %v3839, %v3859
    %v3864 = vsub.f32 %v3840, %v3860
    %v3865 = vmul.f32 %v3861, %v3861
    %v3866 = vmul.f32 %v3862, %v3862
    %v3867 = vmul.f32 %v3863, %v3863
    %v3868 = vmul.f32 %v3864, %v3864
    %v3869 = vsel %vm230, %v3865, 0.0
    %3870 = vadd.xlane.f32.xlu0 %v3869
    %v3871 = vpop.xlane.xlu0 %3870
    %v3872 = vsel %vm230, %v3866, 0.0
    %3873 = vadd.xlane.f32.xlu0 %v3872
    %v3874 = vpop.xlane.xlu0 %3873
    %v3875 = vsel %vm230, %v3867, 0.0
    %3876 = vadd.xlane.f32.xlu0 %v3875
    %v3877 = vpop.xlane.xlu0 %3876
    %v3878 = vsel %vm230, %v3868, 0.0
    %3879 = vadd.xlane.f32.xlu0 %v3878
    %v3880 = vpop.xlane.xlu0 %3879
    %v3881 = vmul.f32 %v3871, %v249
    %v3882 = vmul.f32 %v3874, %v249
    %v3883 = vmul.f32 %v3877, %v249
    %v3884 = vmul.f32 %v3880, %v249
    %v3885 = vadd.f32 %v3881, 1e-12
    %v3886 = vadd.f32 %v3882, 1e-12
    %v3887 = vadd.f32 %v3883, 1e-12
    %v3888 = vadd.f32 %v3884, 1e-12
    %v3889 = vrsqrt.pop %v3885
    %v3890 = vmul.f32 %v3889, %v3885
    %v3891 = vmul.f32 %v3890, %v3889
    %v3892 = vmul.f32 0.5, %v3891
    %v3893 = vsub.f32 1.5, %v3892
    %v3894 = vmul.f32 %v3889, %v3893
    %vm3895 = vweird.f32 %v3885
    %vm3896 = vweird.f32 %v3889
    %vm3897 = vmor %vm3895, %vm3896
    %v3898 = vsel %vm3897, %v3889, %v3894
    %v3899 = vrsqrt.pop %v3886
    %v3900 = vmul.f32 %v3899, %v3886
    %v3901 = vmul.f32 %v3900, %v3899
    %v3902 = vmul.f32 0.5, %v3901
    %v3903 = vsub.f32 1.5, %v3902
    %v3904 = vmul.f32 %v3899, %v3903
    %vm3905 = vweird.f32 %v3886
    %vm3906 = vweird.f32 %v3899
    %vm3907 = vmor %vm3905, %vm3906
    %v3908 = vsel %vm3907, %v3899, %v3904
    %v3909 = vrsqrt.pop %v3887
    %v3910 = vmul.f32 %v3909, %v3887
    %v3911 = vmul.f32 %v3910, %v3909
    %v3912 = vmul.f32 0.5, %v3911
    %v3913 = vsub.f32 1.5, %v3912
    %v3914 = vmul.f32 %v3909, %v3913
    %vm3915 = vweird.f32 %v3887
    %vm3916 = vweird.f32 %v3909
    %vm3917 = vmor %vm3915, %vm3916
    %v3918 = vsel %vm3917, %v3909, %v3914
    %v3919 = vrsqrt.pop %v3888
    %v3920 = vmul.f32 %v3919, %v3888
    %v3921 = vmul.f32 %v3920, %v3919
    %v3922 = vmul.f32 0.5, %v3921
    %v3923 = vsub.f32 1.5, %v3922
    %v3924 = vmul.f32 %v3919, %v3923
    %vm3925 = vweird.f32 %v3888
    %vm3926 = vweird.f32 %v3919
    %vm3927 = vmor %vm3925, %vm3926
    %v3928 = vsel %vm3927, %v3919, %v3924
    %v3929 = vmul.f32 %v3861, %v3898
    %v3930 = vmul.f32 %v3862, %v3908
    %v3931 = vmul.f32 %v3863, %v3918
    %v3932 = vmul.f32 %v3864, %v3928
    %v3934 = vperm.slane %v3842, 0
    %v3936 = vmul.f32 %v3929, %v3934
    %v3937 = vmul.f32 %v3930, %v3934
    %v3938 = vmul.f32 %v3931, %v3934
    %v3939 = vmul.f32 %v3932, %v3934
    %v3941 = vperm.slane %v3844, 0
    %v3943 = vadd.f32 %v3936, %v3941
    %v3944 = vadd.f32 %v3937, %v3941
    %v3945 = vadd.f32 %v3938, %v3941
    %v3946 = vadd.f32 %v3939, %v3941
    %vm3947 = vcmp.eq.s32.totalorder %v66, 3
    %vm3948 = vcmp.eq.s32.totalorder %v67, 3
    %vm3949 = vcmp.eq.s32.totalorder %v68, 3
    %vm3950 = vcmp.eq.s32.totalorder %v69, 3
    %v3951 = vsel %vm3947, 1, 0
    %v3952 = vsel %vm3948, 1, 0
    %v3953 = vsel %vm3949, 1, 0
    %v3954 = vsel %vm3950, 1, 0
    %v3955 = vcvt.s32.f32 %v3951
    %v3956 = vcvt.s32.f32 %v3952
    %v3957 = vcvt.s32.f32 %v3953
    %v3958 = vcvt.s32.f32 %v3954
    %3960 = vset.pattern.permute.xlu0 0
    %3961 = vperm.xlu0 %3960, %v3955
    %v3962 = vpop.permute.xlu0 %3961
    %3965 = vset.pattern.permute.xlu0 0
    %3966 = vperm.xlu0 %3965, %v3956
    %v3967 = vpop.permute.xlu0 %3966
    %3970 = vset.pattern.permute.xlu0 0
    %3971 = vperm.xlu0 %3970, %v3957
    %v3972 = vpop.permute.xlu0 %3971
    %3975 = vset.pattern.permute.xlu0 0
    %3976 = vperm.xlu0 %3975, %v3958
    %v3977 = vpop.permute.xlu0 %3976
    %v3979 = vmul.f32 %v3943, %v3962
    %v3980 = vmul.f32 %v3944, %v3967
    %v3981 = vmul.f32 %v3945, %v3972
    %v3982 = vmul.f32 %v3946, %v3977
    %v3983 = vsel %vm230, %v3979, 0.0
    %v3984 = vrot.slane %v3983, 4
    %v3985 = vadd.f32 %v3983, %v3984
    %v3986 = vrot.slane %v3985, 2
    %v3987 = vadd.f32 %v3985, %v3986
    %v3988 = vrot.slane %v3987, 1
    %v3989 = vadd.f32 %v3987, %v3988
    %v3990 = vsel %vm230, %v3980, 0.0
    %v3991 = vrot.slane %v3990, 4
    %v3992 = vadd.f32 %v3990, %v3991
    %v3993 = vrot.slane %v3992, 2
    %v3994 = vadd.f32 %v3992, %v3993
    %v3995 = vrot.slane %v3994, 1
    %v3996 = vadd.f32 %v3994, %v3995
    %v3997 = vsel %vm230, %v3981, 0.0
    %v3998 = vrot.slane %v3997, 4
    %v3999 = vadd.f32 %v3997, %v3998
    %v4000 = vrot.slane %v3999, 2
    %v4001 = vadd.f32 %v3999, %v4000
    %v4002 = vrot.slane %v4001, 1
    %v4003 = vadd.f32 %v4001, %v4002
    %v4004 = vsel %vm230, %v3982, 0.0
    %v4005 = vrot.slane %v4004, 4
    %v4006 = vadd.f32 %v4004, %v4005
    %v4007 = vrot.slane %v4006, 2
    %v4008 = vadd.f32 %v4006, %v4007
    %v4009 = vrot.slane %v4008, 1
    %v4010 = vadd.f32 %v4008, %v4009
    %v4011 = vsub.f32 %v3989, %v4003
    %v4012 = vsub.f32 %v3996, %v4010
    %vm4015 = vcmask 1041409
    %v4016 = vsel %vm4015, %v4012, %v4011
    %vm4018 = vcmask 254976
    %4019 = vst.msk [vmem:[#allocation2] sm:$0x3] %vm4018, %v4016
    // Predicated region
    $region82: #{promptbert_forward.1} parent=1 // pred_check
      _
    $region83: #{promptbert_forward.1} parent=1 // pred_check_branch
      %4021 = sbr.rel (0) target = $region85
    $region84: #{promptbert_forward.1} parent=1 // pred_region
      %4023 = vsyncadd [#allocation3], 0
      %s4025 = sshll.u32 [#allocation2], 4
      %s4026 = int_to_ptr.vmem [resolvable:$true] %s4025
      %s4027 = sshll.u32 %s20, 4
      %s4028 = int_to_ptr.hbm [resolvable:$true] %s4027
      %4030 = dma.vmem_to_hbm [thread:$0]  %s4026, 32, %s4028, [#allocation3]
    $region85: #{promptbert_forward.1} parent=1 // pred_fallthru
      _
    // Predicated region
    $region86: #{promptbert_forward.1} parent=1 // pred_check
      _
    $region87: #{promptbert_forward.1} parent=1 // pred_check_branch
      %4032 = sbr.rel (0) target = $region89
    $region88: #{promptbert_forward.1} parent=1 // pred_region
      %4034 = dma.done [#allocation3], 32
    $region89: #{promptbert_forward.1} parent=1 // pred_fallthru
      _
    %4035 = vsyncpa [#allocation3], 1

</llo_original>
